<compile_context>
chip_gen: v5e
topology: v5e:2x2
jax: 0.10.0
libtpu: 0.0.40
codegen_flags: <defaults>
</compile_context>

<pallas_src>
import functools

import jax
import jax.numpy as jnp
from jax.experimental import pallas as pl
from jax.experimental.pallas import tpu as pltpu

_LANE = 128
_BN_EPS = 1e-3
_VMEM_LIMIT = 32 * 1024 * 1024


def _round_up(x, m):
    return (x + m - 1) // m * m


def _pick_tile_m(m, target=256):
    for t in (target, 128, 64, 32, 16, 8):
        if m % t == 0:
            return t
    return m


def _silu(x):
    # x * sigmoid(x), sigmoid via tanh (EUP slot, no exp overflow)
    return x * (0.5 * (jnp.tanh(0.5 * x) + 1.0))


# ---------------- kernel A: tiled 1x1-conv matmul + BN statistics ---------------- #

def _matmul_stats_kernel(x_ref, w_ref, y_ref, st_ref):
    """y = x @ w (bf16 inputs, f32 accumulation) + per-tile col sum / sum(y^2).

    x: (TM, K), w: (K, Cp), y: (TM, Cp), st: (1, 2, Cp)
    """
    x = x_ref[...].astype(jnp.bfloat16)
    w = w_ref[...].astype(jnp.bfloat16)
    y = jnp.dot(x, w, preferred_element_type=jnp.float32)
    y_ref[...] = y.astype(y_ref.dtype)
    st_ref[:, 0:1, :] = jnp.sum(y, axis=0, keepdims=True)[None]
    st_ref[:, 1:2, :] = jnp.sum(y * y, axis=0, keepdims=True)[None]


def matmul_with_stats(x2d, w, *, tile_m=256, out_dtype=jnp.bfloat16):
    m, k = x2d.shape
    cp = w.shape[1]
    tm = _pick_tile_m(m, tile_m)
    nt = m // tm
    return pl.pallas_call(
        _matmul_stats_kernel,
        out_shape=(jax.ShapeDtypeStruct((m, cp), out_dtype),
                   jax.ShapeDtypeStruct((nt, 2, cp), jnp.float32)),
        grid_spec=pltpu.PrefetchScalarGridSpec(
            num_scalar_prefetch=0,
            grid=(nt,),
            in_specs=[pl.BlockSpec((tm, k), lambda i: (i, 0)),
                      pl.BlockSpec((k, cp), lambda i: (0, 0))],
            out_specs=(pl.BlockSpec((tm, cp), lambda i: (i, 0)),
                       pl.BlockSpec((1, 2, cp), lambda i: (i, 0, 0)))),
        compiler_params=pltpu.CompilerParams(
            dimension_semantics=("parallel",),
            vmem_limit_bytes=_VMEM_LIMIT),
    )(x2d, w)


def _fold_bn(stats, gamma, beta, m_total, eps=_BN_EPS):
    """Global batch-stat BN folded into per-column scale/shift (host-side, tiny)."""
    s = jnp.sum(stats[:, 0, :], axis=0)
    ss = jnp.sum(stats[:, 1, :], axis=0)
    mean = s / m_total
    var = jnp.maximum(ss / m_total - mean * mean, 0.0)   # biased var (BN fwd)
    scale = gamma * jax.lax.rsqrt(var + eps)
    shift = beta - mean * scale
    return scale.reshape(1, -1), shift.reshape(1, -1)


# --------- kernel B: conv1 BN/SiLU epilogue fused with the SPP max-pools --------- #

def _pool_silu_kernel(y_ref, scale_ref, shift_ref, o_ref, pad_ref, *, H, W):
    """One (batch, 128-channel) tile: scale/shift + SiLU, then cascaded 5x5 pools.

    y:     (1, H, W, 128)   pre-BN conv1 output block
    scale: (1, 128), shift: (1, 128)
    o:     (1, H, W, 512)   [id | pool5 | pool9 | pool13] for this channel block
    pad:   (1, H+4, W+4, 128) f32 scratch used as the -inf-padded slab
    """
    R = 2                                   # 5x5 pool radius; 9 = 5o5, 13 = 5o5o5
    C = y_ref.shape[-1]

    t = y_ref[...].astype(jnp.float32)
    t = t * scale_ref[...] + shift_ref[...]
    t = _silu(t)
    o_ref[:, :, :, 0:C] = t.astype(o_ref.dtype)          # identity branch

    def pool5(cur):                                      # cur: (1, H, W, C) f32
        pad_ref[...] = jnp.full(pad_ref.shape, -jnp.inf, pad_ref.dtype)
        pad_ref[:, R:R + H, R:R + W, :] = cur
        xp = pad_ref[...]
        row = xp[:, 0:H, :, :]                           # max over rows
        for dy in range(1, 2 * R + 1):
            row = jnp.maximum(row, xp[:, dy:dy + H, :, :])
        out = row[:, :, 0:W, :]                          # max over cols
        for dx in range(1, 2 * R + 1):
            out = jnp.maximum(out, row[:, :, dx:dx + W, :])
        return out

    p = t
    for b in range(1, 4):                                # pool5, pool9, pool13
        p = pool5(p)
        o_ref[:, :, :, b * C:(b + 1) * C] = p.astype(o_ref.dtype)


def conv1_epilogue_and_spp(y1_nhwc, scale1, shift1, *, out_dtype=jnp.bfloat16):
    N, H, W, hp = y1_nhwc.shape
    n_blk = hp // _LANE
    kern = functools.partial(_pool_silu_kernel, H=H, W=W)
    return pl.pallas_call(
        kern,
        out_shape=jax.ShapeDtypeStruct((N, H, W, 4 * hp), out_dtype),
        grid_spec=pltpu.PrefetchScalarGridSpec(
            num_scalar_prefetch=0,
            grid=(N, n_blk),
            in_specs=[pl.BlockSpec((1, H, W, _LANE), lambda n, c: (n, 0, 0, c)),
                      pl.BlockSpec((1, _LANE), lambda n, c: (0, c)),
                      pl.BlockSpec((1, _LANE), lambda n, c: (0, c))],
            out_specs=pl.BlockSpec((1, H, W, 4 * _LANE),
                                   lambda n, c: (n, 0, 0, c)),
            scratch_shapes=[pltpu.VMEM((1, H + 4, W + 4, _LANE), jnp.float32)]),
        compiler_params=pltpu.CompilerParams(
            dimension_semantics=("parallel", "parallel"),
            vmem_limit_bytes=_VMEM_LIMIT),
    )(y1_nhwc, scale1, shift1)


# ------------------- kernel C: conv2 BN/SiLU epilogue (tiled) ------------------- #

def _scale_shift_silu_kernel(y_ref, scale_ref, shift_ref, o_ref):
    y = y_ref[...].astype(jnp.float32)
    y = y * scale_ref[...] + shift_ref[...]
    o_ref[...] = _silu(y).astype(o_ref.dtype)


def scale_shift_silu(y2d, scale, shift, *, tile_m=256, out_dtype=jnp.float32):
    m, cp = y2d.shape
    tm = _pick_tile_m(m, tile_m)
    return pl.pallas_call(
        _scale_shift_silu_kernel,
        out_shape=jax.ShapeDtypeStruct((m, cp), out_dtype),
        grid_spec=pltpu.PrefetchScalarGridSpec(
            num_scalar_prefetch=0,
            grid=(m // tm,),
            in_specs=[pl.BlockSpec((tm, cp), lambda i: (i, 0)),
                      pl.BlockSpec((1, cp), lambda i: (0, 0)),
                      pl.BlockSpec((1, cp), lambda i: (0, 0))],
            out_specs=pl.BlockSpec((tm, cp), lambda i: (i, 0))),
        compiler_params=pltpu.CompilerParams(
            dimension_semantics=("parallel",),
            vmem_limit_bytes=_VMEM_LIMIT),
    )(y2d, scale, shift)


# -------------------------------- parameters ----------------------------------- #

def init_spp_params(key, in_channels, out_channels):
    """PyTorch-layout (unpadded) parameters for the SPPBottleneck."""
    hidden = in_channels // 2
    cat_channels = hidden * 4
    k1, k2 = jax.random.split(key)
    return {
        "w1": (jax.random.normal(k1, (in_channels, hidden), jnp.float32)
               * (1.0 / jnp.sqrt(in_channels))),
        "g1": jnp.ones((hidden,), jnp.float32),
        "b1": jnp.zeros((hidden,), jnp.float32),
        "w2": (jax.random.normal(k2, (cat_channels, out_channels), jnp.float32)
               * (1.0 / jnp.sqrt(cat_channels))),
        "g2": jnp.ones((out_channels,), jnp.float32),
        "b2": jnp.zeros((out_channels,), jnp.float32),
    }


def prepare_params(raw):
    """Pad channel dims to multiples of 128 and permute w2 rows to the pool
    kernel's channel-block-major cat layout; weights stored as bf16."""
    cin, hidden = raw["w1"].shape
    _, cout = raw["w2"].shape
    hp = _round_up(hidden, _LANE)
    cp = _round_up(cout, _LANE)

    w1p = jnp.zeros((cin, hp), jnp.float32).at[:, :hidden].set(raw["w1"])
    g1p = jnp.ones((hp,), jnp.float32).at[:hidden].set(raw["g1"])
    b1p = jnp.zeros((hp,), jnp.float32).at[:hidden].set(raw["b1"])

    # pool-kernel cat layout: for each 128-wide hidden channel block c, the 4
    # branches [id | p5 | p9 | p13] are contiguous (512 channels per block).
    b_idx = jnp.repeat(jnp.arange(4), hidden)        # branch of each w2 row
    j_idx = jnp.tile(jnp.arange(hidden), 4)          # hidden channel of each row
    new_rows = (j_idx // _LANE) * (4 * _LANE) + b_idx * _LANE + (j_idx % _LANE)
    w2p = (jnp.zeros((4 * hp, cp), jnp.float32)
           .at[new_rows, :cout].set(raw["w2"]))
    g2p = jnp.ones((cp,), jnp.float32).at[:cout].set(raw["g2"])
    b2p = jnp.zeros((cp,), jnp.float32).at[:cout].set(raw["b2"])

    return {"w1": w1p.astype(jnp.bfloat16), "g1": g1p, "b1": b1p,
            "w2": w2p.astype(jnp.bfloat16), "g2": g2p, "b2": b2p}


# --------------------------------- forward ------------------------------------- #

@functools.partial(jax.jit, static_argnames=("out_channels",))
def spp_bottleneck(x_nchw, params, *, out_channels):
    """x: (N, Cin, H, W) -> (N, Cout, H, W). BN uses batch statistics (train-mode
    forward, eps=1e-3), matching the reference module's default behaviour."""
    N, Cin, H, W = x_nchw.shape
    M = N * H * W

    # NCHW -> NHWC once at the boundary; bf16 for the matmul input.
    x2d = (jnp.transpose(x_nchw, (0, 2, 3, 1))
           .astype(jnp.bfloat16).reshape(M, Cin))

    # conv1: tiled matmul + global BN stats (two-pass BN, stats stay exact)
    y1, st1 = matmul_with_stats(x2d, params["w1"])
    scale1, shift1 = _fold_bn(st1, params["g1"], params["b1"], M)
    hp = params["w1"].shape[1]

    # BN/SiLU epilogue fused with the SPP pools (cascaded 5x5, in-kernel -inf pad)
    cat = conv1_epilogue_and_spp(y1.reshape(N, H, W, hp), scale1, shift1)

    # conv2: tiled matmul + global BN stats, then folded scale/shift + SiLU
    y2, st2 = matmul_with_stats(cat.reshape(M, 4 * hp), params["w2"])
    scale2, shift2 = _fold_bn(st2, params["g2"], params["b2"], M)
    out = scale_shift_silu(y2, scale2, shift2)

    cp = params["w2"].shape[1]
    out = out.reshape(N, H, W, cp)[..., :out_channels]
    return jnp.transpose(out, (0, 3, 1, 2))


# ----------------------------- pure-JAX reference ------------------------------- #

def spp_reference(x_nchw, raw):
    x = jnp.transpose(x_nchw, (0, 2, 3, 1)).astype(jnp.float32)

    def conv_bn_silu(z, w, g, b):
        y = jnp.einsum("nhwc,cd->nhwd", z, w)
        mean = jnp.mean(y, axis=(0, 1, 2))
        var = jnp.mean((y - mean) ** 2, axis=(0, 1, 2))
        y = (y - mean) * jax.lax.rsqrt(var + _BN_EPS) * g + b
        return y * jax.nn.sigmoid(y)

    h = conv_bn_silu(x, raw["w1"], raw["g1"], raw["b1"])
    branches = [h]
    for k in (5, 9, 13):
        p = k // 2
        branches.append(jax.lax.reduce_window(
            h, -jnp.inf, jax.lax.max, (1, k, k, 1), (1, 1, 1, 1),
            [(0, 0), (p, p), (p, p), (0, 0)]))
    cat = jnp.concatenate(branches, axis=-1)
    out = conv_bn_silu(cat, raw["w2"], raw["g2"], raw["b2"])
    return jnp.transpose(out, (0, 3, 1, 2))


# ----------------------------------- main --------------------------------------- #

if __name__ == "__main__":
    key = jax.random.PRNGKey(0)
    k_x, k_p = jax.random.split(key)

    in_channels, out_channels = 4, 8
    N, H, W = 2, 16, 16

    x = jax.random.normal(k_x, (N, in_channels, H, W), jnp.float32)
    raw = init_spp_params(k_p, in_channels, out_channels)
    params = prepare_params(raw)

    y = spp_bottleneck(x, params, out_channels=out_channels)
    jax.block_until_ready(y)

    assert y.shape == (N, out_channels, H, W), y.shape
    assert bool(jnp.all(jnp.isfinite(y)))

    # sanity check vs f32 reference (bf16 matmul inputs/intermediates -> loose tol)
    ref = spp_reference(x, raw)
    err = float(jnp.max(jnp.abs(y - ref)))
    assert err < 0.2, f"max abs err {err}"

    print("KERNEL_OK")
</pallas_src>

<mosaic_0001>
module attributes {stable_mosaic.version = 11 : i64} {
  func.func @_matmul_stats_kernel(%arg0: i32, %arg1: memref<256x4xbf16, #tpu.memory_space<vmem>>, %arg2: memref<4x128xbf16, #tpu.memory_space<vmem>>, %arg3: memref<256x128xbf16, #tpu.memory_space<vmem>>, %arg4: memref<1x2x128xf32, #tpu.memory_space<vmem>>) attributes {dimension_semantics = [#tpu.dimension_semantics<parallel>], iteration_bounds = array<i64: 2>, scalar_prefetch = 0 : i64, scratch_operands = 0 : i64, tpu.core_type = #tpu.core_type<tc>, window_params = [{transform_indices = @transform_0, window_bounds = array<i64: 256, 4>}, {pipeline_mode = #tpu.pipeline_mode<synchronous>, transform_indices = @transform_1, window_bounds = array<i64: 4, 128>}, {transform_indices = @transform_2, window_bounds = array<i64: 256, 128>}, {transform_indices = @transform_3, window_bounds = array<i64: 1, 2, 128>}]} {
    %c0 = arith.constant 0 : index
    %c0_0 = arith.constant 0 : index
    %0 = vector.load %arg1[%c0, %c0_0] : memref<256x4xbf16, #tpu.memory_space<vmem>>, vector<256x4xbf16>
    %c0_1 = arith.constant 0 : index
    %c0_2 = arith.constant 0 : index
    %1 = vector.load %arg2[%c0_1, %c0_2] : memref<4x128xbf16, #tpu.memory_space<vmem>>, vector<4x128xbf16>
    %cst = arith.constant dense<0.000000e+00> : vector<256x128xf32>
    %2 = tpu.matmul %0, %1, %cst {dimension_numbers = #tpu.dot_dimension_numbers<[1], [0], [0], [1], [0, 0, 1, 1], [], []>} : vector<256x4xbf16>, vector<4x128xbf16>, vector<256x128xf32> -> vector<256x128xf32>
    %3 = arith.truncf %2 : vector<256x128xf32> to vector<256x128xbf16>
    %c0_3 = arith.constant 0 : index
    %c0_4 = arith.constant 0 : index
    %4 = vector.load %arg3[%c0_3, %c0_4] : memref<256x128xbf16, #tpu.memory_space<vmem>>, vector<256x128xbf16>
    tpu.vector_store %arg3[%c0_3, %c0_4], %3 {strides = array<i32>} : memref<256x128xbf16, #tpu.memory_space<vmem>>, vector<256x128xbf16>,
    %cst_5 = arith.constant dense<0.000000e+00> : vector<128xf32>
    %5 = vector.multi_reduction <add>, %2, %cst_5 [0] : vector<256x128xf32> to vector<128xf32>
    %6 = vector.shape_cast %5 : vector<128xf32> to vector<1x128xf32>
    %7 = vector.shape_cast %6 : vector<1x128xf32> to vector<1x1x128xf32>
    %c0_6 = arith.constant 0 : index
    %c0_7 = arith.constant 0 : index
    %c0_8 = arith.constant 0 : index
    %8 = vector.load %arg4[%c0_6, %c0_7, %c0_8] : memref<1x2x128xf32, #tpu.memory_space<vmem>>, vector<1x1x128xf32>
    tpu.vector_store %arg4[%c0_6, %c0_7, %c0_8], %7 {strides = array<i32>} : memref<1x2x128xf32, #tpu.memory_space<vmem>>, vector<1x1x128xf32>,
    %9 = arith.mulf %2, %2 : vector<256x128xf32>
    %cst_9 = arith.constant dense<0.000000e+00> : vector<128xf32>
    %10 = vector.multi_reduction <add>, %9, %cst_9 [0] : vector<256x128xf32> to vector<128xf32>
    %11 = vector.shape_cast %10 : vector<128xf32> to vector<1x128xf32>
    %12 = vector.shape_cast %11 : vector<1x128xf32> to vector<1x1x128xf32>
    %c0_10 = arith.constant 0 : index
    %c1 = arith.constant 1 : index
    %c0_11 = arith.constant 0 : index
    %13 = vector.load %arg4[%c0_10, %c1, %c0_11] : memref<1x2x128xf32, #tpu.memory_space<vmem>>, vector<1x1x128xf32>
    tpu.vector_store %arg4[%c0_10, %c1, %c0_11], %12 {strides = array<i32>} : memref<1x2x128xf32, #tpu.memory_space<vmem>>, vector<1x1x128xf32>,
    return
  }
  func.func @transform_0(%arg0: i32) -> (i32, i32) {
    %c0_i32 = arith.constant 0 : i32
    %c0_i32_0 = arith.constant 0 : i32
    return %arg0, %c0_i32 : i32, i32
  }
  func.func @transform_1(%arg0: i32) -> (i32, i32) {
    %c0_i32 = arith.constant 0 : i32
    %c0_i32_0 = arith.constant 0 : i32
    %c0_i32_1 = arith.constant 0 : i32
    return %c0_i32, %c0_i32_0 : i32, i32
  }
  func.func @transform_2(%arg0: i32) -> (i32, i32) {
    %c0_i32 = arith.constant 0 : i32
    %c0_i32_0 = arith.constant 0 : i32
    return %arg0, %c0_i32 : i32, i32
  }
  func.func @transform_3(%arg0: i32) -> (i32, i32, i32) {
    %c0_i32 = arith.constant 0 : i32
    %c0_i32_0 = arith.constant 0 : i32
    %c0_i32_1 = arith.constant 0 : i32
    return %arg0, %c0_i32, %c0_i32_0 : i32, i32, i32
  }
}

module attributes {stable_mosaic.version = 11 : i64} {
  func.func @_pool_silu_kernel(%arg0: i32, %arg1: i32, %arg2: memref<1x16x16x128xbf16, #tpu.memory_space<vmem>>, %arg3: memref<1x128xf32, #tpu.memory_space<vmem>>, %arg4: memref<1x128xf32, #tpu.memory_space<vmem>>, %arg5: memref<1x16x16x512xbf16, #tpu.memory_space<vmem>>, %arg6: memref<1x20x20x128xf32, #tpu.memory_space<vmem>>) attributes {dimension_semantics = [#tpu.dimension_semantics<parallel>, #tpu.dimension_semantics<parallel>], iteration_bounds = array<i64: 2, 1>, scalar_prefetch = 0 : i64, scratch_operands = 1 : i64, tpu.core_type = #tpu.core_type<tc>, window_params = [{transform_indices = @transform_0, window_bounds = array<i64: 1, 16, 16, 128>}, {transform_indices = @transform_1, window_bounds = array<i64: 1, 128>}, {transform_indices = @transform_2, window_bounds = array<i64: 1, 128>}, {transform_indices = @transform_3, window_bounds = array<i64: 1, 16, 16, 512>}]} {
    %c0 = arith.constant 0 : index
    %c0_0 = arith.constant 0 : index
    %c0_1 = arith.constant 0 : index
    %c0_2 = arith.constant 0 : index
    %0 = vector.load %arg2[%c0, %c0_0, %c0_1, %c0_2] : memref<1x16x16x128xbf16, #tpu.memory_space<vmem>>, vector<1x16x16x128xbf16>
    %1 = arith.extf %0 : vector<1x16x16x128xbf16> to vector<1x16x16x128xf32>
    %c0_3 = arith.constant 0 : index
    %c0_4 = arith.constant 0 : index
    %2 = vector.load %arg3[%c0_3, %c0_4] : memref<1x128xf32, #tpu.memory_space<vmem>>, vector<1x128xf32>
    %3 = vector.shape_cast %2 : vector<1x128xf32> to vector<1x1x1x128xf32>
    %4 = vector.broadcast %3 : vector<1x1x1x128xf32> to vector<1x16x16x128xf32>
    %5 = arith.mulf %1, %4 : vector<1x16x16x128xf32>
    %c0_5 = arith.constant 0 : index
    %c0_6 = arith.constant 0 : index
    %6 = vector.load %arg4[%c0_5, %c0_6] : memref<1x128xf32, #tpu.memory_space<vmem>>, vector<1x128xf32>
    %7 = vector.shape_cast %6 : vector<1x128xf32> to vector<1x1x1x128xf32>
    %8 = vector.broadcast %7 : vector<1x1x1x128xf32> to vector<1x16x16x128xf32>
    %9 = arith.addf %5, %8 : vector<1x16x16x128xf32>
    %cst = arith.constant 5.000000e-01 : f32
    %10 = vector.broadcast %cst : f32 to vector<1x16x16x128xf32>
    %11 = arith.mulf %10, %9 : vector<1x16x16x128xf32>
    %12 = math.tanh %11 : vector<1x16x16x128xf32>
    %cst_7 = arith.constant 1.000000e+00 : f32
    %13 = vector.broadcast %cst_7 : f32 to vector<1x16x16x128xf32>
    %14 = arith.addf %12, %13 : vector<1x16x16x128xf32>
    %cst_8 = arith.constant 5.000000e-01 : f32
    %15 = vector.broadcast %cst_8 : f32 to vector<1x16x16x128xf32>
    %16 = arith.mulf %15, %14 : vector<1x16x16x128xf32>
    %17 = arith.mulf %9, %16 : vector<1x16x16x128xf32>
    %18 = arith.truncf %17 : vector<1x16x16x128xf32> to vector<1x16x16x128xbf16>
    %c0_9 = arith.constant 0 : index
    %c0_10 = arith.constant 0 : index
    %c0_11 = arith.constant 0 : index
    %c0_12 = arith.constant 0 : index
    %19 = vector.load %arg5[%c0_9, %c0_10, %c0_11, %c0_12] : memref<1x16x16x512xbf16, #tpu.memory_space<vmem>>, vector<1x16x16x128xbf16>
    tpu.vector_store %arg5[%c0_9, %c0_10, %c0_11, %c0_12], %18 {strides = array<i32>} : memref<1x16x16x512xbf16, #tpu.memory_space<vmem>>, vector<1x16x16x128xbf16>,
    %cst_13 = arith.constant 0xFF800000 : f32
    %20 = vector.broadcast %cst_13 : f32 to vector<1x20x20x128xf32>
    %c0_14 = arith.constant 0 : index
    %c0_15 = arith.constant 0 : index
    %c0_16 = arith.constant 0 : index
    %c0_17 = arith.constant 0 : index
    %21 = vector.load %arg6[%c0_14, %c0_15, %c0_16, %c0_17] : memref<1x20x20x128xf32, #tpu.memory_space<vmem>>, vector<1x20x20x128xf32>
    tpu.vector_store %arg6[%c0_14, %c0_15, %c0_16, %c0_17], %20 {strides = array<i32>} : memref<1x20x20x128xf32, #tpu.memory_space<vmem>>, vector<1x20x20x128xf32>,
    %c0_18 = arith.constant 0 : index
    %c2 = arith.constant 2 : index
    %c2_19 = arith.constant 2 : index
    %c0_20 = arith.constant 0 : index
    %22 = vector.load %arg6[%c0_18, %c2, %c2_19, %c0_20] : memref<1x20x20x128xf32, #tpu.memory_space<vmem>>, vector<1x16x16x128xf32>
    tpu.vector_store %arg6[%c0_18, %c2, %c2_19, %c0_20], %17 {strides = array<i32>} : memref<1x20x20x128xf32, #tpu.memory_space<vmem>>, vector<1x16x16x128xf32>,
    %c0_21 = arith.constant 0 : index
    %c0_22 = arith.constant 0 : index
    %c0_23 = arith.constant 0 : index
    %c0_24 = arith.constant 0 : index
    %23 = vector.load %arg6[%c0_21, %c0_22, %c0_23, %c0_24] : memref<1x20x20x128xf32, #tpu.memory_space<vmem>>, vector<1x20x20x128xf32>
    %24 = vector.extract_strided_slice %23 {offsets = [0, 0, 0, 0], sizes = [1, 16, 20, 128], strides = [1, 1, 1, 1]} : vector<1x20x20x128xf32> to vector<1x16x20x128xf32>
    %25 = vector.extract_strided_slice %23 {offsets = [0, 1, 0, 0], sizes = [1, 16, 20, 128], strides = [1, 1, 1, 1]} : vector<1x20x20x128xf32> to vector<1x16x20x128xf32>
    %26 = arith.maximumf %24, %25 : vector<1x16x20x128xf32>
    %27 = vector.extract_strided_slice %23 {offsets = [0, 2, 0, 0], sizes = [1, 16, 20, 128], strides = [1, 1, 1, 1]} : vector<1x20x20x128xf32> to vector<1x16x20x128xf32>
    %28 = arith.maximumf %26, %27 : vector<1x16x20x128xf32>
    %29 = vector.extract_strided_slice %23 {offsets = [0, 3, 0, 0], sizes = [1, 16, 20, 128], strides = [1, 1, 1, 1]} : vector<1x20x20x128xf32> to vector<1x16x20x128xf32>
    %30 = arith.maximumf %28, %29 : vector<1x16x20x128xf32>
    %31 = vector.extract_strided_slice %23 {offsets = [0, 4, 0, 0], sizes = [1, 16, 20, 128], strides = [1, 1, 1, 1]} : vector<1x20x20x128xf32> to vector<1x16x20x128xf32>
    %32 = arith.maximumf %30, %31 : vector<1x16x20x128xf32>
    %33 = vector.extract_strided_slice %32 {offsets = [0, 0, 0, 0], sizes = [1, 16, 16, 128], strides = [1, 1, 1, 1]} : vector<1x16x20x128xf32> to vector<1x16x16x128xf32>
    %34 = vector.extract_strided_slice %32 {offsets = [0, 0, 1, 0], sizes = [1, 16, 16, 128], strides = [1, 1, 1, 1]} : vector<1x16x20x128xf32> to vector<1x16x16x128xf32>
    %35 = arith.maximumf %33, %34 : vector<1x16x16x128xf32>
    %36 = vector.extract_strided_slice %32 {offsets = [0, 0, 2, 0], sizes = [1, 16, 16, 128], strides = [1, 1, 1, 1]} : vector<1x16x20x128xf32> to vector<1x16x16x128xf32>
    %37 = arith.maximumf %35, %36 : vector<1x16x16x128xf32>
    %38 = vector.extract_strided_slice %32 {offsets = [0, 0, 3, 0], sizes = [1, 16, 16, 128], strides = [1, 1, 1, 1]} : vector<1x16x20x128xf32> to vector<1x16x16x128xf32>
    %39 = arith.maximumf %37, %38 : vector<1x16x16x128xf32>
    %40 = vector.extract_strided_slice %32 {offsets = [0, 0, 4, 0], sizes = [1, 16, 16, 128], strides = [1, 1, 1, 1]} : vector<1x16x20x128xf32> to vector<1x16x16x128xf32>
    %41 = arith.maximumf %39, %40 : vector<1x16x16x128xf32>
    %42 = arith.truncf %41 : vector<1x16x16x128xf32> to vector<1x16x16x128xbf16>
    %c0_25 = arith.constant 0 : index
    %c0_26 = arith.constant 0 : index
    %c0_27 = arith.constant 0 : index
    %c128 = arith.constant 128 : index
    %43 = vector.load %arg5[%c0_25, %c0_26, %c0_27, %c128] : memref<1x16x16x512xbf16, #tpu.memory_space<vmem>>, vector<1x16x16x128xbf16>
    tpu.vector_store %arg5[%c0_25, %c0_26, %c0_27, %c128], %42 {strides = array<i32>} : memref<1x16x16x512xbf16, #tpu.memory_space<vmem>>, vector<1x16x16x128xbf16>,
    %cst_28 = arith.constant 0xFF800000 : f32
    %44 = vector.broadcast %cst_28 : f32 to vector<1x20x20x128xf32>
    %c0_29 = arith.constant 0 : index
    %c0_30 = arith.constant 0 : index
    %c0_31 = arith.constant 0 : index
    %c0_32 = arith.constant 0 : index
    %45 = vector.load %arg6[%c0_29, %c0_30, %c0_31, %c0_32] : memref<1x20x20x128xf32, #tpu.memory_space<vmem>>, vector<1x20x20x128xf32>
    tpu.vector_store %arg6[%c0_29, %c0_30, %c0_31, %c0_32], %44 {strides = array<i32>} : memref<1x20x20x128xf32, #tpu.memory_space<vmem>>, vector<1x20x20x128xf32>,
    %c0_33 = arith.constant 0 : index
    %c2_34 = arith.constant 2 : index
    %c2_35 = arith.constant 2 : index
    %c0_36 = arith.constant 0 : index
    %46 = vector.load %arg6[%c0_33, %c2_34, %c2_35, %c0_36] : memref<1x20x20x128xf32, #tpu.memory_space<vmem>>, vector<1x16x16x128xf32>
    tpu.vector_store %arg6[%c0_33, %c2_34, %c2_35, %c0_36], %41 {strides = array<i32>} : memref<1x20x20x128xf32, #tpu.memory_space<vmem>>, vector<1x16x16x128xf32>,
    %c0_37 = arith.constant 0 : index
    %c0_38 = arith.constant 0 : index
    %c0_39 = arith.constant 0 : index
    %c0_40 = arith.constant 0 : index
    %47 = vector.load %arg6[%c0_37, %c0_38, %c0_39, %c0_40] : memref<1x20x20x128xf32, #tpu.memory_space<vmem>>, vector<1x20x20x128xf32>
    %48 = vector.extract_strided_slice %47 {offsets = [0, 0, 0, 0], sizes = [1, 16, 20, 128], strides = [1, 1, 1, 1]} : vector<1x20x20x128xf32> to vector<1x16x20x128xf32>
    %49 = vector.extract_strided_slice %47 {offsets = [0, 1, 0, 0], sizes = [1, 16, 20, 128], strides = [1, 1, 1, 1]} : vector<1x20x20x128xf32> to vector<1x16x20x128xf32>
    %50 = arith.maximumf %48, %49 : vector<1x16x20x128xf32>
    %51 = vector.extract_strided_slice %47 {offsets = [0, 2, 0, 0], sizes = [1, 16, 20, 128], strides = [1, 1, 1, 1]} : vector<1x20x20x128xf32> to vector<1x16x20x128xf32>
    %52 = arith.maximumf %50, %51 : vector<1x16x20x128xf32>
    %53 = vector.extract_strided_slice %47 {offsets = [0, 3, 0, 0], sizes = [1, 16, 20, 128], strides = [1, 1, 1, 1]} : vector<1x20x20x128xf32> to vector<1x16x20x128xf32>
    %54 = arith.maximumf %52, %53 : vector<1x16x20x128xf32>
    %55 = vector.extract_strided_slice %47 {offsets = [0, 4, 0, 0], sizes = [1, 16, 20, 128], strides = [1, 1, 1, 1]} : vector<1x20x20x128xf32> to vector<1x16x20x128xf32>
    %56 = arith.maximumf %54, %55 : vector<1x16x20x128xf32>
    %57 = vector.extract_strided_slice %56 {offsets = [0, 0, 0, 0], sizes = [1, 16, 16, 128], strides = [1, 1, 1, 1]} : vector<1x16x20x128xf32> to vector<1x16x16x128xf32>
    %58 = vector.extract_strided_slice %56 {offsets = [0, 0, 1, 0], sizes = [1, 16, 16, 128], strides = [1, 1, 1, 1]} : vector<1x16x20x128xf32> to vector<1x16x16x128xf32>
    %59 = arith.maximumf %57, %58 : vector<1x16x16x128xf32>
    %60 = vector.extract_strided_slice %56 {offsets = [0, 0, 2, 0], sizes = [1, 16, 16, 128], strides = [1, 1, 1, 1]} : vector<1x16x20x128xf32> to vector<1x16x16x128xf32>
    %61 = arith.maximumf %59, %60 : vector<1x16x16x128xf32>
    %62 = vector.extract_strided_slice %56 {offsets = [0, 0, 3, 0], sizes = [1, 16, 16, 128], strides = [1, 1, 1, 1]} : vector<1x16x20x128xf32> to vector<1x16x16x128xf32>
    %63 = arith.maximumf %61, %62 : vector<1x16x16x128xf32>
    %64 = vector.extract_strided_slice %56 {offsets = [0, 0, 4, 0], sizes = [1, 16, 16, 128], strides = [1, 1, 1, 1]} : vector<1x16x20x128xf32> to vector<1x16x16x128xf32>
    %65 = arith.maximumf %63, %64 : vector<1x16x16x128xf32>
    %66 = arith.truncf %65 : vector<1x16x16x128xf32> to vector<1x16x16x128xbf16>
    %c0_41 = arith.constant 0 : index
    %c0_42 = arith.constant 0 : index
    %c0_43 = arith.constant 0 : index
    %c256 = arith.constant 256 : index
    %67 = vector.load %arg5[%c0_41, %c0_42, %c0_43, %c256] : memref<1x16x16x512xbf16, #tpu.memory_space<vmem>>, vector<1x16x16x128xbf16>
    tpu.vector_store %arg5[%c0_41, %c0_42, %c0_43, %c256], %66 {strides = array<i32>} : memref<1x16x16x512xbf16, #tpu.memory_space<vmem>>, vector<1x16x16x128xbf16>,
    %cst_44 = arith.constant 0xFF800000 : f32
    %68 = vector.broadcast %cst_44 : f32 to vector<1x20x20x128xf32>
    %c0_45 = arith.constant 0 : index
    %c0_46 = arith.constant 0 : index
    %c0_47 = arith.constant 0 : index
    %c0_48 = arith.constant 0 : index
    %69 = vector.load %arg6[%c0_45, %c0_46, %c0_47, %c0_48] : memref<1x20x20x128xf32, #tpu.memory_space<vmem>>, vector<1x20x20x128xf32>
    tpu.vector_store %arg6[%c0_45, %c0_46, %c0_47, %c0_48], %68 {strides = array<i32>} : memref<1x20x20x128xf32, #tpu.memory_space<vmem>>, vector<1x20x20x128xf32>,
    %c0_49 = arith.constant 0 : index
    %c2_50 = arith.constant 2 : index
    %c2_51 = arith.constant 2 : index
    %c0_52 = arith.constant 0 : index
    %70 = vector.load %arg6[%c0_49, %c2_50, %c2_51, %c0_52] : memref<1x20x20x128xf32, #tpu.memory_space<vmem>>, vector<1x16x16x128xf32>
    tpu.vector_store %arg6[%c0_49, %c2_50, %c2_51, %c0_52], %65 {strides = array<i32>} : memref<1x20x20x128xf32, #tpu.memory_space<vmem>>, vector<1x16x16x128xf32>,
    %c0_53 = arith.constant 0 : index
    %c0_54 = arith.constant 0 : index
    %c0_55 = arith.constant 0 : index
    %c0_56 = arith.constant 0 : index
    %71 = vector.load %arg6[%c0_53, %c0_54, %c0_55, %c0_56] : memref<1x20x20x128xf32, #tpu.memory_space<vmem>>, vector<1x20x20x128xf32>
    %72 = vector.extract_strided_slice %71 {offsets = [0, 0, 0, 0], sizes = [1, 16, 20, 128], strides = [1, 1, 1, 1]} : vector<1x20x20x128xf32> to vector<1x16x20x128xf32>
    %73 = vector.extract_strided_slice %71 {offsets = [0, 1, 0, 0], sizes = [1, 16, 20, 128], strides = [1, 1, 1, 1]} : vector<1x20x20x128xf32> to vector<1x16x20x128xf32>
    %74 = arith.maximumf %72, %73 : vector<1x16x20x128xf32>
    %75 = vector.extract_strided_slice %71 {offsets = [0, 2, 0, 0], sizes = [1, 16, 20, 128], strides = [1, 1, 1, 1]} : vector<1x20x20x128xf32> to vector<1x16x20x128xf32>
    %76 = arith.maximumf %74, %75 : vector<1x16x20x128xf32>
    %77 = vector.extract_strided_slice %71 {offsets = [0, 3, 0, 0], sizes = [1, 16, 20, 128], strides = [1, 1, 1, 1]} : vector<1x20x20x128xf32> to vector<1x16x20x128xf32>
    %78 = arith.maximumf %76, %77 : vector<1x16x20x128xf32>
    %79 = vector.extract_strided_slice %71 {offsets = [0, 4, 0, 0], sizes = [1, 16, 20, 128], strides = [1, 1, 1, 1]} : vector<1x20x20x128xf32> to vector<1x16x20x128xf32>
    %80 = arith.maximumf %78, %79 : vector<1x16x20x128xf32>
    %81 = vector.extract_strided_slice %80 {offsets = [0, 0, 0, 0], sizes = [1, 16, 16, 128], strides = [1, 1, 1, 1]} : vector<1x16x20x128xf32> to vector<1x16x16x128xf32>
    %82 = vector.extract_strided_slice %80 {offsets = [0, 0, 1, 0], sizes = [1, 16, 16, 128], strides = [1, 1, 1, 1]} : vector<1x16x20x128xf32> to vector<1x16x16x128xf32>
    %83 = arith.maximumf %81, %82 : vector<1x16x16x128xf32>
    %84 = vector.extract_strided_slice %80 {offsets = [0, 0, 2, 0], sizes = [1, 16, 16, 128], strides = [1, 1, 1, 1]} : vector<1x16x20x128xf32> to vector<1x16x16x128xf32>
    %85 = arith.maximumf %83, %84 : vector<1x16x16x128xf32>
    %86 = vector.extract_strided_slice %80 {offsets = [0, 0, 3, 0], sizes = [1, 16, 16, 128], strides = [1, 1, 1, 1]} : vector<1x16x20x128xf32> to vector<1x16x16x128xf32>
    %87 = arith.maximumf %85, %86 : vector<1x16x16x128xf32>
    %88 = vector.extract_strided_slice %80 {offsets = [0, 0, 4, 0], sizes = [1, 16, 16, 128], strides = [1, 1, 1, 1]} : vector<1x16x20x128xf32> to vector<1x16x16x128xf32>
    %89 = arith.maximumf %87, %88 : vector<1x16x16x128xf32>
    %90 = arith.truncf %89 : vector<1x16x16x128xf32> to vector<1x16x16x128xbf16>
    %c0_57 = arith.constant 0 : index
    %c0_58 = arith.constant 0 : index
    %c0_59 = arith.constant 0 : index
    %c384 = arith.constant 384 : index
    %91 = vector.load %arg5[%c0_57, %c0_58, %c0_59, %c384] : memref<1x16x16x512xbf16, #tpu.memory_space<vmem>>, vector<1x16x16x128xbf16>
    tpu.vector_store %arg5[%c0_57, %c0_58, %c0_59, %c384], %90 {strides = array<i32>} : memref<1x16x16x512xbf16, #tpu.memory_space<vmem>>, vector<1x16x16x128xbf16>,
    return
  }
  func.func @transform_0(%arg0: i32, %arg1: i32) -> (i32, i32, i32, i32) {
    %c0_i32 = arith.constant 0 : i32
    %c0_i32_0 = arith.constant 0 : i32
    %c0_i32_1 = arith.constant 0 : i32
    return %arg0, %c0_i32, %c0_i32_0, %arg1 : i32, i32, i32, i32
  }
  func.func @transform_1(%arg0: i32, %arg1: i32) -> (i32, i32) {
    %c0_i32 = arith.constant 0 : i32
    %c0_i32_0 = arith.constant 0 : i32
    return %c0_i32, %arg1 : i32, i32
  }
  func.func @transform_2(%arg0: i32, %arg1: i32) -> (i32, i32) {
    %c0_i32 = arith.constant 0 : i32
    %c0_i32_0 = arith.constant 0 : i32
    return %c0_i32, %arg1 : i32, i32
  }
  func.func @transform_3(%arg0: i32, %arg1: i32) -> (i32, i32, i32, i32) {
    %c0_i32 = arith.constant 0 : i32
    %c0_i32_0 = arith.constant 0 : i32
    %c0_i32_1 = arith.constant 0 : i32
    return %arg0, %c0_i32, %c0_i32_0, %arg1 : i32, i32, i32, i32
  }
}

module attributes {stable_mosaic.version = 11 : i64} {
  func.func @_matmul_stats_kernel(%arg0: i32, %arg1: memref<256x512xbf16, #tpu.memory_space<vmem>>, %arg2: memref<512x128xbf16, #tpu.memory_space<vmem>>, %arg3: memref<256x128xbf16, #tpu.memory_space<vmem>>, %arg4: memref<1x2x128xf32, #tpu.memory_space<vmem>>) attributes {dimension_semantics = [#tpu.dimension_semantics<parallel>], iteration_bounds = array<i64: 2>, scalar_prefetch = 0 : i64, scratch_operands = 0 : i64, tpu.core_type = #tpu.core_type<tc>, window_params = [{transform_indices = @transform_0, window_bounds = array<i64: 256, 512>}, {pipeline_mode = #tpu.pipeline_mode<synchronous>, transform_indices = @transform_1, window_bounds = array<i64: 512, 128>}, {transform_indices = @transform_2, window_bounds = array<i64: 256, 128>}, {transform_indices = @transform_3, window_bounds = array<i64: 1, 2, 128>}]} {
    %c0 = arith.constant 0 : index
    %c0_0 = arith.constant 0 : index
    %0 = vector.load %arg1[%c0, %c0_0] : memref<256x512xbf16, #tpu.memory_space<vmem>>, vector<256x512xbf16>
    %c0_1 = arith.constant 0 : index
    %c0_2 = arith.constant 0 : index
    %1 = vector.load %arg2[%c0_1, %c0_2] : memref<512x128xbf16, #tpu.memory_space<vmem>>, vector<512x128xbf16>
    %cst = arith.constant dense<0.000000e+00> : vector<256x128xf32>
    %2 = tpu.matmul %0, %1, %cst {dimension_numbers = #tpu.dot_dimension_numbers<[1], [0], [0], [1], [0, 0, 1, 1], [], []>} : vector<256x512xbf16>, vector<512x128xbf16>, vector<256x128xf32> -> vector<256x128xf32>
    %3 = arith.truncf %2 : vector<256x128xf32> to vector<256x128xbf16>
    %c0_3 = arith.constant 0 : index
    %c0_4 = arith.constant 0 : index
    %4 = vector.load %arg3[%c0_3, %c0_4] : memref<256x128xbf16, #tpu.memory_space<vmem>>, vector<256x128xbf16>
    tpu.vector_store %arg3[%c0_3, %c0_4], %3 {strides = array<i32>} : memref<256x128xbf16, #tpu.memory_space<vmem>>, vector<256x128xbf16>,
    %cst_5 = arith.constant dense<0.000000e+00> : vector<128xf32>
    %5 = vector.multi_reduction <add>, %2, %cst_5 [0] : vector<256x128xf32> to vector<128xf32>
    %6 = vector.shape_cast %5 : vector<128xf32> to vector<1x128xf32>
    %7 = vector.shape_cast %6 : vector<1x128xf32> to vector<1x1x128xf32>
    %c0_6 = arith.constant 0 : index
    %c0_7 = arith.constant 0 : index
    %c0_8 = arith.constant 0 : index
    %8 = vector.load %arg4[%c0_6, %c0_7, %c0_8] : memref<1x2x128xf32, #tpu.memory_space<vmem>>, vector<1x1x128xf32>
    tpu.vector_store %arg4[%c0_6, %c0_7, %c0_8], %7 {strides = array<i32>} : memref<1x2x128xf32, #tpu.memory_space<vmem>>, vector<1x1x128xf32>,
    %9 = arith.mulf %2, %2 : vector<256x128xf32>
    %cst_9 = arith.constant dense<0.000000e+00> : vector<128xf32>
    %10 = vector.multi_reduction <add>, %9, %cst_9 [0] : vector<256x128xf32> to vector<128xf32>
    %11 = vector.shape_cast %10 : vector<128xf32> to vector<1x128xf32>
    %12 = vector.shape_cast %11 : vector<1x128xf32> to vector<1x1x128xf32>
    %c0_10 = arith.constant 0 : index
    %c1 = arith.constant 1 : index
    %c0_11 = arith.constant 0 : index
    %13 = vector.load %arg4[%c0_10, %c1, %c0_11] : memref<1x2x128xf32, #tpu.memory_space<vmem>>, vector<1x1x128xf32>
    tpu.vector_store %arg4[%c0_10, %c1, %c0_11], %12 {strides = array<i32>} : memref<1x2x128xf32, #tpu.memory_space<vmem>>, vector<1x1x128xf32>,
    return
  }
  func.func @transform_0(%arg0: i32) -> (i32, i32) {
    %c0_i32 = arith.constant 0 : i32
    %c0_i32_0 = arith.constant 0 : i32
    return %arg0, %c0_i32 : i32, i32
  }
  func.func @transform_1(%arg0: i32) -> (i32, i32) {
    %c0_i32 = arith.constant 0 : i32
    %c0_i32_0 = arith.constant 0 : i32
    %c0_i32_1 = arith.constant 0 : i32
    return %c0_i32, %c0_i32_0 : i32, i32
  }
  func.func @transform_2(%arg0: i32) -> (i32, i32) {
    %c0_i32 = arith.constant 0 : i32
    %c0_i32_0 = arith.constant 0 : i32
    return %arg0, %c0_i32 : i32, i32
  }
  func.func @transform_3(%arg0: i32) -> (i32, i32, i32) {
    %c0_i32 = arith.constant 0 : i32
    %c0_i32_0 = arith.constant 0 : i32
    %c0_i32_1 = arith.constant 0 : i32
    return %arg0, %c0_i32, %c0_i32_0 : i32, i32, i32
  }
}

module attributes {stable_mosaic.version = 11 : i64} {
  func.func @_scale_shift_silu_kernel(%arg0: i32, %arg1: memref<256x128xbf16, #tpu.memory_space<vmem>>, %arg2: memref<1x128xf32, #tpu.memory_space<vmem>>, %arg3: memref<1x128xf32, #tpu.memory_space<vmem>>, %arg4: memref<256x128xf32, #tpu.memory_space<vmem>>) attributes {dimension_semantics = [#tpu.dimension_semantics<parallel>], iteration_bounds = array<i64: 2>, scalar_prefetch = 0 : i64, scratch_operands = 0 : i64, tpu.core_type = #tpu.core_type<tc>, window_params = [{transform_indices = @transform_0, window_bounds = array<i64: 256, 128>}, {pipeline_mode = #tpu.pipeline_mode<synchronous>, transform_indices = @transform_1, window_bounds = array<i64: 1, 128>}, {pipeline_mode = #tpu.pipeline_mode<synchronous>, transform_indices = @transform_2, window_bounds = array<i64: 1, 128>}, {transform_indices = @transform_3, window_bounds = array<i64: 256, 128>}]} {
    %c0 = arith.constant 0 : index
    %c0_0 = arith.constant 0 : index
    %0 = vector.load %arg1[%c0, %c0_0] : memref<256x128xbf16, #tpu.memory_space<vmem>>, vector<256x128xbf16>
    %1 = arith.extf %0 : vector<256x128xbf16> to vector<256x128xf32>
    %c0_1 = arith.constant 0 : index
    %c0_2 = arith.constant 0 : index
    %2 = vector.load %arg2[%c0_1, %c0_2] : memref<1x128xf32, #tpu.memory_space<vmem>>, vector<1x128xf32>
    %3 = vector.broadcast %2 : vector<1x128xf32> to vector<256x128xf32>
    %4 = arith.mulf %1, %3 : vector<256x128xf32>
    %c0_3 = arith.constant 0 : index
    %c0_4 = arith.constant 0 : index
    %5 = vector.load %arg3[%c0_3, %c0_4] : memref<1x128xf32, #tpu.memory_space<vmem>>, vector<1x128xf32>
    %6 = vector.broadcast %5 : vector<1x128xf32> to vector<256x128xf32>
    %7 = arith.addf %4, %6 : vector<256x128xf32>
    %cst = arith.constant 5.000000e-01 : f32
    %8 = vector.broadcast %cst : f32 to vector<256x128xf32>
    %9 = arith.mulf %8, %7 : vector<256x128xf32>
    %10 = math.tanh %9 : vector<256x128xf32>
    %cst_5 = arith.constant 1.000000e+00 : f32
    %11 = vector.broadcast %cst_5 : f32 to vector<256x128xf32>
    %12 = arith.addf %10, %11 : vector<256x128xf32>
    %cst_6 = arith.constant 5.000000e-01 : f32
    %13 = vector.broadcast %cst_6 : f32 to vector<256x128xf32>
    %14 = arith.mulf %13, %12 : vector<256x128xf32>
    %15 = arith.mulf %7, %14 : vector<256x128xf32>
    %c0_7 = arith.constant 0 : index
    %c0_8 = arith.constant 0 : index
    %16 = vector.load %arg4[%c0_7, %c0_8] : memref<256x128xf32, #tpu.memory_space<vmem>>, vector<256x128xf32>
    tpu.vector_store %arg4[%c0_7, %c0_8], %15 {strides = array<i32>} : memref<256x128xf32, #tpu.memory_space<vmem>>, vector<256x128xf32>,
    return
  }
  func.func @transform_0(%arg0: i32) -> (i32, i32) {
    %c0_i32 = arith.constant 0 : i32
    %c0_i32_0 = arith.constant 0 : i32
    return %arg0, %c0_i32 : i32, i32
  }
  func.func @transform_1(%arg0: i32) -> (i32, i32) {
    %c0_i32 = arith.constant 0 : i32
    %c0_i32_0 = arith.constant 0 : i32
    %c0_i32_1 = arith.constant 0 : i32
    return %c0_i32, %c0_i32_0 : i32, i32
  }
  func.func @transform_2(%arg0: i32) -> (i32, i32) {
    %c0_i32 = arith.constant 0 : i32
    %c0_i32_0 = arith.constant 0 : i32
    %c0_i32_1 = arith.constant 0 : i32
    return %c0_i32, %c0_i32_0 : i32, i32
  }
  func.func @transform_3(%arg0: i32) -> (i32, i32) {
    %c0_i32 = arith.constant 0 : i32
    %c0_i32_0 = arith.constant 0 : i32
    return %arg0, %c0_i32 : i32, i32
  }
}

</mosaic_0001>

<llo_original>
// kernel: spp_bottleneck.4
$region0: #{spp_bottleneck.4}
  #allocation0 [shape = 'u32[]', space=smem, size = 0x4, offset = 0x4, fixed_abs, tag = 'smem constant byte address 0x4 - core index']
  #allocation1 [shape = 'u32[72,128]{1,0:T(1,128)}', space=vmem, size = 0x9000, scoped, tag = 'internal scratch']
  %s0 = inlined_call_operand.vmem [shape: bf16[512,4], index: 0, kind: input, shape index: {}]
  %s1 = inlined_call_operand.vmem [shape: bf16[4,128], index: 1, kind: input, shape index: {}]
  %s2 = inlined_call_operand.vmem [shape: bf16[512,128], index: 2, kind: output, shape index: {0}]
  %s3 = inlined_call_operand.vmem [shape: f32[2,2,128], index: 3, kind: output, shape index: {1}]
  %4 = xla_tuple %s2, %s3
  %s5 = sld [smem:[#allocation0]]
  $region49: #{spp_bottleneck.4} parent=0
    _
  %s7 = ssub.s32 1, %s5
  %s8 = scalar_select 0, %s7, %s5
  loop: start=0, step=1, limit=4
  $region2: #{spp_bottleneck.4} parent=0 // loop_pre_header
    _
  $region3: #{spp_bottleneck.4} parent=0 // loop_header
    %s10 = sphi 0, %s14
    %p11 = scmp.ge.s32.totalorder %s10, 4
    %s20 = sphi 0, %s22
    %s23 = sphi 0, %s20
    %s24 = sphi 0, %s23
    %s40 = sphi 0, %s24
    %s44 = sphi 0, %s44
    %s46 = sphi 0, %s44
    %s47 = sphi 0, %s46
    %s61 = sphi 0, %s47
    %s67 = sphi 0, %s69
    %s70 = sphi 0, %s67
    %s71 = sphi 0, %s70
    %s87 = sphi 0, %s71
    %s93 = sphi 0, %s95
    %s96 = sphi 0, %s93
    %s97 = sphi 0, %s96
    %s113 = sphi 0, %s97
  $region4: #{spp_bottleneck.4} parent=0 // loop_header_branch
    %13 = sbr.rel (%p11) target = $region8
  $region5: #{spp_bottleneck.4} parent=0 // loop_body
    %s15 = ssub.s32 %s10, 1
    %s16 = ssub.s32 %s10, 2
    %s17 = sadd.s32 %s10, 1
    %s18 = ssub.s32 %s10, %s17
    %p19 = scmp.eq.s32.totalorder %s18, 0
    %s21 = sadd.s32 %s20, 1
    %s22 = scalar_select %p19, %s20, %s21
    %p25 = pneg %p19
    %p26 = scmp.eq.s32.totalorder %s10, 1
    %p27 = por %p25, %p26
    %p28 = scmp.ne.s32.totalorder %s20, %s23
    %p29 = scmp.eq.s32.totalorder %s10, 0
    %p30 = por %p28, %p29
    %p31 = scmp.ne.s32.totalorder %s20, %s23
    %p32 = scmp.eq.s32.totalorder %s15, 1
    %p33 = por %p31, %p32
    %p34 = scmp.ne.s32.totalorder %s23, %s24
    %p35 = scmp.eq.s32.totalorder %s15, 0
    %p36 = por %p34, %p35
    %p37 = scmp.ne.s32.totalorder %s23, %s24
    %p38 = scmp.eq.s32.totalorder %s16, 1
    %p39 = por %p37, %p38
    %p41 = scmp.ne.s32.totalorder %s24, %s40
    %p42 = scmp.eq.s32.totalorder %s16, 0
    %p43 = por %p41, %p42
    %s45 = sadd.s32 %s44, 1
    %p48 = scmp.eq.s32.totalorder %s10, 1
    %p49 = scmp.ne.s32.totalorder %s44, %s46
    %p50 = scmp.eq.s32.totalorder %s10, 0
    %p51 = por %p49, %p50
    %p52 = scmp.ne.s32.totalorder %s44, %s46
    %p53 = scmp.eq.s32.totalorder %s15, 1
    %p54 = por %p52, %p53
    %p55 = scmp.ne.s32.totalorder %s46, %s47
    %p56 = scmp.eq.s32.totalorder %s15, 0
    %p57 = por %p55, %p56
    %p58 = scmp.ne.s32.totalorder %s46, %s47
    %p59 = scmp.eq.s32.totalorder %s16, 1
    %p60 = por %p58, %p59
    %p62 = scmp.ne.s32.totalorder %s47, %s61
    %p63 = scmp.eq.s32.totalorder %s16, 0
    %p64 = por %p62, %p63
    %s65 = ssub.s32 %s10, %s17
    %p66 = scmp.eq.s32.totalorder %s65, 0
    %s68 = sadd.s32 %s67, 1
    %s69 = scalar_select %p66, %s67, %s68
    %p72 = pneg %p66
    %p73 = scmp.eq.s32.totalorder %s10, 1
    %p74 = por %p72, %p73
    %p75 = scmp.ne.s32.totalorder %s67, %s70
    %p76 = scmp.eq.s32.totalorder %s10, 0
    %p77 = por %p75, %p76
    %p78 = scmp.ne.s32.totalorder %s67, %s70
    %p79 = scmp.eq.s32.totalorder %s15, 1
    %p80 = por %p78, %p79
    %p81 = scmp.ne.s32.totalorder %s70, %s71
    %p82 = scmp.eq.s32.totalorder %s15, 0
    %p83 = por %p81, %p82
    %p84 = scmp.ne.s32.totalorder %s70, %s71
    %p85 = scmp.eq.s32.totalorder %s16, 1
    %p86 = por %p84, %p85
    %p88 = scmp.ne.s32.totalorder %s71, %s87
    %p89 = scmp.eq.s32.totalorder %s16, 0
    %p90 = por %p88, %p89
    %s91 = ssub.s32 %s10, %s17
    %p92 = scmp.eq.s32.totalorder %s91, 0
    %s94 = sadd.s32 %s93, 1
    %s95 = scalar_select %p92, %s93, %s94
    %p98 = pneg %p92
    %p99 = scmp.eq.s32.totalorder %s10, 1
    %p100 = por %p98, %p99
    %p101 = scmp.ne.s32.totalorder %s93, %s96
    %p102 = scmp.eq.s32.totalorder %s10, 0
    %p103 = por %p101, %p102
    %p104 = scmp.ne.s32.totalorder %s93, %s96
    %p105 = scmp.eq.s32.totalorder %s15, 1
    %p106 = por %p104, %p105
    %p107 = scmp.ne.s32.totalorder %s96, %s97
    %p108 = scmp.eq.s32.totalorder %s15, 0
    %p109 = por %p107, %p108
    %p110 = scmp.ne.s32.totalorder %s96, %s97
    %p111 = scmp.eq.s32.totalorder %s16, 1
    %p112 = por %p110, %p111
    %p114 = scmp.ne.s32.totalorder %s97, %s113
    %p115 = scmp.eq.s32.totalorder %s16, 0
    %p116 = por %p114, %p115
    %p117 = scmp.le.s32.totalorder 1, %s10
    %p118 = scmp.lt.s32.totalorder %s10, 3
    %p119 = pnand %p117, %p118
    %p120 = pneg %p119
    // Predicated region
    $region9: #{spp_bottleneck.4} parent=5 // pred_check
      _
    $region10: #{spp_bottleneck.4} parent=5 // pred_check_branch
      %122 = sbr.rel (%p119) target = $region12
    $region11: #{spp_bottleneck.4} parent=5 // pred_region
      %s123 = ssub.s32 %s10, 1
      // Predicated region
      $region13: #{spp_bottleneck.4} parent=11 // pred_check
        %p124 = pneg %p57
      $region14: #{spp_bottleneck.4} parent=11 // pred_check_branch
        %126 = sbr.rel (%p124) target = $region16
      $region15: #{spp_bottleneck.4} parent=11 // pred_region
        _
      $region16: #{spp_bottleneck.4} parent=11 // pred_fallthru
        _
    $region12: #{spp_bottleneck.4} parent=5 // pred_fallthru
      _
    %p127 = scmp.lt.s32.totalorder %s10, 2
    // Predicated region
    $region17: #{spp_bottleneck.4} parent=5 // pred_check
      %p128 = pneg %p127
    $region18: #{spp_bottleneck.4} parent=5 // pred_check_branch
      %130 = sbr.rel (%p128) target = $region20
    $region19: #{spp_bottleneck.4} parent=5 // pred_region
      // Predicated region
      $region21: #{spp_bottleneck.4} parent=19 // pred_check
        %p131 = pneg %p30
      $region22: #{spp_bottleneck.4} parent=19 // pred_check_branch
        %133 = sbr.rel (%p131) target = $region24
      $region23: #{spp_bottleneck.4} parent=19 // pred_region
        %s134 = smul.u32 32, %s10
        %p135 = scmp.lt.s32.totalorder %s134, 63
        %s136 = scalar_select %p135, %s134, 63
        %s137 = smul.addr %s136, 4
        %s138 = scalar_lea.vmem %s0, %s137
        %s139 = smul.u32 32, %s10
      $region24: #{spp_bottleneck.4} parent=19 // pred_fallthru
        _
    $region20: #{spp_bottleneck.4} parent=5 // pred_fallthru
      _
    %p140 = scmp.le.s32.totalorder 1, %s10
    %p141 = scmp.lt.s32.totalorder %s10, 3
    %p142 = pnand %p140, %p141
    %p143 = pneg %p142
    // Predicated region
    $region25: #{spp_bottleneck.4} parent=5 // pred_check
      _
    $region26: #{spp_bottleneck.4} parent=5 // pred_check_branch
      %145 = sbr.rel (%p142) target = $region28
    $region27: #{spp_bottleneck.4} parent=5 // pred_region
      %s146 = ssub.s32 %s10, 1
      %s147 = smul.u32 32, %s15
      %p148 = scmp.lt.s32.totalorder %s147, 63
      %s149 = scalar_select %p148, %s147, 63
      %s150 = smul.addr %s149, 4
      %s151 = scalar_lea.vmem %s0, %s150
      %p152 = pneg %p36
      %p153 = pneg %p33
      %p154 = pneg %p57
      %p155 = pneg %p54
      %p156 = pneg %p83
      %p157 = pneg %p80
      %s158 = smul.u32 32, %s15
      %p159 = scmp.lt.s32.totalorder %s158, 63
      %s160 = scalar_select %p159, %s158, 63
      %s161 = smul.addr %s160, 4
      %s162 = scalar_lea.vmem %s2, %s161
      %p163 = pneg %p109
      %p164 = pneg %p106
      %p165 = scmp.lt.s32.totalorder %s15, 1
      %s166 = scalar_select %p165, %s15, 1
      %s167 = smul.addr %s166, 2
      %s168 = scalar_lea.vmem %s3, %s167
      %s169 = smul.u32 32, %s15
      %p170 = scmp.lt.s32.totalorder %s169, 63
      %s171 = scalar_select %p170, %s169, 63
      %s172 = smul.addr %s171, 4
      %s173 = scalar_lea.vmem %s0, %s172
      %s174 = smul.u32 32, %s15
      %s175 = smul.u32 32, %s15
      %p176 = scmp.lt.s32.totalorder %s175, 63
      %s177 = scalar_select %p176, %s175, 63
      %s178 = smul.addr %s177, 4
      %s179 = scalar_lea.vmem %s2, %s178
      %s180 = smul.u32 32, %s15
      %p181 = scmp.lt.s32.totalorder %s15, 1
      %s182 = scalar_select %p181, %s15, 1
      %s183 = smul.addr %s182, 2
      %s184 = scalar_lea.vmem %s3, %s183
      %v186 = vld [vmem:[%s173] sm:$0xf]
      %v187 = vld [vmem:[%s173 + $0x4] sm:$0xf]
      %v188 = vld [vmem:[%s173 + $0x8] sm:$0xf]
      %v189 = vld [vmem:[%s173 + $0xc] sm:$0xf]
      %v190 = vld [vmem:[%s173 + $0x10] sm:$0xf]
      %v191 = vld [vmem:[%s173 + $0x14] sm:$0xf]
      %v192 = vld [vmem:[%s173 + $0x18] sm:$0xf]
      %v193 = vld [vmem:[%s173 + $0x1c] sm:$0xf]
      %v194 = vld [vmem:[%s173 + $0x20] sm:$0xf]
      %v195 = vld [vmem:[%s173 + $0x24] sm:$0xf]
      %v196 = vld [vmem:[%s173 + $0x28] sm:$0xf]
      %v197 = vld [vmem:[%s173 + $0x2c] sm:$0xf]
      %v198 = vld [vmem:[%s173 + $0x30] sm:$0xf]
      %v199 = vld [vmem:[%s173 + $0x34] sm:$0xf]
      %v200 = vld [vmem:[%s173 + $0x38] sm:$0xf]
      %v201 = vld [vmem:[%s173 + $0x3c] sm:$0xf]
      %v202 = vld [vmem:[%s173 + $0x40] sm:$0xf]
      %v203 = vld [vmem:[%s173 + $0x44] sm:$0xf]
      %v204 = vld [vmem:[%s173 + $0x48] sm:$0xf]
      %v205 = vld [vmem:[%s173 + $0x4c] sm:$0xf]
      %v206 = vld [vmem:[%s173 + $0x50] sm:$0xf]
      %v207 = vld [vmem:[%s173 + $0x54] sm:$0xf]
      %v208 = vld [vmem:[%s173 + $0x58] sm:$0xf]
      %v209 = vld [vmem:[%s173 + $0x5c] sm:$0xf]
      %v210 = vld [vmem:[%s173 + $0x60] sm:$0xf]
      %v211 = vld [vmem:[%s173 + $0x64] sm:$0xf]
      %v212 = vld [vmem:[%s173 + $0x68] sm:$0xf]
      %v213 = vld [vmem:[%s173 + $0x6c] sm:$0xf]
      %v214 = vld [vmem:[%s173 + $0x70] sm:$0xf]
      %v215 = vld [vmem:[%s173 + $0x74] sm:$0xf]
      %v216 = vld [vmem:[%s173 + $0x78] sm:$0xf]
      %v217 = vld [vmem:[%s173 + $0x7c] sm:$0xf]
      %v218 = vld [vmem:[%s1] sm:$0x3]
      %v251 = vunpack.c.l.b16 %v186
      %v252 = vunpack.c.l.b16 %v187
      %v253 = vunpack.c.l.b16 %v188
      %v254 = vunpack.c.l.b16 %v189
      %v255 = vunpack.c.l.b16 %v190
      %v256 = vunpack.c.l.b16 %v191
      %v257 = vunpack.c.l.b16 %v192
      %v258 = vunpack.c.l.b16 %v193
      %v259 = vunpack.c.l.b16 %v194
      %v260 = vunpack.c.l.b16 %v195
      %v261 = vunpack.c.l.b16 %v196
      %v262 = vunpack.c.l.b16 %v197
      %v263 = vunpack.c.l.b16 %v198
      %v264 = vunpack.c.l.b16 %v199
      %v265 = vunpack.c.l.b16 %v200
      %v266 = vunpack.c.l.b16 %v201
      %v267 = vunpack.c.l.b16 %v202
      %v268 = vunpack.c.l.b16 %v203
      %v269 = vunpack.c.l.b16 %v204
      %v270 = vunpack.c.l.b16 %v205
      %v271 = vunpack.c.l.b16 %v206
      %v272 = vunpack.c.l.b16 %v207
      %v273 = vunpack.c.l.b16 %v208
      %v274 = vunpack.c.l.b16 %v209
      %v275 = vunpack.c.l.b16 %v210
      %v276 = vunpack.c.l.b16 %v211
      %v277 = vunpack.c.l.b16 %v212
      %v278 = vunpack.c.l.b16 %v213
      %v279 = vunpack.c.l.b16 %v214
      %v280 = vunpack.c.l.b16 %v215
      %v281 = vunpack.c.l.b16 %v216
      %v282 = vunpack.c.l.b16 %v217
      %v283 = vpack.c.b16 %v252, %v251
      %v284 = vpack.c.b16 %v254, %v253
      %v285 = vpack.c.b16 %v256, %v255
      %v286 = vpack.c.b16 %v258, %v257
      %v287 = vpack.c.b16 %v260, %v259
      %v288 = vpack.c.b16 %v262, %v261
      %v289 = vpack.c.b16 %v264, %v263
      %v290 = vpack.c.b16 %v266, %v265
      %v291 = vpack.c.b16 %v268, %v267
      %v292 = vpack.c.b16 %v270, %v269
      %v293 = vpack.c.b16 %v272, %v271
      %v294 = vpack.c.b16 %v274, %v273
      %v295 = vpack.c.b16 %v276, %v275
      %v296 = vpack.c.b16 %v278, %v277
      %v297 = vpack.c.b16 %v280, %v279
      %v298 = vpack.c.b16 %v282, %v281
      %vm299 = vcmask 31744
      %v301 = vsel %vm299, %v283, 0
      %v304 = vsel %vm299, %v284, 0
      %v307 = vsel %vm299, %v285, 0
      %v310 = vsel %vm299, %v286, 0
      %v313 = vsel %vm299, %v287, 0
      %v316 = vsel %vm299, %v288, 0
      %v319 = vsel %vm299, %v289, 0
      %v322 = vsel %vm299, %v290, 0
      %v325 = vsel %vm299, %v291, 0
      %v328 = vsel %vm299, %v292, 0
      %v331 = vsel %vm299, %v293, 0
      %v334 = vsel %vm299, %v294, 0
      %v337 = vsel %vm299, %v295, 0
      %v340 = vsel %vm299, %v296, 0
      %v343 = vsel %vm299, %v297, 0
      %v346 = vsel %vm299, %v298, 0
      %vm348 = vcmask 1041408
      %v350 = vsel %vm348, %v218, 0
      %352 = vmatpush.bf16.msra.mxu0 0
      %353 = vmatpush.bf16.msra.mxu0 0
      %354 = vmatpush.bf16.msra.mxu0 0
      %355 = vmatpush.bf16.msra.mxu0 0
      %356 = vmatpush.bf16.msra.mxu0 0
      %357 = vmatpush.bf16.msra.mxu0 0
      %358 = vmatpush.bf16.msra.mxu0 0
      %359 = vmatpush.bf16.msra.mxu0 %v350
      %360 = vmatmul.bf16.gmra.mxu0 %v301
      %v361 = vpop.f32.mrf.mxu0
      %v362 = vadd.f32 0.0, %v361
      %v363 = vpop.f32.mrf.mxu0
      %v364 = vadd.f32 0.0, %v363
      %365 = vmatmul.bf16.gmra.mxu0 %v304
      %v366 = vpop.f32.mrf.mxu0
      %v367 = vadd.f32 0.0, %v366
      %v368 = vpop.f32.mrf.mxu0
      %v369 = vadd.f32 0.0, %v368
      %370 = vmatmul.bf16.gmra.mxu0 %v307
      %v371 = vpop.f32.mrf.mxu0
      %v372 = vadd.f32 0.0, %v371
      %v373 = vpop.f32.mrf.mxu0
      %v374 = vadd.f32 0.0, %v373
      %375 = vmatmul.bf16.gmra.mxu0 %v310
      %v376 = vpop.f32.mrf.mxu0
      %v377 = vadd.f32 0.0, %v376
      %v378 = vpop.f32.mrf.mxu0
      %v379 = vadd.f32 0.0, %v378
      %380 = vmatmul.bf16.gmra.mxu0 %v313
      %v381 = vpop.f32.mrf.mxu0
      %v382 = vadd.f32 0.0, %v381
      %v383 = vpop.f32.mrf.mxu0
      %v384 = vadd.f32 0.0, %v383
      %385 = vmatmul.bf16.gmra.mxu0 %v316
      %v386 = vpop.f32.mrf.mxu0
      %v387 = vadd.f32 0.0, %v386
      %v388 = vpop.f32.mrf.mxu0
      %v389 = vadd.f32 0.0, %v388
      %390 = vmatmul.bf16.gmra.mxu0 %v319
      %v391 = vpop.f32.mrf.mxu0
      %v392 = vadd.f32 0.0, %v391
      %v393 = vpop.f32.mrf.mxu0
      %v394 = vadd.f32 0.0, %v393
      %395 = vmatmul.bf16.gmra.mxu0 %v322
      %v396 = vpop.f32.mrf.mxu0
      %v397 = vadd.f32 0.0, %v396
      %v398 = vpop.f32.mrf.mxu0
      %v399 = vadd.f32 0.0, %v398
      %400 = vmatmul.bf16.gmra.mxu0 %v325
      %v401 = vpop.f32.mrf.mxu0
      %v402 = vadd.f32 0.0, %v401
      %v403 = vpop.f32.mrf.mxu0
      %v404 = vadd.f32 0.0, %v403
      %405 = vmatmul.bf16.gmra.mxu0 %v328
      %v406 = vpop.f32.mrf.mxu0
      %v407 = vadd.f32 0.0, %v406
      %v408 = vpop.f32.mrf.mxu0
      %v409 = vadd.f32 0.0, %v408
      %410 = vmatmul.bf16.gmra.mxu0 %v331
      %v411 = vpop.f32.mrf.mxu0
      %v412 = vadd.f32 0.0, %v411
      %v413 = vpop.f32.mrf.mxu0
      %v414 = vadd.f32 0.0, %v413
      %415 = vmatmul.bf16.gmra.mxu0 %v334
      %v416 = vpop.f32.mrf.mxu0
      %v417 = vadd.f32 0.0, %v416
      %v418 = vpop.f32.mrf.mxu0
      %v419 = vadd.f32 0.0, %v418
      %420 = vmatmul.bf16.gmra.mxu0 %v337
      %v421 = vpop.f32.mrf.mxu0
      %v422 = vadd.f32 0.0, %v421
      %v423 = vpop.f32.mrf.mxu0
      %v424 = vadd.f32 0.0, %v423
      %425 = vmatmul.bf16.gmra.mxu0 %v340
      %v426 = vpop.f32.mrf.mxu0
      %v427 = vadd.f32 0.0, %v426
      %v428 = vpop.f32.mrf.mxu0
      %v429 = vadd.f32 0.0, %v428
      %430 = vmatmul.bf16.gmra.mxu0 %v343
      %v431 = vpop.f32.mrf.mxu0
      %v432 = vadd.f32 0.0, %v431
      %v433 = vpop.f32.mrf.mxu0
      %v434 = vadd.f32 0.0, %v433
      %435 = vmatmul.bf16.gmra.mxu0 %v346
      %v436 = vpop.f32.mrf.mxu0
      %v437 = vadd.f32 0.0, %v436
      %v438 = vpop.f32.mrf.mxu0
      %v439 = vadd.f32 0.0, %v438
      %440 = vdwg.mxu0
      %v441 = vpack.c.bf16 %v362, %v362
      %v442 = vpack.c.bf16 %v364, %v364
      %v443 = vpack.c.bf16 %v367, %v367
      %v444 = vpack.c.bf16 %v369, %v369
      %v445 = vpack.c.bf16 %v372, %v372
      %v446 = vpack.c.bf16 %v374, %v374
      %v447 = vpack.c.bf16 %v377, %v377
      %v448 = vpack.c.bf16 %v379, %v379
      %v449 = vpack.c.bf16 %v382, %v382
      %v450 = vpack.c.bf16 %v384, %v384
      %v451 = vpack.c.bf16 %v387, %v387
      %v452 = vpack.c.bf16 %v389, %v389
      %v453 = vpack.c.bf16 %v392, %v392
      %v454 = vpack.c.bf16 %v394, %v394
      %v455 = vpack.c.bf16 %v397, %v397
      %v456 = vpack.c.bf16 %v399, %v399
      %v457 = vpack.c.bf16 %v402, %v402
      %v458 = vpack.c.bf16 %v404, %v404
      %v459 = vpack.c.bf16 %v407, %v407
      %v460 = vpack.c.bf16 %v409, %v409
      %v461 = vpack.c.bf16 %v412, %v412
      %v462 = vpack.c.bf16 %v414, %v414
      %v463 = vpack.c.bf16 %v417, %v417
      %v464 = vpack.c.bf16 %v419, %v419
      %v465 = vpack.c.bf16 %v422, %v422
      %v466 = vpack.c.bf16 %v424, %v424
      %v467 = vpack.c.bf16 %v427, %v427
      %v468 = vpack.c.bf16 %v429, %v429
      %v469 = vpack.c.bf16 %v432, %v432
      %v470 = vpack.c.bf16 %v434, %v434
      %v471 = vpack.c.bf16 %v437, %v437
      %v472 = vpack.c.bf16 %v439, %v439
      %473 = vst [vmem:[%s179] sm:$0xf] %v441
      %474 = vst [vmem:[%s179 + $0x4] sm:$0xf] %v442
      %475 = vst [vmem:[%s179 + $0x8] sm:$0xf] %v443
      %476 = vst [vmem:[%s179 + $0xc] sm:$0xf] %v444
      %477 = vst [vmem:[%s179 + $0x10] sm:$0xf] %v445
      %478 = vst [vmem:[%s179 + $0x14] sm:$0xf] %v446
      %479 = vst [vmem:[%s179 + $0x18] sm:$0xf] %v447
      %480 = vst [vmem:[%s179 + $0x1c] sm:$0xf] %v448
      %481 = vst [vmem:[%s179 + $0x20] sm:$0xf] %v449
      %482 = vst [vmem:[%s179 + $0x24] sm:$0xf] %v450
      %483 = vst [vmem:[%s179 + $0x28] sm:$0xf] %v451
      %484 = vst [vmem:[%s179 + $0x2c] sm:$0xf] %v452
      %485 = vst [vmem:[%s179 + $0x30] sm:$0xf] %v453
      %486 = vst [vmem:[%s179 + $0x34] sm:$0xf] %v454
      %487 = vst [vmem:[%s179 + $0x38] sm:$0xf] %v455
      %488 = vst [vmem:[%s179 + $0x3c] sm:$0xf] %v456
      %489 = vst [vmem:[%s179 + $0x40] sm:$0xf] %v457
      %490 = vst [vmem:[%s179 + $0x44] sm:$0xf] %v458
      %491 = vst [vmem:[%s179 + $0x48] sm:$0xf] %v459
      %492 = vst [vmem:[%s179 + $0x4c] sm:$0xf] %v460
      %493 = vst [vmem:[%s179 + $0x50] sm:$0xf] %v461
      %494 = vst [vmem:[%s179 + $0x54] sm:$0xf] %v462
      %495 = vst [vmem:[%s179 + $0x58] sm:$0xf] %v463
      %496 = vst [vmem:[%s179 + $0x5c] sm:$0xf] %v464
      %497 = vst [vmem:[%s179 + $0x60] sm:$0xf] %v465
      %498 = vst [vmem:[%s179 + $0x64] sm:$0xf] %v466
      %499 = vst [vmem:[%s179 + $0x68] sm:$0xf] %v467
      %500 = vst [vmem:[%s179 + $0x6c] sm:$0xf] %v468
      %501 = vst [vmem:[%s179 + $0x70] sm:$0xf] %v469
      %502 = vst [vmem:[%s179 + $0x74] sm:$0xf] %v470
      %503 = vst [vmem:[%s179 + $0x78] sm:$0xf] %v471
      %504 = vst [vmem:[%s179 + $0x7c] sm:$0xf] %v472
      %v505 = vadd.f32 %v362, %v364
      %v506 = vadd.f32 %v505, %v367
      %v507 = vadd.f32 %v506, %v369
      %v508 = vadd.f32 %v507, %v372
      %v509 = vadd.f32 %v508, %v374
      %v510 = vadd.f32 %v509, %v377
      %v511 = vadd.f32 %v510, %v379
      %v512 = vadd.f32 %v511, %v382
      %v513 = vadd.f32 %v512, %v384
      %v514 = vadd.f32 %v513, %v387
      %v515 = vadd.f32 %v514, %v389
      %v516 = vadd.f32 %v515, %v392
      %v517 = vadd.f32 %v516, %v394
      %v518 = vadd.f32 %v517, %v397
      %v519 = vadd.f32 %v518, %v399
      %v520 = vadd.f32 %v519, %v402
      %v521 = vadd.f32 %v520, %v404
      %v522 = vadd.f32 %v521, %v407
      %v523 = vadd.f32 %v522, %v409
      %v524 = vadd.f32 %v523, %v412
      %v525 = vadd.f32 %v524, %v414
      %v526 = vadd.f32 %v525, %v417
      %v527 = vadd.f32 %v526, %v419
      %v528 = vadd.f32 %v527, %v422
      %v529 = vadd.f32 %v528, %v424
      %v530 = vadd.f32 %v529, %v427
      %v531 = vadd.f32 %v530, %v429
      %v532 = vadd.f32 %v531, %v432
      %v533 = vadd.f32 %v532, %v434
      %v534 = vadd.f32 %v533, %v437
      %v535 = vadd.f32 %v534, %v439
      %v536 = vrot.slane %v535, 4
      %v537 = vadd.f32 %v535, %v536
      %v538 = vrot.slane %v537, 2
      %v539 = vadd.f32 %v537, %v538
      %v540 = vrot.slane %v539, 1
      %v541 = vadd.f32 %v539, %v540
      %542 = vst [vmem:[%s184] sm:$0x1] %v541
      %v543 = vmul.f32 %v362, %v362
      %v544 = vmul.f32 %v364, %v364
      %v545 = vmul.f32 %v367, %v367
      %v546 = vmul.f32 %v369, %v369
      %v547 = vmul.f32 %v372, %v372
      %v548 = vmul.f32 %v374, %v374
      %v549 = vmul.f32 %v377, %v377
      %v550 = vmul.f32 %v379, %v379
      %v551 = vmul.f32 %v382, %v382
      %v552 = vmul.f32 %v384, %v384
      %v553 = vmul.f32 %v387, %v387
      %v554 = vmul.f32 %v389, %v389
      %v555 = vmul.f32 %v392, %v392
      %v556 = vmul.f32 %v394, %v394
      %v557 = vmul.f32 %v397, %v397
      %v558 = vmul.f32 %v399, %v399
      %v559 = vmul.f32 %v402, %v402
      %v560 = vmul.f32 %v404, %v404
      %v561 = vmul.f32 %v407, %v407
      %v562 = vmul.f32 %v409, %v409
      %v563 = vmul.f32 %v412, %v412
      %v564 = vmul.f32 %v414, %v414
      %v565 = vmul.f32 %v417, %v417
      %v566 = vmul.f32 %v419, %v419
      %v567 = vmul.f32 %v422, %v422
      %v568 = vmul.f32 %v424, %v424
      %v569 = vmul.f32 %v427, %v427
      %v570 = vmul.f32 %v429, %v429
      %v571 = vmul.f32 %v432, %v432
      %v572 = vmul.f32 %v434, %v434
      %v573 = vmul.f32 %v437, %v437
      %v574 = vmul.f32 %v439, %v439
      %v575 = vadd.f32 %v543, %v544
      %v576 = vadd.f32 %v575, %v545
      %v577 = vadd.f32 %v576, %v546
      %v578 = vadd.f32 %v577, %v547
      %v579 = vadd.f32 %v578, %v548
      %v580 = vadd.f32 %v579, %v549
      %v581 = vadd.f32 %v580, %v550
      %v582 = vadd.f32 %v581, %v551
      %v583 = vadd.f32 %v582, %v552
      %v584 = vadd.f32 %v583, %v553
      %v585 = vadd.f32 %v584, %v554
      %v586 = vadd.f32 %v585, %v555
      %v587 = vadd.f32 %v586, %v556
      %v588 = vadd.f32 %v587, %v557
      %v589 = vadd.f32 %v588, %v558
      %v590 = vadd.f32 %v589, %v559
      %v591 = vadd.f32 %v590, %v560
      %v592 = vadd.f32 %v591, %v561
      %v593 = vadd.f32 %v592, %v562
      %v594 = vadd.f32 %v593, %v563
      %v595 = vadd.f32 %v594, %v564
      %v596 = vadd.f32 %v595, %v565
      %v597 = vadd.f32 %v596, %v566
      %v598 = vadd.f32 %v597, %v567
      %v599 = vadd.f32 %v598, %v568
      %v600 = vadd.f32 %v599, %v569
      %v601 = vadd.f32 %v600, %v570
      %v602 = vadd.f32 %v601, %v571
      %v603 = vadd.f32 %v602, %v572
      %v604 = vadd.f32 %v603, %v573
      %v605 = vadd.f32 %v604, %v574
      %v606 = vrot.slane %v605, 4
      %v607 = vadd.f32 %v605, %v606
      %v608 = vrot.slane %v607, 2
      %v609 = vadd.f32 %v607, %v608
      %v610 = vrot.slane %v609, 1
      %v611 = vadd.f32 %v609, %v610
      %612 = vst [vmem:[%s184 + $0x1] sm:$0x1] %v611
      %s613 = smul.u32 32, %s15
      %p614 = scmp.lt.s32.totalorder %s613, 63
      %s615 = scalar_select %p614, %s613, 63
      %s616 = smul.addr %s615, 4
      %s617 = scalar_lea.vmem %s2, %s616
      %p618 = scmp.lt.s32.totalorder %s15, 1
      %s619 = scalar_select %p618, %s15, 1
      %s620 = smul.addr %s619, 2
      %s621 = scalar_lea.vmem %s3, %s620
      // Predicated region
      $region29: #{spp_bottleneck.4} parent=27 // pred_check
        %p622 = pneg %p80
      $region30: #{spp_bottleneck.4} parent=27 // pred_check_branch
        %624 = sbr.rel (%p622) target = $region32
      $region31: #{spp_bottleneck.4} parent=27 // pred_region
        %s625 = smul.u32 32, %s15
      $region32: #{spp_bottleneck.4} parent=27 // pred_fallthru
        _
      // Predicated region
      $region33: #{spp_bottleneck.4} parent=27 // pred_check
        %p626 = pneg %p106
      $region34: #{spp_bottleneck.4} parent=27 // pred_check_branch
        %628 = sbr.rel (%p626) target = $region36
      $region35: #{spp_bottleneck.4} parent=27 // pred_region
        _
      $region36: #{spp_bottleneck.4} parent=27 // pred_fallthru
        _
    $region28: #{spp_bottleneck.4} parent=5 // pred_fallthru
      _
    %p629 = scmp.le.s32.totalorder 2, %s10
    // Predicated region
    $region37: #{spp_bottleneck.4} parent=5 // pred_check
      %p630 = pneg %p629
    $region38: #{spp_bottleneck.4} parent=5 // pred_check_branch
      %632 = sbr.rel (%p630) target = $region40
    $region39: #{spp_bottleneck.4} parent=5 // pred_region
      %s633 = ssub.s32 %s10, 2
      // Predicated region
      $region41: #{spp_bottleneck.4} parent=39 // pred_check
        %p634 = pneg %p86
      $region42: #{spp_bottleneck.4} parent=39 // pred_check_branch
        %636 = sbr.rel (%p634) target = $region44
      $region43: #{spp_bottleneck.4} parent=39 // pred_region
        %s637 = smul.u32 32, %s16
        %p638 = scmp.lt.s32.totalorder %s637, 63
        %s639 = scalar_select %p638, %s637, 63
        %s640 = smul.addr %s639, 4
        %s641 = scalar_lea.vmem %s2, %s640
      $region44: #{spp_bottleneck.4} parent=39 // pred_fallthru
        _
      // Predicated region
      $region45: #{spp_bottleneck.4} parent=39 // pred_check
        %p642 = pneg %p112
      $region46: #{spp_bottleneck.4} parent=39 // pred_check_branch
        %644 = sbr.rel (%p642) target = $region48
      $region47: #{spp_bottleneck.4} parent=39 // pred_region
        %p645 = scmp.lt.s32.totalorder %s16, 1
        %s646 = scalar_select %p645, %s16, 1
        %s647 = smul.addr %s646, 2
        %s648 = scalar_lea.vmem %s3, %s647
      $region48: #{spp_bottleneck.4} parent=39 // pred_fallthru
        _
    $region40: #{spp_bottleneck.4} parent=5 // pred_fallthru
      _
  $region6: #{spp_bottleneck.4} parent=0 // loop_footer
    %s14 = sadd.s32 1, %s10
  $region7: #{spp_bottleneck.4} parent=0 // loop_footer_branch
    %9 = sbr.rel target = $region3
  $region8: #{spp_bottleneck.4} parent=0 // loop_exit
    _

// kernel: spp_bottleneck.7
$region0: #{spp_bottleneck.7}
  #allocation0 [shape = 'u32[]', space=smem, size = 0x4, offset = 0x4, fixed_abs, tag = 'smem constant byte address 0x4 - core index']
  #allocation1 [shape = 'u32[72,128]{1,0:T(1,128)}', space=vmem, size = 0x9000, scoped, tag = 'internal scratch']
  %s0 = inlined_call_operand.vmem [shape: bf16[512,128], index: 0, kind: input, shape index: {}]
  %s1 = inlined_call_operand.vmem [shape: f32[1,128], index: 1, kind: input, shape index: {}]
  %s2 = inlined_call_operand.vmem [shape: f32[1,128], index: 2, kind: input, shape index: {}]
  %s3 = inlined_call_operand.vmem [shape: f32[512,128], index: 3, kind: output, shape index: {}]
  %s4 = sld [smem:[#allocation0]]
  $region45: #{spp_bottleneck.7} parent=0
    _
  %s6 = ssub.s32 1, %s4
  %s7 = scalar_select 0, %s6, %s4
  loop: start=0, step=1, limit=4
  $region2: #{spp_bottleneck.7} parent=0 // loop_pre_header
    _
  $region3: #{spp_bottleneck.7} parent=0 // loop_header
    %s9 = sphi 0, %s13
    %p10 = scmp.ge.s32.totalorder %s9, 4
    %s19 = sphi 0, %s21
    %s22 = sphi 0, %s19
    %s23 = sphi 0, %s22
    %s39 = sphi 0, %s23
    %s43 = sphi 0, %s43
    %s45 = sphi 0, %s43
    %s46 = sphi 0, %s45
    %s60 = sphi 0, %s46
    %s64 = sphi 0, %s64
    %s66 = sphi 0, %s64
    %s67 = sphi 0, %s66
    %s81 = sphi 0, %s67
    %s87 = sphi 0, %s89
    %s90 = sphi 0, %s87
    %s91 = sphi 0, %s90
    %s107 = sphi 0, %s91
  $region4: #{spp_bottleneck.7} parent=0 // loop_header_branch
    %12 = sbr.rel (%p10) target = $region8
  $region5: #{spp_bottleneck.7} parent=0 // loop_body
    %s14 = ssub.s32 %s9, 1
    %s15 = ssub.s32 %s9, 2
    %s16 = sadd.s32 %s9, 1
    %s17 = ssub.s32 %s9, %s16
    %p18 = scmp.eq.s32.totalorder %s17, 0
    %s20 = sadd.s32 %s19, 1
    %s21 = scalar_select %p18, %s19, %s20
    %p24 = pneg %p18
    %p25 = scmp.eq.s32.totalorder %s9, 1
    %p26 = por %p24, %p25
    %p27 = scmp.ne.s32.totalorder %s19, %s22
    %p28 = scmp.eq.s32.totalorder %s9, 0
    %p29 = por %p27, %p28
    %p30 = scmp.ne.s32.totalorder %s19, %s22
    %p31 = scmp.eq.s32.totalorder %s14, 1
    %p32 = por %p30, %p31
    %p33 = scmp.ne.s32.totalorder %s22, %s23
    %p34 = scmp.eq.s32.totalorder %s14, 0
    %p35 = por %p33, %p34
    %p36 = scmp.ne.s32.totalorder %s22, %s23
    %p37 = scmp.eq.s32.totalorder %s15, 1
    %p38 = por %p36, %p37
    %p40 = scmp.ne.s32.totalorder %s23, %s39
    %p41 = scmp.eq.s32.totalorder %s15, 0
    %p42 = por %p40, %p41
    %s44 = sadd.s32 %s43, 1
    %p47 = scmp.eq.s32.totalorder %s9, 1
    %p48 = scmp.ne.s32.totalorder %s43, %s45
    %p49 = scmp.eq.s32.totalorder %s9, 0
    %p50 = por %p48, %p49
    %p51 = scmp.ne.s32.totalorder %s43, %s45
    %p52 = scmp.eq.s32.totalorder %s14, 1
    %p53 = por %p51, %p52
    %p54 = scmp.ne.s32.totalorder %s45, %s46
    %p55 = scmp.eq.s32.totalorder %s14, 0
    %p56 = por %p54, %p55
    %p57 = scmp.ne.s32.totalorder %s45, %s46
    %p58 = scmp.eq.s32.totalorder %s15, 1
    %p59 = por %p57, %p58
    %p61 = scmp.ne.s32.totalorder %s46, %s60
    %p62 = scmp.eq.s32.totalorder %s15, 0
    %p63 = por %p61, %p62
    %s65 = sadd.s32 %s64, 1
    %p68 = scmp.eq.s32.totalorder %s9, 1
    %p69 = scmp.ne.s32.totalorder %s64, %s66
    %p70 = scmp.eq.s32.totalorder %s9, 0
    %p71 = por %p69, %p70
    %p72 = scmp.ne.s32.totalorder %s64, %s66
    %p73 = scmp.eq.s32.totalorder %s14, 1
    %p74 = por %p72, %p73
    %p75 = scmp.ne.s32.totalorder %s66, %s67
    %p76 = scmp.eq.s32.totalorder %s14, 0
    %p77 = por %p75, %p76
    %p78 = scmp.ne.s32.totalorder %s66, %s67
    %p79 = scmp.eq.s32.totalorder %s15, 1
    %p80 = por %p78, %p79
    %p82 = scmp.ne.s32.totalorder %s67, %s81
    %p83 = scmp.eq.s32.totalorder %s15, 0
    %p84 = por %p82, %p83
    %s85 = ssub.s32 %s9, %s16
    %p86 = scmp.eq.s32.totalorder %s85, 0
    %s88 = sadd.s32 %s87, 1
    %s89 = scalar_select %p86, %s87, %s88
    %p92 = pneg %p86
    %p93 = scmp.eq.s32.totalorder %s9, 1
    %p94 = por %p92, %p93
    %p95 = scmp.ne.s32.totalorder %s87, %s90
    %p96 = scmp.eq.s32.totalorder %s9, 0
    %p97 = por %p95, %p96
    %p98 = scmp.ne.s32.totalorder %s87, %s90
    %p99 = scmp.eq.s32.totalorder %s14, 1
    %p100 = por %p98, %p99
    %p101 = scmp.ne.s32.totalorder %s90, %s91
    %p102 = scmp.eq.s32.totalorder %s14, 0
    %p103 = por %p101, %p102
    %p104 = scmp.ne.s32.totalorder %s90, %s91
    %p105 = scmp.eq.s32.totalorder %s15, 1
    %p106 = por %p104, %p105
    %p108 = scmp.ne.s32.totalorder %s91, %s107
    %p109 = scmp.eq.s32.totalorder %s15, 0
    %p110 = por %p108, %p109
    %p111 = scmp.le.s32.totalorder 1, %s9
    %p112 = scmp.lt.s32.totalorder %s9, 3
    %p113 = pnand %p111, %p112
    %p114 = pneg %p113
    // Predicated region
    $region9: #{spp_bottleneck.7} parent=5 // pred_check
      _
    $region10: #{spp_bottleneck.7} parent=5 // pred_check_branch
      %116 = sbr.rel (%p113) target = $region12
    $region11: #{spp_bottleneck.7} parent=5 // pred_region
      %s117 = ssub.s32 %s9, 1
      // Predicated region
      $region13: #{spp_bottleneck.7} parent=11 // pred_check
        %p118 = pneg %p56
      $region14: #{spp_bottleneck.7} parent=11 // pred_check_branch
        %120 = sbr.rel (%p118) target = $region16
      $region15: #{spp_bottleneck.7} parent=11 // pred_region
        _
      $region16: #{spp_bottleneck.7} parent=11 // pred_fallthru
        _
      // Predicated region
      $region17: #{spp_bottleneck.7} parent=11 // pred_check
        %p121 = pneg %p77
      $region18: #{spp_bottleneck.7} parent=11 // pred_check_branch
        %123 = sbr.rel (%p121) target = $region20
      $region19: #{spp_bottleneck.7} parent=11 // pred_region
        _
      $region20: #{spp_bottleneck.7} parent=11 // pred_fallthru
        _
    $region12: #{spp_bottleneck.7} parent=5 // pred_fallthru
      _
    %p124 = scmp.lt.s32.totalorder %s9, 2
    // Predicated region
    $region21: #{spp_bottleneck.7} parent=5 // pred_check
      %p125 = pneg %p124
    $region22: #{spp_bottleneck.7} parent=5 // pred_check_branch
      %127 = sbr.rel (%p125) target = $region24
    $region23: #{spp_bottleneck.7} parent=5 // pred_region
      // Predicated region
      $region25: #{spp_bottleneck.7} parent=23 // pred_check
        %p128 = pneg %p29
      $region26: #{spp_bottleneck.7} parent=23 // pred_check_branch
        %130 = sbr.rel (%p128) target = $region28
      $region27: #{spp_bottleneck.7} parent=23 // pred_region
        %s131 = smul.u32 32, %s9
        %p132 = scmp.lt.s32.totalorder %s131, 63
        %s133 = scalar_select %p132, %s131, 63
        %s134 = smul.addr %s133, 4
        %s135 = scalar_lea.vmem %s0, %s134
        %s136 = smul.u32 32, %s9
      $region28: #{spp_bottleneck.7} parent=23 // pred_fallthru
        _
    $region24: #{spp_bottleneck.7} parent=5 // pred_fallthru
      _
    %p137 = scmp.le.s32.totalorder 1, %s9
    %p138 = scmp.lt.s32.totalorder %s9, 3
    %p139 = pnand %p137, %p138
    %p140 = pneg %p139
    // Predicated region
    $region29: #{spp_bottleneck.7} parent=5 // pred_check
      _
    $region30: #{spp_bottleneck.7} parent=5 // pred_check_branch
      %142 = sbr.rel (%p139) target = $region32
    $region31: #{spp_bottleneck.7} parent=5 // pred_region
      %s143 = ssub.s32 %s9, 1
      %s144 = smul.u32 32, %s14
      %p145 = scmp.lt.s32.totalorder %s144, 63
      %s146 = scalar_select %p145, %s144, 63
      %s147 = smul.addr %s146, 4
      %s148 = scalar_lea.vmem %s0, %s147
      %p149 = pneg %p35
      %p150 = pneg %p32
      %p151 = pneg %p56
      %p152 = pneg %p53
      %p153 = pneg %p77
      %p154 = pneg %p74
      %p155 = pneg %p103
      %p156 = pneg %p100
      %s157 = smul.u32 32, %s14
      %p158 = scmp.lt.s32.totalorder %s157, 63
      %s159 = scalar_select %p158, %s157, 63
      %s160 = smul.addr %s159, 8
      %s161 = scalar_lea.vmem %s3, %s160
      %s162 = smul.u32 32, %s14
      %p163 = scmp.lt.s32.totalorder %s162, 63
      %s164 = scalar_select %p163, %s162, 63
      %s165 = smul.addr %s164, 4
      %s166 = scalar_lea.vmem %s0, %s165
      %s167 = smul.u32 32, %s14
      %s168 = smul.u32 32, %s14
      %p169 = scmp.lt.s32.totalorder %s168, 63
      %s170 = scalar_select %p169, %s168, 63
      %s171 = smul.addr %s170, 8
      %s172 = scalar_lea.vmem %s3, %s171
      %s173 = smul.u32 32, %s14
      %v174 = vld [vmem:[%s166] sm:$0xf]
      %v175 = vld [vmem:[%s166 + $0x4] sm:$0xf]
      %v176 = vld [vmem:[%s166 + $0x8] sm:$0xf]
      %v177 = vld [vmem:[%s166 + $0xc] sm:$0xf]
      %v178 = vld [vmem:[%s166 + $0x10] sm:$0xf]
      %v179 = vld [vmem:[%s166 + $0x14] sm:$0xf]
      %v180 = vld [vmem:[%s166 + $0x18] sm:$0xf]
      %v181 = vld [vmem:[%s166 + $0x1c] sm:$0xf]
      %v182 = vld [vmem:[%s166 + $0x20] sm:$0xf]
      %v183 = vld [vmem:[%s166 + $0x24] sm:$0xf]
      %v184 = vld [vmem:[%s166 + $0x28] sm:$0xf]
      %v185 = vld [vmem:[%s166 + $0x2c] sm:$0xf]
      %v186 = vld [vmem:[%s166 + $0x30] sm:$0xf]
      %v187 = vld [vmem:[%s166 + $0x34] sm:$0xf]
      %v188 = vld [vmem:[%s166 + $0x38] sm:$0xf]
      %v189 = vld [vmem:[%s166 + $0x3c] sm:$0xf]
      %v190 = vld [vmem:[%s166 + $0x40] sm:$0xf]
      %v191 = vld [vmem:[%s166 + $0x44] sm:$0xf]
      %v192 = vld [vmem:[%s166 + $0x48] sm:$0xf]
      %v193 = vld [vmem:[%s166 + $0x4c] sm:$0xf]
      %v194 = vld [vmem:[%s166 + $0x50] sm:$0xf]
      %v195 = vld [vmem:[%s166 + $0x54] sm:$0xf]
      %v196 = vld [vmem:[%s166 + $0x58] sm:$0xf]
      %v197 = vld [vmem:[%s166 + $0x5c] sm:$0xf]
      %v198 = vld [vmem:[%s166 + $0x60] sm:$0xf]
      %v199 = vld [vmem:[%s166 + $0x64] sm:$0xf]
      %v200 = vld [vmem:[%s166 + $0x68] sm:$0xf]
      %v201 = vld [vmem:[%s166 + $0x6c] sm:$0xf]
      %v202 = vld [vmem:[%s166 + $0x70] sm:$0xf]
      %v203 = vld [vmem:[%s166 + $0x74] sm:$0xf]
      %v204 = vld [vmem:[%s166 + $0x78] sm:$0xf]
      %v205 = vld [vmem:[%s166 + $0x7c] sm:$0xf]
      %v206 = vunpack.c.l.bf16 %v174
      %v207 = vunpack.c.l.bf16 %v175
      %v208 = vunpack.c.l.bf16 %v176
      %v209 = vunpack.c.l.bf16 %v177
      %v210 = vunpack.c.l.bf16 %v178
      %v211 = vunpack.c.l.bf16 %v179
      %v212 = vunpack.c.l.bf16 %v180
      %v213 = vunpack.c.l.bf16 %v181
      %v214 = vunpack.c.l.bf16 %v182
      %v215 = vunpack.c.l.bf16 %v183
      %v216 = vunpack.c.l.bf16 %v184
      %v217 = vunpack.c.l.bf16 %v185
      %v218 = vunpack.c.l.bf16 %v186
      %v219 = vunpack.c.l.bf16 %v187
      %v220 = vunpack.c.l.bf16 %v188
      %v221 = vunpack.c.l.bf16 %v189
      %v222 = vunpack.c.l.bf16 %v190
      %v223 = vunpack.c.l.bf16 %v191
      %v224 = vunpack.c.l.bf16 %v192
      %v225 = vunpack.c.l.bf16 %v193
      %v226 = vunpack.c.l.bf16 %v194
      %v227 = vunpack.c.l.bf16 %v195
      %v228 = vunpack.c.l.bf16 %v196
      %v229 = vunpack.c.l.bf16 %v197
      %v230 = vunpack.c.l.bf16 %v198
      %v231 = vunpack.c.l.bf16 %v199
      %v232 = vunpack.c.l.bf16 %v200
      %v233 = vunpack.c.l.bf16 %v201
      %v234 = vunpack.c.l.bf16 %v202
      %v235 = vunpack.c.l.bf16 %v203
      %v236 = vunpack.c.l.bf16 %v204
      %v237 = vunpack.c.l.bf16 %v205
      %v238 = vld [vmem:[%s1] sm:$0x1]
      %v240 = vperm.slane %v238, 0
      %v242 = vmul.f32 %v206, %v240
      %v243 = vmul.f32 %v207, %v240
      %v244 = vmul.f32 %v208, %v240
      %v245 = vmul.f32 %v209, %v240
      %v246 = vmul.f32 %v210, %v240
      %v247 = vmul.f32 %v211, %v240
      %v248 = vmul.f32 %v212, %v240
      %v249 = vmul.f32 %v213, %v240
      %v250 = vmul.f32 %v214, %v240
      %v251 = vmul.f32 %v215, %v240
      %v252 = vmul.f32 %v216, %v240
      %v253 = vmul.f32 %v217, %v240
      %v254 = vmul.f32 %v218, %v240
      %v255 = vmul.f32 %v219, %v240
      %v256 = vmul.f32 %v220, %v240
      %v257 = vmul.f32 %v221, %v240
      %v258 = vmul.f32 %v222, %v240
      %v259 = vmul.f32 %v223, %v240
      %v260 = vmul.f32 %v224, %v240
      %v261 = vmul.f32 %v225, %v240
      %v262 = vmul.f32 %v226, %v240
      %v263 = vmul.f32 %v227, %v240
      %v264 = vmul.f32 %v228, %v240
      %v265 = vmul.f32 %v229, %v240
      %v266 = vmul.f32 %v230, %v240
      %v267 = vmul.f32 %v231, %v240
      %v268 = vmul.f32 %v232, %v240
      %v269 = vmul.f32 %v233, %v240
      %v270 = vmul.f32 %v234, %v240
      %v271 = vmul.f32 %v235, %v240
      %v272 = vmul.f32 %v236, %v240
      %v273 = vmul.f32 %v237, %v240
      %v274 = vld [vmem:[%s2] sm:$0x1]
      %v276 = vperm.slane %v274, 0
      %v278 = vadd.f32 %v242, %v276
      %v279 = vadd.f32 %v243, %v276
      %v280 = vadd.f32 %v244, %v276
      %v281 = vadd.f32 %v245, %v276
      %v282 = vadd.f32 %v246, %v276
      %v283 = vadd.f32 %v247, %v276
      %v284 = vadd.f32 %v248, %v276
      %v285 = vadd.f32 %v249, %v276
      %v286 = vadd.f32 %v250, %v276
      %v287 = vadd.f32 %v251, %v276
      %v288 = vadd.f32 %v252, %v276
      %v289 = vadd.f32 %v253, %v276
      %v290 = vadd.f32 %v254, %v276
      %v291 = vadd.f32 %v255, %v276
      %v292 = vadd.f32 %v256, %v276
      %v293 = vadd.f32 %v257, %v276
      %v294 = vadd.f32 %v258, %v276
      %v295 = vadd.f32 %v259, %v276
      %v296 = vadd.f32 %v260, %v276
      %v297 = vadd.f32 %v261, %v276
      %v298 = vadd.f32 %v262, %v276
      %v299 = vadd.f32 %v263, %v276
      %v300 = vadd.f32 %v264, %v276
      %v301 = vadd.f32 %v265, %v276
      %v302 = vadd.f32 %v266, %v276
      %v303 = vadd.f32 %v267, %v276
      %v304 = vadd.f32 %v268, %v276
      %v305 = vadd.f32 %v269, %v276
      %v306 = vadd.f32 %v270, %v276
      %v307 = vadd.f32 %v271, %v276
      %v308 = vadd.f32 %v272, %v276
      %v309 = vadd.f32 %v273, %v276
      %v310 = vmul.f32 %v278, 0.5
      %v311 = vmul.f32 %v279, 0.5
      %v312 = vmul.f32 %v280, 0.5
      %v313 = vmul.f32 %v281, 0.5
      %v314 = vmul.f32 %v282, 0.5
      %v315 = vmul.f32 %v283, 0.5
      %v316 = vmul.f32 %v284, 0.5
      %v317 = vmul.f32 %v285, 0.5
      %v318 = vmul.f32 %v286, 0.5
      %v319 = vmul.f32 %v287, 0.5
      %v320 = vmul.f32 %v288, 0.5
      %v321 = vmul.f32 %v289, 0.5
      %v322 = vmul.f32 %v290, 0.5
      %v323 = vmul.f32 %v291, 0.5
      %v324 = vmul.f32 %v292, 0.5
      %v325 = vmul.f32 %v293, 0.5
      %v326 = vmul.f32 %v294, 0.5
      %v327 = vmul.f32 %v295, 0.5
      %v328 = vmul.f32 %v296, 0.5
      %v329 = vmul.f32 %v297, 0.5
      %v330 = vmul.f32 %v298, 0.5
      %v331 = vmul.f32 %v299, 0.5
      %v332 = vmul.f32 %v300, 0.5
      %v333 = vmul.f32 %v301, 0.5
      %v334 = vmul.f32 %v302, 0.5
      %v335 = vmul.f32 %v303, 0.5
      %v336 = vmul.f32 %v304, 0.5
      %v337 = vmul.f32 %v305, 0.5
      %v338 = vmul.f32 %v306, 0.5
      %v339 = vmul.f32 %v307, 0.5
      %v340 = vmul.f32 %v308, 0.5
      %v341 = vmul.f32 %v309, 0.5
      %v342 = vtanh.pop %v310
      %v343 = vtanh.pop %v311
      %v344 = vtanh.pop %v312
      %v345 = vtanh.pop %v313
      %v346 = vtanh.pop %v314
      %v347 = vtanh.pop %v315
      %v348 = vtanh.pop %v316
      %v349 = vtanh.pop %v317
      %v350 = vtanh.pop %v318
      %v351 = vtanh.pop %v319
      %v352 = vtanh.pop %v320
      %v353 = vtanh.pop %v321
      %v354 = vtanh.pop %v322
      %v355 = vtanh.pop %v323
      %v356 = vtanh.pop %v324
      %v357 = vtanh.pop %v325
      %v358 = vtanh.pop %v326
      %v359 = vtanh.pop %v327
      %v360 = vtanh.pop %v328
      %v361 = vtanh.pop %v329
      %v362 = vtanh.pop %v330
      %v363 = vtanh.pop %v331
      %v364 = vtanh.pop %v332
      %v365 = vtanh.pop %v333
      %v366 = vtanh.pop %v334
      %v367 = vtanh.pop %v335
      %v368 = vtanh.pop %v336
      %v369 = vtanh.pop %v337
      %v370 = vtanh.pop %v338
      %v371 = vtanh.pop %v339
      %v372 = vtanh.pop %v340
      %v373 = vtanh.pop %v341
      %v374 = vadd.f32 %v342, 1.0
      %v375 = vadd.f32 %v343, 1.0
      %v376 = vadd.f32 %v344, 1.0
      %v377 = vadd.f32 %v345, 1.0
      %v378 = vadd.f32 %v346, 1.0
      %v379 = vadd.f32 %v347, 1.0
      %v380 = vadd.f32 %v348, 1.0
      %v381 = vadd.f32 %v349, 1.0
      %v382 = vadd.f32 %v350, 1.0
      %v383 = vadd.f32 %v351, 1.0
      %v384 = vadd.f32 %v352, 1.0
      %v385 = vadd.f32 %v353, 1.0
      %v386 = vadd.f32 %v354, 1.0
      %v387 = vadd.f32 %v355, 1.0
      %v388 = vadd.f32 %v356, 1.0
      %v389 = vadd.f32 %v357, 1.0
      %v390 = vadd.f32 %v358, 1.0
      %v391 = vadd.f32 %v359, 1.0
      %v392 = vadd.f32 %v360, 1.0
      %v393 = vadd.f32 %v361, 1.0
      %v394 = vadd.f32 %v362, 1.0
      %v395 = vadd.f32 %v363, 1.0
      %v396 = vadd.f32 %v364, 1.0
      %v397 = vadd.f32 %v365, 1.0
      %v398 = vadd.f32 %v366, 1.0
      %v399 = vadd.f32 %v367, 1.0
      %v400 = vadd.f32 %v368, 1.0
      %v401 = vadd.f32 %v369, 1.0
      %v402 = vadd.f32 %v370, 1.0
      %v403 = vadd.f32 %v371, 1.0
      %v404 = vadd.f32 %v372, 1.0
      %v405 = vadd.f32 %v373, 1.0
      %v406 = vmul.f32 %v374, 0.5
      %v407 = vmul.f32 %v375, 0.5
      %v408 = vmul.f32 %v376, 0.5
      %v409 = vmul.f32 %v377, 0.5
      %v410 = vmul.f32 %v378, 0.5
      %v411 = vmul.f32 %v379, 0.5
      %v412 = vmul.f32 %v380, 0.5
      %v413 = vmul.f32 %v381, 0.5
      %v414 = vmul.f32 %v382, 0.5
      %v415 = vmul.f32 %v383, 0.5
      %v416 = vmul.f32 %v384, 0.5
      %v417 = vmul.f32 %v385, 0.5
      %v418 = vmul.f32 %v386, 0.5
      %v419 = vmul.f32 %v387, 0.5
      %v420 = vmul.f32 %v388, 0.5
      %v421 = vmul.f32 %v389, 0.5
      %v422 = vmul.f32 %v390, 0.5
      %v423 = vmul.f32 %v391, 0.5
      %v424 = vmul.f32 %v392, 0.5
      %v425 = vmul.f32 %v393, 0.5
      %v426 = vmul.f32 %v394, 0.5
      %v427 = vmul.f32 %v395, 0.5
      %v428 = vmul.f32 %v396, 0.5
      %v429 = vmul.f32 %v397, 0.5
      %v430 = vmul.f32 %v398, 0.5
      %v431 = vmul.f32 %v399, 0.5
      %v432 = vmul.f32 %v400, 0.5
      %v433 = vmul.f32 %v401, 0.5
      %v434 = vmul.f32 %v402, 0.5
      %v435 = vmul.f32 %v403, 0.5
      %v436 = vmul.f32 %v404, 0.5
      %v437 = vmul.f32 %v405, 0.5
      %v438 = vmul.f32 %v278, %v406
      %v439 = vmul.f32 %v279, %v407
      %v440 = vmul.f32 %v280, %v408
      %v441 = vmul.f32 %v281, %v409
      %v442 = vmul.f32 %v282, %v410
      %v443 = vmul.f32 %v283, %v411
      %v444 = vmul.f32 %v284, %v412
      %v445 = vmul.f32 %v285, %v413
      %v446 = vmul.f32 %v286, %v414
      %v447 = vmul.f32 %v287, %v415
      %v448 = vmul.f32 %v288, %v416
      %v449 = vmul.f32 %v289, %v417
      %v450 = vmul.f32 %v290, %v418
      %v451 = vmul.f32 %v291, %v419
      %v452 = vmul.f32 %v292, %v420
      %v453 = vmul.f32 %v293, %v421
      %v454 = vmul.f32 %v294, %v422
      %v455 = vmul.f32 %v295, %v423
      %v456 = vmul.f32 %v296, %v424
      %v457 = vmul.f32 %v297, %v425
      %v458 = vmul.f32 %v298, %v426
      %v459 = vmul.f32 %v299, %v427
      %v460 = vmul.f32 %v300, %v428
      %v461 = vmul.f32 %v301, %v429
      %v462 = vmul.f32 %v302, %v430
      %v463 = vmul.f32 %v303, %v431
      %v464 = vmul.f32 %v304, %v432
      %v465 = vmul.f32 %v305, %v433
      %v466 = vmul.f32 %v306, %v434
      %v467 = vmul.f32 %v307, %v435
      %v468 = vmul.f32 %v308, %v436
      %v469 = vmul.f32 %v309, %v437
      %470 = vst [vmem:[%s172] sm:$0xff] %v438
      %471 = vst [vmem:[%s172 + $0x8] sm:$0xff] %v439
      %472 = vst [vmem:[%s172 + $0x10] sm:$0xff] %v440
      %473 = vst [vmem:[%s172 + $0x18] sm:$0xff] %v441
      %474 = vst [vmem:[%s172 + $0x20] sm:$0xff] %v442
      %475 = vst [vmem:[%s172 + $0x28] sm:$0xff] %v443
      %476 = vst [vmem:[%s172 + $0x30] sm:$0xff] %v444
      %477 = vst [vmem:[%s172 + $0x38] sm:$0xff] %v445
      %478 = vst [vmem:[%s172 + $0x40] sm:$0xff] %v446
      %479 = vst [vmem:[%s172 + $0x48] sm:$0xff] %v447
      %480 = vst [vmem:[%s172 + $0x50] sm:$0xff] %v448
      %481 = vst [vmem:[%s172 + $0x58] sm:$0xff] %v449
      %482 = vst [vmem:[%s172 + $0x60] sm:$0xff] %v450
      %483 = vst [vmem:[%s172 + $0x68] sm:$0xff] %v451
      %484 = vst [vmem:[%s172 + $0x70] sm:$0xff] %v452
      %485 = vst [vmem:[%s172 + $0x78] sm:$0xff] %v453
      %486 = vst [vmem:[%s172 + $0x80] sm:$0xff] %v454
      %487 = vst [vmem:[%s172 + $0x88] sm:$0xff] %v455
      %488 = vst [vmem:[%s172 + $0x90] sm:$0xff] %v456
      %489 = vst [vmem:[%s172 + $0x98] sm:$0xff] %v457
      %490 = vst [vmem:[%s172 + $0xa0] sm:$0xff] %v458
      %491 = vst [vmem:[%s172 + $0xa8] sm:$0xff] %v459
      %492 = vst [vmem:[%s172 + $0xb0] sm:$0xff] %v460
      %493 = vst [vmem:[%s172 + $0xb8] sm:$0xff] %v461
      %494 = vst [vmem:[%s172 + $0xc0] sm:$0xff] %v462
      %495 = vst [vmem:[%s172 + $0xc8] sm:$0xff] %v463
      %496 = vst [vmem:[%s172 + $0xd0] sm:$0xff] %v464
      %497 = vst [vmem:[%s172 + $0xd8] sm:$0xff] %v465
      %498 = vst [vmem:[%s172 + $0xe0] sm:$0xff] %v466
      %499 = vst [vmem:[%s172 + $0xe8] sm:$0xff] %v467
      %500 = vst [vmem:[%s172 + $0xf0] sm:$0xff] %v468
      %501 = vst [vmem:[%s172 + $0xf8] sm:$0xff] %v469
      %s502 = smul.u32 32, %s14
      %p503 = scmp.lt.s32.totalorder %s502, 63
      %s504 = scalar_select %p503, %s502, 63
      %s505 = smul.addr %s504, 8
      %s506 = scalar_lea.vmem %s3, %s505
      // Predicated region
      $region33: #{spp_bottleneck.7} parent=31 // pred_check
        %p507 = pneg %p100
      $region34: #{spp_bottleneck.7} parent=31 // pred_check_branch
        %509 = sbr.rel (%p507) target = $region36
      $region35: #{spp_bottleneck.7} parent=31 // pred_region
        %s510 = smul.u32 32, %s14
      $region36: #{spp_bottleneck.7} parent=31 // pred_fallthru
        _
    $region32: #{spp_bottleneck.7} parent=5 // pred_fallthru
      _
    %p511 = scmp.le.s32.totalorder 2, %s9
    // Predicated region
    $region37: #{spp_bottleneck.7} parent=5 // pred_check
      %p512 = pneg %p511
    $region38: #{spp_bottleneck.7} parent=5 // pred_check_branch
      %514 = sbr.rel (%p512) target = $region40
    $region39: #{spp_bottleneck.7} parent=5 // pred_region
      %s515 = ssub.s32 %s9, 2
      // Predicated region
      $region41: #{spp_bottleneck.7} parent=39 // pred_check
        %p516 = pneg %p106
      $region42: #{spp_bottleneck.7} parent=39 // pred_check_branch
        %518 = sbr.rel (%p516) target = $region44
      $region43: #{spp_bottleneck.7} parent=39 // pred_region
        %s519 = smul.u32 32, %s15
        %p520 = scmp.lt.s32.totalorder %s519, 63
        %s521 = scalar_select %p520, %s519, 63
        %s522 = smul.addr %s521, 8
        %s523 = scalar_lea.vmem %s3, %s522
      $region44: #{spp_bottleneck.7} parent=39 // pred_fallthru
        _
    $region40: #{spp_bottleneck.7} parent=5 // pred_fallthru
      _
  $region6: #{spp_bottleneck.7} parent=0 // loop_footer
    %s13 = sadd.s32 1, %s9
  $region7: #{spp_bottleneck.7} parent=0 // loop_footer_branch
    %8 = sbr.rel target = $region3
  $region8: #{spp_bottleneck.7} parent=0 // loop_exit
    _

// kernel: spp_bottleneck.6
$region0: #{spp_bottleneck.6}
  #allocation0 [shape = 'u32[]', space=smem, size = 0x4, offset = 0x4, fixed_abs, tag = 'smem constant byte address 0x4 - core index']
  #allocation1 [shape = 'u32[72,128]{1,0:T(1,128)}', space=vmem, size = 0x9000, scoped, tag = 'internal scratch']
  %s0 = inlined_call_operand.vmem [shape: bf16[512,512], index: 0, kind: input, shape index: {}]
  %s1 = inlined_call_operand.vmem [shape: bf16[512,128], index: 1, kind: input, shape index: {}]
  %s2 = inlined_call_operand.vmem [shape: bf16[512,128], index: 2, kind: output, shape index: {0}]
  %s3 = inlined_call_operand.vmem [shape: f32[2,2,128], index: 3, kind: output, shape index: {1}]
  %4 = xla_tuple %s2, %s3
  %s5 = sld [smem:[#allocation0]]
  $region49: #{spp_bottleneck.6} parent=0
    _
  %s7 = ssub.s32 1, %s5
  %s8 = scalar_select 0, %s7, %s5
  loop: start=0, step=1, limit=4
  $region2: #{spp_bottleneck.6} parent=0 // loop_pre_header
    _
  $region3: #{spp_bottleneck.6} parent=0 // loop_header
    %s10 = sphi 0, %s14
    %p11 = scmp.ge.s32.totalorder %s10, 4
    %s20 = sphi 0, %s22
    %s23 = sphi 0, %s20
    %s24 = sphi 0, %s23
    %s40 = sphi 0, %s24
    %s44 = sphi 0, %s44
    %s46 = sphi 0, %s44
    %s47 = sphi 0, %s46
    %s61 = sphi 0, %s47
    %s67 = sphi 0, %s69
    %s70 = sphi 0, %s67
    %s71 = sphi 0, %s70
    %s87 = sphi 0, %s71
    %s93 = sphi 0, %s95
    %s96 = sphi 0, %s93
    %s97 = sphi 0, %s96
    %s113 = sphi 0, %s97
  $region4: #{spp_bottleneck.6} parent=0 // loop_header_branch
    %13 = sbr.rel (%p11) target = $region8
  $region5: #{spp_bottleneck.6} parent=0 // loop_body
    %s15 = ssub.s32 %s10, 1
    %s16 = ssub.s32 %s10, 2
    %s17 = sadd.s32 %s10, 1
    %s18 = ssub.s32 %s10, %s17
    %p19 = scmp.eq.s32.totalorder %s18, 0
    %s21 = sadd.s32 %s20, 1
    %s22 = scalar_select %p19, %s20, %s21
    %p25 = pneg %p19
    %p26 = scmp.eq.s32.totalorder %s10, 1
    %p27 = por %p25, %p26
    %p28 = scmp.ne.s32.totalorder %s20, %s23
    %p29 = scmp.eq.s32.totalorder %s10, 0
    %p30 = por %p28, %p29
    %p31 = scmp.ne.s32.totalorder %s20, %s23
    %p32 = scmp.eq.s32.totalorder %s15, 1
    %p33 = por %p31, %p32
    %p34 = scmp.ne.s32.totalorder %s23, %s24
    %p35 = scmp.eq.s32.totalorder %s15, 0
    %p36 = por %p34, %p35
    %p37 = scmp.ne.s32.totalorder %s23, %s24
    %p38 = scmp.eq.s32.totalorder %s16, 1
    %p39 = por %p37, %p38
    %p41 = scmp.ne.s32.totalorder %s24, %s40
    %p42 = scmp.eq.s32.totalorder %s16, 0
    %p43 = por %p41, %p42
    %s45 = sadd.s32 %s44, 1
    %p48 = scmp.eq.s32.totalorder %s10, 1
    %p49 = scmp.ne.s32.totalorder %s44, %s46
    %p50 = scmp.eq.s32.totalorder %s10, 0
    %p51 = por %p49, %p50
    %p52 = scmp.ne.s32.totalorder %s44, %s46
    %p53 = scmp.eq.s32.totalorder %s15, 1
    %p54 = por %p52, %p53
    %p55 = scmp.ne.s32.totalorder %s46, %s47
    %p56 = scmp.eq.s32.totalorder %s15, 0
    %p57 = por %p55, %p56
    %p58 = scmp.ne.s32.totalorder %s46, %s47
    %p59 = scmp.eq.s32.totalorder %s16, 1
    %p60 = por %p58, %p59
    %p62 = scmp.ne.s32.totalorder %s47, %s61
    %p63 = scmp.eq.s32.totalorder %s16, 0
    %p64 = por %p62, %p63
    %s65 = ssub.s32 %s10, %s17
    %p66 = scmp.eq.s32.totalorder %s65, 0
    %s68 = sadd.s32 %s67, 1
    %s69 = scalar_select %p66, %s67, %s68
    %p72 = pneg %p66
    %p73 = scmp.eq.s32.totalorder %s10, 1
    %p74 = por %p72, %p73
    %p75 = scmp.ne.s32.totalorder %s67, %s70
    %p76 = scmp.eq.s32.totalorder %s10, 0
    %p77 = por %p75, %p76
    %p78 = scmp.ne.s32.totalorder %s67, %s70
    %p79 = scmp.eq.s32.totalorder %s15, 1
    %p80 = por %p78, %p79
    %p81 = scmp.ne.s32.totalorder %s70, %s71
    %p82 = scmp.eq.s32.totalorder %s15, 0
    %p83 = por %p81, %p82
    %p84 = scmp.ne.s32.totalorder %s70, %s71
    %p85 = scmp.eq.s32.totalorder %s16, 1
    %p86 = por %p84, %p85
    %p88 = scmp.ne.s32.totalorder %s71, %s87
    %p89 = scmp.eq.s32.totalorder %s16, 0
    %p90 = por %p88, %p89
    %s91 = ssub.s32 %s10, %s17
    %p92 = scmp.eq.s32.totalorder %s91, 0
    %s94 = sadd.s32 %s93, 1
    %s95 = scalar_select %p92, %s93, %s94
    %p98 = pneg %p92
    %p99 = scmp.eq.s32.totalorder %s10, 1
    %p100 = por %p98, %p99
    %p101 = scmp.ne.s32.totalorder %s93, %s96
    %p102 = scmp.eq.s32.totalorder %s10, 0
    %p103 = por %p101, %p102
    %p104 = scmp.ne.s32.totalorder %s93, %s96
    %p105 = scmp.eq.s32.totalorder %s15, 1
    %p106 = por %p104, %p105
    %p107 = scmp.ne.s32.totalorder %s96, %s97
    %p108 = scmp.eq.s32.totalorder %s15, 0
    %p109 = por %p107, %p108
    %p110 = scmp.ne.s32.totalorder %s96, %s97
    %p111 = scmp.eq.s32.totalorder %s16, 1
    %p112 = por %p110, %p111
    %p114 = scmp.ne.s32.totalorder %s97, %s113
    %p115 = scmp.eq.s32.totalorder %s16, 0
    %p116 = por %p114, %p115
    %p117 = scmp.le.s32.totalorder 1, %s10
    %p118 = scmp.lt.s32.totalorder %s10, 3
    %p119 = pnand %p117, %p118
    %p120 = pneg %p119
    // Predicated region
    $region9: #{spp_bottleneck.6} parent=5 // pred_check
      _
    $region10: #{spp_bottleneck.6} parent=5 // pred_check_branch
      %122 = sbr.rel (%p119) target = $region12
    $region11: #{spp_bottleneck.6} parent=5 // pred_region
      %s123 = ssub.s32 %s10, 1
      // Predicated region
      $region13: #{spp_bottleneck.6} parent=11 // pred_check
        %p124 = pneg %p57
      $region14: #{spp_bottleneck.6} parent=11 // pred_check_branch
        %126 = sbr.rel (%p124) target = $region16
      $region15: #{spp_bottleneck.6} parent=11 // pred_region
        _
      $region16: #{spp_bottleneck.6} parent=11 // pred_fallthru
        _
    $region12: #{spp_bottleneck.6} parent=5 // pred_fallthru
      _
    %p127 = scmp.lt.s32.totalorder %s10, 2
    // Predicated region
    $region17: #{spp_bottleneck.6} parent=5 // pred_check
      %p128 = pneg %p127
    $region18: #{spp_bottleneck.6} parent=5 // pred_check_branch
      %130 = sbr.rel (%p128) target = $region20
    $region19: #{spp_bottleneck.6} parent=5 // pred_region
      // Predicated region
      $region21: #{spp_bottleneck.6} parent=19 // pred_check
        %p131 = pneg %p30
      $region22: #{spp_bottleneck.6} parent=19 // pred_check_branch
        %133 = sbr.rel (%p131) target = $region24
      $region23: #{spp_bottleneck.6} parent=19 // pred_region
        %s134 = smul.u32 32, %s10
        %p135 = scmp.lt.s32.totalorder %s134, 63
        %s136 = scalar_select %p135, %s134, 63
        %s137 = smul.addr %s136, 4
        %s138 = smul.addr %s137, 4
        %s139 = scalar_lea.vmem %s0, %s138
        %s140 = smul.u32 32, %s10
      $region24: #{spp_bottleneck.6} parent=19 // pred_fallthru
        _
    $region20: #{spp_bottleneck.6} parent=5 // pred_fallthru
      _
    %p141 = scmp.le.s32.totalorder 1, %s10
    %p142 = scmp.lt.s32.totalorder %s10, 3
    %p143 = pnand %p141, %p142
    %p144 = pneg %p143
    // Predicated region
    $region25: #{spp_bottleneck.6} parent=5 // pred_check
      _
    $region26: #{spp_bottleneck.6} parent=5 // pred_check_branch
      %146 = sbr.rel (%p143) target = $region28
    $region27: #{spp_bottleneck.6} parent=5 // pred_region
      %s147 = ssub.s32 %s10, 1
      %s148 = smul.u32 32, %s15
      %p149 = scmp.lt.s32.totalorder %s148, 63
      %s150 = scalar_select %p149, %s148, 63
      %s151 = smul.addr %s150, 4
      %s152 = smul.addr %s151, 4
      %s153 = scalar_lea.vmem %s0, %s152
      %p154 = pneg %p36
      %p155 = pneg %p33
      %p156 = pneg %p57
      %p157 = pneg %p54
      %p158 = pneg %p83
      %p159 = pneg %p80
      %s160 = smul.u32 32, %s15
      %p161 = scmp.lt.s32.totalorder %s160, 63
      %s162 = scalar_select %p161, %s160, 63
      %s163 = smul.addr %s162, 4
      %s164 = scalar_lea.vmem %s2, %s163
      %p165 = pneg %p109
      %p166 = pneg %p106
      %p167 = scmp.lt.s32.totalorder %s15, 1
      %s168 = scalar_select %p167, %s15, 1
      %s169 = smul.addr %s168, 2
      %s170 = scalar_lea.vmem %s3, %s169
      %s171 = smul.u32 32, %s15
      %p172 = scmp.lt.s32.totalorder %s171, 63
      %s173 = scalar_select %p172, %s171, 63
      %s174 = smul.addr %s173, 4
      %s175 = smul.addr %s174, 4
      %s176 = scalar_lea.vmem %s0, %s175
      %s177 = smul.u32 32, %s15
      %s178 = smul.u32 32, %s15
      %p179 = scmp.lt.s32.totalorder %s178, 63
      %s180 = scalar_select %p179, %s178, 63
      %s181 = smul.addr %s180, 4
      %s182 = scalar_lea.vmem %s2, %s181
      %s183 = smul.u32 32, %s15
      %p184 = scmp.lt.s32.totalorder %s15, 1
      %s185 = scalar_select %p184, %s15, 1
      %s186 = smul.addr %s185, 2
      %s187 = scalar_lea.vmem %s3, %s186
      %v188 = vld [vmem:[%s176] sm:$0xff]
      %v189 = vld [vmem:[%s176 + $0x8] sm:$0xff]
      %v190 = vld [vmem:[%s176 + $0x10] sm:$0xff]
      %v191 = vld [vmem:[%s176 + $0x18] sm:$0xff]
      %v192 = vld [vmem:[%s176 + $0x20] sm:$0xff]
      %v193 = vld [vmem:[%s176 + $0x28] sm:$0xff]
      %v194 = vld [vmem:[%s176 + $0x30] sm:$0xff]
      %v195 = vld [vmem:[%s176 + $0x38] sm:$0xff]
      %v196 = vld [vmem:[%s176 + $0x40] sm:$0xff]
      %v197 = vld [vmem:[%s176 + $0x48] sm:$0xff]
      %v198 = vld [vmem:[%s176 + $0x50] sm:$0xff]
      %v199 = vld [vmem:[%s176 + $0x58] sm:$0xff]
      %v200 = vld [vmem:[%s176 + $0x60] sm:$0xff]
      %v201 = vld [vmem:[%s176 + $0x68] sm:$0xff]
      %v202 = vld [vmem:[%s176 + $0x70] sm:$0xff]
      %v203 = vld [vmem:[%s176 + $0x78] sm:$0xff]
      %v204 = vld [vmem:[%s176 + $0x80] sm:$0xff]
      %v205 = vld [vmem:[%s176 + $0x88] sm:$0xff]
      %v206 = vld [vmem:[%s176 + $0x90] sm:$0xff]
      %v207 = vld [vmem:[%s176 + $0x98] sm:$0xff]
      %v208 = vld [vmem:[%s176 + $0xa0] sm:$0xff]
      %v209 = vld [vmem:[%s176 + $0xa8] sm:$0xff]
      %v210 = vld [vmem:[%s176 + $0xb0] sm:$0xff]
      %v211 = vld [vmem:[%s176 + $0xb8] sm:$0xff]
      %v212 = vld [vmem:[%s176 + $0xc0] sm:$0xff]
      %v213 = vld [vmem:[%s176 + $0xc8] sm:$0xff]
      %v214 = vld [vmem:[%s176 + $0xd0] sm:$0xff]
      %v215 = vld [vmem:[%s176 + $0xd8] sm:$0xff]
      %v216 = vld [vmem:[%s176 + $0xe0] sm:$0xff]
      %v217 = vld [vmem:[%s176 + $0xe8] sm:$0xff]
      %v218 = vld [vmem:[%s176 + $0xf0] sm:$0xff]
      %v219 = vld [vmem:[%s176 + $0xf8] sm:$0xff]
      %v220 = vld [vmem:[%s176 + $0x100] sm:$0xff]
      %v221 = vld [vmem:[%s176 + $0x108] sm:$0xff]
      %v222 = vld [vmem:[%s176 + $0x110] sm:$0xff]
      %v223 = vld [vmem:[%s176 + $0x118] sm:$0xff]
      %v224 = vld [vmem:[%s176 + $0x120] sm:$0xff]
      %v225 = vld [vmem:[%s176 + $0x128] sm:$0xff]
      %v226 = vld [vmem:[%s176 + $0x130] sm:$0xff]
      %v227 = vld [vmem:[%s176 + $0x138] sm:$0xff]
      %v228 = vld [vmem:[%s176 + $0x140] sm:$0xff]
      %v229 = vld [vmem:[%s176 + $0x148] sm:$0xff]
      %v230 = vld [vmem:[%s176 + $0x150] sm:$0xff]
      %v231 = vld [vmem:[%s176 + $0x158] sm:$0xff]
      %v232 = vld [vmem:[%s176 + $0x160] sm:$0xff]
      %v233 = vld [vmem:[%s176 + $0x168] sm:$0xff]
      %v234 = vld [vmem:[%s176 + $0x170] sm:$0xff]
      %v235 = vld [vmem:[%s176 + $0x178] sm:$0xff]
      %v236 = vld [vmem:[%s176 + $0x180] sm:$0xff]
      %v237 = vld [vmem:[%s176 + $0x188] sm:$0xff]
      %v238 = vld [vmem:[%s176 + $0x190] sm:$0xff]
      %v239 = vld [vmem:[%s176 + $0x198] sm:$0xff]
      %v240 = vld [vmem:[%s176 + $0x1a0] sm:$0xff]
      %v241 = vld [vmem:[%s176 + $0x1a8] sm:$0xff]
      %v242 = vld [vmem:[%s176 + $0x1b0] sm:$0xff]
      %v243 = vld [vmem:[%s176 + $0x1b8] sm:$0xff]
      %v244 = vld [vmem:[%s176 + $0x1c0] sm:$0xff]
      %v245 = vld [vmem:[%s176 + $0x1c8] sm:$0xff]
      %v246 = vld [vmem:[%s176 + $0x1d0] sm:$0xff]
      %v247 = vld [vmem:[%s176 + $0x1d8] sm:$0xff]
      %v248 = vld [vmem:[%s176 + $0x1e0] sm:$0xff]
      %v249 = vld [vmem:[%s176 + $0x1e8] sm:$0xff]
      %v250 = vld [vmem:[%s176 + $0x1f0] sm:$0xff]
      %v251 = vld [vmem:[%s176 + $0x1f8] sm:$0xff]
      %v252 = vld [vmem:[%s1] sm:$0xf]
      %v253 = vld [vmem:[%s1 + $0x4] sm:$0xf]
      %v254 = vld [vmem:[%s1 + $0x8] sm:$0xf]
      %v255 = vld [vmem:[%s1 + $0xc] sm:$0xf]
      %v256 = vld [vmem:[%s1 + $0x10] sm:$0xf]
      %v257 = vld [vmem:[%s1 + $0x14] sm:$0xf]
      %v258 = vld [vmem:[%s1 + $0x18] sm:$0xf]
      %v259 = vld [vmem:[%s1 + $0x1c] sm:$0xf]
      %v260 = vld [vmem:[%s1 + $0x20] sm:$0xf]
      %v261 = vld [vmem:[%s1 + $0x24] sm:$0xf]
      %v262 = vld [vmem:[%s1 + $0x28] sm:$0xf]
      %v263 = vld [vmem:[%s1 + $0x2c] sm:$0xf]
      %v264 = vld [vmem:[%s1 + $0x30] sm:$0xf]
      %v265 = vld [vmem:[%s1 + $0x34] sm:$0xf]
      %v266 = vld [vmem:[%s1 + $0x38] sm:$0xf]
      %v267 = vld [vmem:[%s1 + $0x3c] sm:$0xf]
      %v268 = vld [vmem:[%s1 + $0x40] sm:$0xf]
      %v269 = vld [vmem:[%s1 + $0x44] sm:$0xf]
      %v270 = vld [vmem:[%s1 + $0x48] sm:$0xf]
      %v271 = vld [vmem:[%s1 + $0x4c] sm:$0xf]
      %v272 = vld [vmem:[%s1 + $0x50] sm:$0xf]
      %v273 = vld [vmem:[%s1 + $0x54] sm:$0xf]
      %v274 = vld [vmem:[%s1 + $0x58] sm:$0xf]
      %v275 = vld [vmem:[%s1 + $0x5c] sm:$0xf]
      %v276 = vld [vmem:[%s1 + $0x60] sm:$0xf]
      %v277 = vld [vmem:[%s1 + $0x64] sm:$0xf]
      %v278 = vld [vmem:[%s1 + $0x68] sm:$0xf]
      %v279 = vld [vmem:[%s1 + $0x6c] sm:$0xf]
      %v280 = vld [vmem:[%s1 + $0x70] sm:$0xf]
      %v281 = vld [vmem:[%s1 + $0x74] sm:$0xf]
      %v282 = vld [vmem:[%s1 + $0x78] sm:$0xf]
      %v283 = vld [vmem:[%s1 + $0x7c] sm:$0xf]
      %v284 = vld [vmem:[%s1 + $0x80] sm:$0xf]
      %v285 = vld [vmem:[%s1 + $0x84] sm:$0xf]
      %v286 = vld [vmem:[%s1 + $0x88] sm:$0xf]
      %v287 = vld [vmem:[%s1 + $0x8c] sm:$0xf]
      %v288 = vld [vmem:[%s1 + $0x90] sm:$0xf]
      %v289 = vld [vmem:[%s1 + $0x94] sm:$0xf]
      %v290 = vld [vmem:[%s1 + $0x98] sm:$0xf]
      %v291 = vld [vmem:[%s1 + $0x9c] sm:$0xf]
      %v292 = vld [vmem:[%s1 + $0xa0] sm:$0xf]
      %v293 = vld [vmem:[%s1 + $0xa4] sm:$0xf]
      %v294 = vld [vmem:[%s1 + $0xa8] sm:$0xf]
      %v295 = vld [vmem:[%s1 + $0xac] sm:$0xf]
      %v296 = vld [vmem:[%s1 + $0xb0] sm:$0xf]
      %v297 = vld [vmem:[%s1 + $0xb4] sm:$0xf]
      %v298 = vld [vmem:[%s1 + $0xb8] sm:$0xf]
      %v299 = vld [vmem:[%s1 + $0xbc] sm:$0xf]
      %v300 = vld [vmem:[%s1 + $0xc0] sm:$0xf]
      %v301 = vld [vmem:[%s1 + $0xc4] sm:$0xf]
      %v302 = vld [vmem:[%s1 + $0xc8] sm:$0xf]
      %v303 = vld [vmem:[%s1 + $0xcc] sm:$0xf]
      %v304 = vld [vmem:[%s1 + $0xd0] sm:$0xf]
      %v305 = vld [vmem:[%s1 + $0xd4] sm:$0xf]
      %v306 = vld [vmem:[%s1 + $0xd8] sm:$0xf]
      %v307 = vld [vmem:[%s1 + $0xdc] sm:$0xf]
      %v308 = vld [vmem:[%s1 + $0xe0] sm:$0xf]
      %v309 = vld [vmem:[%s1 + $0xe4] sm:$0xf]
      %v310 = vld [vmem:[%s1 + $0xe8] sm:$0xf]
      %v311 = vld [vmem:[%s1 + $0xec] sm:$0xf]
      %v312 = vld [vmem:[%s1 + $0xf0] sm:$0xf]
      %v313 = vld [vmem:[%s1 + $0xf4] sm:$0xf]
      %v314 = vld [vmem:[%s1 + $0xf8] sm:$0xf]
      %v315 = vld [vmem:[%s1 + $0xfc] sm:$0xf]
      %v380 = vunpack.c.l.b16 %v188
      %v381 = vunpack.c.h.b16 %v188
      %v382 = vunpack.c.l.b16 %v189
      %v383 = vunpack.c.h.b16 %v189
      %v384 = vunpack.c.l.b16 %v190
      %v385 = vunpack.c.h.b16 %v190
      %v386 = vunpack.c.l.b16 %v191
      %v387 = vunpack.c.h.b16 %v191
      %v388 = vunpack.c.l.b16 %v192
      %v389 = vunpack.c.h.b16 %v192
      %v390 = vunpack.c.l.b16 %v193
      %v391 = vunpack.c.h.b16 %v193
      %v392 = vunpack.c.l.b16 %v194
      %v393 = vunpack.c.h.b16 %v194
      %v394 = vunpack.c.l.b16 %v195
      %v395 = vunpack.c.h.b16 %v195
      %v396 = vunpack.c.l.b16 %v196
      %v397 = vunpack.c.h.b16 %v196
      %v398 = vunpack.c.l.b16 %v197
      %v399 = vunpack.c.h.b16 %v197
      %v400 = vunpack.c.l.b16 %v198
      %v401 = vunpack.c.h.b16 %v198
      %v402 = vunpack.c.l.b16 %v199
      %v403 = vunpack.c.h.b16 %v199
      %v404 = vunpack.c.l.b16 %v200
      %v405 = vunpack.c.h.b16 %v200
      %v406 = vunpack.c.l.b16 %v201
      %v407 = vunpack.c.h.b16 %v201
      %v408 = vunpack.c.l.b16 %v202
      %v409 = vunpack.c.h.b16 %v202
      %v410 = vunpack.c.l.b16 %v203
      %v411 = vunpack.c.h.b16 %v203
      %v412 = vunpack.c.l.b16 %v204
      %v413 = vunpack.c.h.b16 %v204
      %v414 = vunpack.c.l.b16 %v205
      %v415 = vunpack.c.h.b16 %v205
      %v416 = vunpack.c.l.b16 %v206
      %v417 = vunpack.c.h.b16 %v206
      %v418 = vunpack.c.l.b16 %v207
      %v419 = vunpack.c.h.b16 %v207
      %v420 = vunpack.c.l.b16 %v208
      %v421 = vunpack.c.h.b16 %v208
      %v422 = vunpack.c.l.b16 %v209
      %v423 = vunpack.c.h.b16 %v209
      %v424 = vunpack.c.l.b16 %v210
      %v425 = vunpack.c.h.b16 %v210
      %v426 = vunpack.c.l.b16 %v211
      %v427 = vunpack.c.h.b16 %v211
      %v428 = vunpack.c.l.b16 %v212
      %v429 = vunpack.c.h.b16 %v212
      %v430 = vunpack.c.l.b16 %v213
      %v431 = vunpack.c.h.b16 %v213
      %v432 = vunpack.c.l.b16 %v214
      %v433 = vunpack.c.h.b16 %v214
      %v434 = vunpack.c.l.b16 %v215
      %v435 = vunpack.c.h.b16 %v215
      %v436 = vunpack.c.l.b16 %v216
      %v437 = vunpack.c.h.b16 %v216
      %v438 = vunpack.c.l.b16 %v217
      %v439 = vunpack.c.h.b16 %v217
      %v440 = vunpack.c.l.b16 %v218
      %v441 = vunpack.c.h.b16 %v218
      %v442 = vunpack.c.l.b16 %v219
      %v443 = vunpack.c.h.b16 %v219
      %v444 = vunpack.c.l.b16 %v220
      %v445 = vunpack.c.h.b16 %v220
      %v446 = vunpack.c.l.b16 %v221
      %v447 = vunpack.c.h.b16 %v221
      %v448 = vunpack.c.l.b16 %v222
      %v449 = vunpack.c.h.b16 %v222
      %v450 = vunpack.c.l.b16 %v223
      %v451 = vunpack.c.h.b16 %v223
      %v452 = vunpack.c.l.b16 %v224
      %v453 = vunpack.c.h.b16 %v224
      %v454 = vunpack.c.l.b16 %v225
      %v455 = vunpack.c.h.b16 %v225
      %v456 = vunpack.c.l.b16 %v226
      %v457 = vunpack.c.h.b16 %v226
      %v458 = vunpack.c.l.b16 %v227
      %v459 = vunpack.c.h.b16 %v227
      %v460 = vunpack.c.l.b16 %v228
      %v461 = vunpack.c.h.b16 %v228
      %v462 = vunpack.c.l.b16 %v229
      %v463 = vunpack.c.h.b16 %v229
      %v464 = vunpack.c.l.b16 %v230
      %v465 = vunpack.c.h.b16 %v230
      %v466 = vunpack.c.l.b16 %v231
      %v467 = vunpack.c.h.b16 %v231
      %v468 = vunpack.c.l.b16 %v232
      %v469 = vunpack.c.h.b16 %v232
      %v470 = vunpack.c.l.b16 %v233
      %v471 = vunpack.c.h.b16 %v233
      %v472 = vunpack.c.l.b16 %v234
      %v473 = vunpack.c.h.b16 %v234
      %v474 = vunpack.c.l.b16 %v235
      %v475 = vunpack.c.h.b16 %v235
      %v476 = vunpack.c.l.b16 %v236
      %v477 = vunpack.c.h.b16 %v236
      %v478 = vunpack.c.l.b16 %v237
      %v479 = vunpack.c.h.b16 %v237
      %v480 = vunpack.c.l.b16 %v238
      %v481 = vunpack.c.h.b16 %v238
      %v482 = vunpack.c.l.b16 %v239
      %v483 = vunpack.c.h.b16 %v239
      %v484 = vunpack.c.l.b16 %v240
      %v485 = vunpack.c.h.b16 %v240
      %v486 = vunpack.c.l.b16 %v241
      %v487 = vunpack.c.h.b16 %v241
      %v488 = vunpack.c.l.b16 %v242
      %v489 = vunpack.c.h.b16 %v242
      %v490 = vunpack.c.l.b16 %v243
      %v491 = vunpack.c.h.b16 %v243
      %v492 = vunpack.c.l.b16 %v244
      %v493 = vunpack.c.h.b16 %v244
      %v494 = vunpack.c.l.b16 %v245
      %v495 = vunpack.c.h.b16 %v245
      %v496 = vunpack.c.l.b16 %v246
      %v497 = vunpack.c.h.b16 %v246
      %v498 = vunpack.c.l.b16 %v247
      %v499 = vunpack.c.h.b16 %v247
      %v500 = vunpack.c.l.b16 %v248
      %v501 = vunpack.c.h.b16 %v248
      %v502 = vunpack.c.l.b16 %v249
      %v503 = vunpack.c.h.b16 %v249
      %v504 = vunpack.c.l.b16 %v250
      %v505 = vunpack.c.h.b16 %v250
      %v506 = vunpack.c.l.b16 %v251
      %v507 = vunpack.c.h.b16 %v251
      %v508 = vpack.c.b16 %v384, %v380
      %v509 = vpack.c.b16 %v385, %v381
      %v510 = vpack.c.b16 %v386, %v382
      %v511 = vpack.c.b16 %v387, %v383
      %v512 = vpack.c.b16 %v392, %v388
      %v513 = vpack.c.b16 %v393, %v389
      %v514 = vpack.c.b16 %v394, %v390
      %v515 = vpack.c.b16 %v395, %v391
      %v516 = vpack.c.b16 %v400, %v396
      %v517 = vpack.c.b16 %v401, %v397
      %v518 = vpack.c.b16 %v402, %v398
      %v519 = vpack.c.b16 %v403, %v399
      %v520 = vpack.c.b16 %v408, %v404
      %v521 = vpack.c.b16 %v409, %v405
      %v522 = vpack.c.b16 %v410, %v406
      %v523 = vpack.c.b16 %v411, %v407
      %v524 = vpack.c.b16 %v416, %v412
      %v525 = vpack.c.b16 %v417, %v413
      %v526 = vpack.c.b16 %v418, %v414
      %v527 = vpack.c.b16 %v419, %v415
      %v528 = vpack.c.b16 %v424, %v420
      %v529 = vpack.c.b16 %v425, %v421
      %v530 = vpack.c.b16 %v426, %v422
      %v531 = vpack.c.b16 %v427, %v423
      %v532 = vpack.c.b16 %v432, %v428
      %v533 = vpack.c.b16 %v433, %v429
      %v534 = vpack.c.b16 %v434, %v430
      %v535 = vpack.c.b16 %v435, %v431
      %v536 = vpack.c.b16 %v440, %v436
      %v537 = vpack.c.b16 %v441, %v437
      %v538 = vpack.c.b16 %v442, %v438
      %v539 = vpack.c.b16 %v443, %v439
      %v540 = vpack.c.b16 %v448, %v444
      %v541 = vpack.c.b16 %v449, %v445
      %v542 = vpack.c.b16 %v450, %v446
      %v543 = vpack.c.b16 %v451, %v447
      %v544 = vpack.c.b16 %v456, %v452
      %v545 = vpack.c.b16 %v457, %v453
      %v546 = vpack.c.b16 %v458, %v454
      %v547 = vpack.c.b16 %v459, %v455
      %v548 = vpack.c.b16 %v464, %v460
      %v549 = vpack.c.b16 %v465, %v461
      %v550 = vpack.c.b16 %v466, %v462
      %v551 = vpack.c.b16 %v467, %v463
      %v552 = vpack.c.b16 %v472, %v468
      %v553 = vpack.c.b16 %v473, %v469
      %v554 = vpack.c.b16 %v474, %v470
      %v555 = vpack.c.b16 %v475, %v471
      %v556 = vpack.c.b16 %v480, %v476
      %v557 = vpack.c.b16 %v481, %v477
      %v558 = vpack.c.b16 %v482, %v478
      %v559 = vpack.c.b16 %v483, %v479
      %v560 = vpack.c.b16 %v488, %v484
      %v561 = vpack.c.b16 %v489, %v485
      %v562 = vpack.c.b16 %v490, %v486
      %v563 = vpack.c.b16 %v491, %v487
      %v564 = vpack.c.b16 %v496, %v492
      %v565 = vpack.c.b16 %v497, %v493
      %v566 = vpack.c.b16 %v498, %v494
      %v567 = vpack.c.b16 %v499, %v495
      %v568 = vpack.c.b16 %v504, %v500
      %v569 = vpack.c.b16 %v505, %v501
      %v570 = vpack.c.b16 %v506, %v502
      %v571 = vpack.c.b16 %v507, %v503
      %v700 = vunpack.c.l.b16 %v252
      %v701 = vunpack.c.l.b16 %v253
      %v702 = vunpack.c.l.b16 %v254
      %v703 = vunpack.c.l.b16 %v255
      %v704 = vunpack.c.l.b16 %v256
      %v705 = vunpack.c.l.b16 %v257
      %v706 = vunpack.c.l.b16 %v258
      %v707 = vunpack.c.l.b16 %v259
      %v708 = vunpack.c.l.b16 %v260
      %v709 = vunpack.c.l.b16 %v261
      %v710 = vunpack.c.l.b16 %v262
      %v711 = vunpack.c.l.b16 %v263
      %v712 = vunpack.c.l.b16 %v264
      %v713 = vunpack.c.l.b16 %v265
      %v714 = vunpack.c.l.b16 %v266
      %v715 = vunpack.c.l.b16 %v267
      %v716 = vunpack.c.l.b16 %v268
      %v717 = vunpack.c.l.b16 %v269
      %v718 = vunpack.c.l.b16 %v270
      %v719 = vunpack.c.l.b16 %v271
      %v720 = vunpack.c.l.b16 %v272
      %v721 = vunpack.c.l.b16 %v273
      %v722 = vunpack.c.l.b16 %v274
      %v723 = vunpack.c.l.b16 %v275
      %v724 = vunpack.c.l.b16 %v276
      %v725 = vunpack.c.l.b16 %v277
      %v726 = vunpack.c.l.b16 %v278
      %v727 = vunpack.c.l.b16 %v279
      %v728 = vunpack.c.l.b16 %v280
      %v729 = vunpack.c.l.b16 %v281
      %v730 = vunpack.c.l.b16 %v282
      %v731 = vunpack.c.l.b16 %v283
      %v732 = vunpack.c.l.b16 %v284
      %v733 = vunpack.c.l.b16 %v285
      %v734 = vunpack.c.l.b16 %v286
      %v735 = vunpack.c.l.b16 %v287
      %v736 = vunpack.c.l.b16 %v288
      %v737 = vunpack.c.l.b16 %v289
      %v738 = vunpack.c.l.b16 %v290
      %v739 = vunpack.c.l.b16 %v291
      %v740 = vunpack.c.l.b16 %v292
      %v741 = vunpack.c.l.b16 %v293
      %v742 = vunpack.c.l.b16 %v294
      %v743 = vunpack.c.l.b16 %v295
      %v744 = vunpack.c.l.b16 %v296
      %v745 = vunpack.c.l.b16 %v297
      %v746 = vunpack.c.l.b16 %v298
      %v747 = vunpack.c.l.b16 %v299
      %v748 = vunpack.c.l.b16 %v300
      %v749 = vunpack.c.l.b16 %v301
      %v750 = vunpack.c.l.b16 %v302
      %v751 = vunpack.c.l.b16 %v303
      %v752 = vunpack.c.l.b16 %v304
      %v753 = vunpack.c.l.b16 %v305
      %v754 = vunpack.c.l.b16 %v306
      %v755 = vunpack.c.l.b16 %v307
      %v756 = vunpack.c.l.b16 %v308
      %v757 = vunpack.c.l.b16 %v309
      %v758 = vunpack.c.l.b16 %v310
      %v759 = vunpack.c.l.b16 %v311
      %v760 = vunpack.c.l.b16 %v312
      %v761 = vunpack.c.l.b16 %v313
      %v762 = vunpack.c.l.b16 %v314
      %v763 = vunpack.c.l.b16 %v315
      %v764 = vpack.c.b16 %v701, %v700
      %v765 = vpack.c.b16 %v703, %v702
      %v766 = vpack.c.b16 %v705, %v704
      %v767 = vpack.c.b16 %v707, %v706
      %v768 = vpack.c.b16 %v709, %v708
      %v769 = vpack.c.b16 %v711, %v710
      %v770 = vpack.c.b16 %v713, %v712
      %v771 = vpack.c.b16 %v715, %v714
      %v772 = vpack.c.b16 %v717, %v716
      %v773 = vpack.c.b16 %v719, %v718
      %v774 = vpack.c.b16 %v721, %v720
      %v775 = vpack.c.b16 %v723, %v722
      %v776 = vpack.c.b16 %v725, %v724
      %v777 = vpack.c.b16 %v727, %v726
      %v778 = vpack.c.b16 %v729, %v728
      %v779 = vpack.c.b16 %v731, %v730
      %v780 = vpack.c.b16 %v733, %v732
      %v781 = vpack.c.b16 %v735, %v734
      %v782 = vpack.c.b16 %v737, %v736
      %v783 = vpack.c.b16 %v739, %v738
      %v784 = vpack.c.b16 %v741, %v740
      %v785 = vpack.c.b16 %v743, %v742
      %v786 = vpack.c.b16 %v745, %v744
      %v787 = vpack.c.b16 %v747, %v746
      %v788 = vpack.c.b16 %v749, %v748
      %v789 = vpack.c.b16 %v751, %v750
      %v790 = vpack.c.b16 %v753, %v752
      %v791 = vpack.c.b16 %v755, %v754
      %v792 = vpack.c.b16 %v757, %v756
      %v793 = vpack.c.b16 %v759, %v758
      %v794 = vpack.c.b16 %v761, %v760
      %v795 = vpack.c.b16 %v763, %v762
      %828 = vmatpush.bf16.msra.mxu0 %v771
      %829 = vmatpush.bf16.msra.mxu0 %v770
      %830 = vmatpush.bf16.msra.mxu0 %v769
      %831 = vmatpush.bf16.msra.mxu0 %v768
      %832 = vmatpush.bf16.msra.mxu0 %v767
      %833 = vmatpush.bf16.msra.mxu0 %v766
      %834 = vmatpush.bf16.msra.mxu0 %v765
      %835 = vmatpush.bf16.msra.mxu0 %v764
      %836 = vmatmul.bf16.gmra.mxu0 %v508
      %v837 = vpop.f32.mrf.mxu0
      %v838 = vadd.f32 0.0, %v837
      %v839 = vpop.f32.mrf.mxu0
      %v840 = vadd.f32 0.0, %v839
      %841 = vmatmul.bf16.gmra.mxu0 %v512
      %v842 = vpop.f32.mrf.mxu0
      %v843 = vadd.f32 0.0, %v842
      %v844 = vpop.f32.mrf.mxu0
      %v845 = vadd.f32 0.0, %v844
      %846 = vmatmul.bf16.gmra.mxu0 %v516
      %v847 = vpop.f32.mrf.mxu0
      %v848 = vadd.f32 0.0, %v847
      %v849 = vpop.f32.mrf.mxu0
      %v850 = vadd.f32 0.0, %v849
      %851 = vmatmul.bf16.gmra.mxu0 %v520
      %v852 = vpop.f32.mrf.mxu0
      %v853 = vadd.f32 0.0, %v852
      %v854 = vpop.f32.mrf.mxu0
      %v855 = vadd.f32 0.0, %v854
      %856 = vmatmul.bf16.gmra.mxu0 %v524
      %v857 = vpop.f32.mrf.mxu0
      %v858 = vadd.f32 0.0, %v857
      %v859 = vpop.f32.mrf.mxu0
      %v860 = vadd.f32 0.0, %v859
      %861 = vmatmul.bf16.gmra.mxu0 %v528
      %v862 = vpop.f32.mrf.mxu0
      %v863 = vadd.f32 0.0, %v862
      %v864 = vpop.f32.mrf.mxu0
      %v865 = vadd.f32 0.0, %v864
      %866 = vmatmul.bf16.gmra.mxu0 %v532
      %v867 = vpop.f32.mrf.mxu0
      %v868 = vadd.f32 0.0, %v867
      %v869 = vpop.f32.mrf.mxu0
      %v870 = vadd.f32 0.0, %v869
      %871 = vmatmul.bf16.gmra.mxu0 %v536
      %v872 = vpop.f32.mrf.mxu0
      %v873 = vadd.f32 0.0, %v872
      %v874 = vpop.f32.mrf.mxu0
      %v875 = vadd.f32 0.0, %v874
      %876 = vmatmul.bf16.gmra.mxu0 %v540
      %v877 = vpop.f32.mrf.mxu0
      %v878 = vadd.f32 0.0, %v877
      %v879 = vpop.f32.mrf.mxu0
      %v880 = vadd.f32 0.0, %v879
      %881 = vmatmul.bf16.gmra.mxu0 %v544
      %v882 = vpop.f32.mrf.mxu0
      %v883 = vadd.f32 0.0, %v882
      %v884 = vpop.f32.mrf.mxu0
      %v885 = vadd.f32 0.0, %v884
      %886 = vmatmul.bf16.gmra.mxu0 %v548
      %v887 = vpop.f32.mrf.mxu0
      %v888 = vadd.f32 0.0, %v887
      %v889 = vpop.f32.mrf.mxu0
      %v890 = vadd.f32 0.0, %v889
      %891 = vmatmul.bf16.gmra.mxu0 %v552
      %v892 = vpop.f32.mrf.mxu0
      %v893 = vadd.f32 0.0, %v892
      %v894 = vpop.f32.mrf.mxu0
      %v895 = vadd.f32 0.0, %v894
      %896 = vmatmul.bf16.gmra.mxu0 %v556
      %v897 = vpop.f32.mrf.mxu0
      %v898 = vadd.f32 0.0, %v897
      %v899 = vpop.f32.mrf.mxu0
      %v900 = vadd.f32 0.0, %v899
      %901 = vmatmul.bf16.gmra.mxu0 %v560
      %v902 = vpop.f32.mrf.mxu0
      %v903 = vadd.f32 0.0, %v902
      %v904 = vpop.f32.mrf.mxu0
      %v905 = vadd.f32 0.0, %v904
      %906 = vmatmul.bf16.gmra.mxu0 %v564
      %v907 = vpop.f32.mrf.mxu0
      %v908 = vadd.f32 0.0, %v907
      %v909 = vpop.f32.mrf.mxu0
      %v910 = vadd.f32 0.0, %v909
      %911 = vmatmul.bf16.gmra.mxu0 %v568
      %v912 = vpop.f32.mrf.mxu0
      %v913 = vadd.f32 0.0, %v912
      %v914 = vpop.f32.mrf.mxu0
      %v915 = vadd.f32 0.0, %v914
      %916 = vdwg.mxu0
      %917 = vmatpush.bf16.msra.mxu0 %v779
      %918 = vmatpush.bf16.msra.mxu0 %v778
      %919 = vmatpush.bf16.msra.mxu0 %v777
      %920 = vmatpush.bf16.msra.mxu0 %v776
      %921 = vmatpush.bf16.msra.mxu0 %v775
      %922 = vmatpush.bf16.msra.mxu0 %v774
      %923 = vmatpush.bf16.msra.mxu0 %v773
      %924 = vmatpush.bf16.msra.mxu0 %v772
      %925 = vmatmul.bf16.gmra.mxu0 %v509
      %v926 = vpop.f32.mrf.mxu0
      %v927 = vadd.f32 %v838, %v926
      %v928 = vpop.f32.mrf.mxu0
      %v929 = vadd.f32 %v840, %v928
      %930 = vmatmul.bf16.gmra.mxu0 %v513
      %v931 = vpop.f32.mrf.mxu0
      %v932 = vadd.f32 %v843, %v931
      %v933 = vpop.f32.mrf.mxu0
      %v934 = vadd.f32 %v845, %v933
      %935 = vmatmul.bf16.gmra.mxu0 %v517
      %v936 = vpop.f32.mrf.mxu0
      %v937 = vadd.f32 %v848, %v936
      %v938 = vpop.f32.mrf.mxu0
      %v939 = vadd.f32 %v850, %v938
      %940 = vmatmul.bf16.gmra.mxu0 %v521
      %v941 = vpop.f32.mrf.mxu0
      %v942 = vadd.f32 %v853, %v941
      %v943 = vpop.f32.mrf.mxu0
      %v944 = vadd.f32 %v855, %v943
      %945 = vmatmul.bf16.gmra.mxu0 %v525
      %v946 = vpop.f32.mrf.mxu0
      %v947 = vadd.f32 %v858, %v946
      %v948 = vpop.f32.mrf.mxu0
      %v949 = vadd.f32 %v860, %v948
      %950 = vmatmul.bf16.gmra.mxu0 %v529
      %v951 = vpop.f32.mrf.mxu0
      %v952 = vadd.f32 %v863, %v951
      %v953 = vpop.f32.mrf.mxu0
      %v954 = vadd.f32 %v865, %v953
      %955 = vmatmul.bf16.gmra.mxu0 %v533
      %v956 = vpop.f32.mrf.mxu0
      %v957 = vadd.f32 %v868, %v956
      %v958 = vpop.f32.mrf.mxu0
      %v959 = vadd.f32 %v870, %v958
      %960 = vmatmul.bf16.gmra.mxu0 %v537
      %v961 = vpop.f32.mrf.mxu0
      %v962 = vadd.f32 %v873, %v961
      %v963 = vpop.f32.mrf.mxu0
      %v964 = vadd.f32 %v875, %v963
      %965 = vmatmul.bf16.gmra.mxu0 %v541
      %v966 = vpop.f32.mrf.mxu0
      %v967 = vadd.f32 %v878, %v966
      %v968 = vpop.f32.mrf.mxu0
      %v969 = vadd.f32 %v880, %v968
      %970 = vmatmul.bf16.gmra.mxu0 %v545
      %v971 = vpop.f32.mrf.mxu0
      %v972 = vadd.f32 %v883, %v971
      %v973 = vpop.f32.mrf.mxu0
      %v974 = vadd.f32 %v885, %v973
      %975 = vmatmul.bf16.gmra.mxu0 %v549
      %v976 = vpop.f32.mrf.mxu0
      %v977 = vadd.f32 %v888, %v976
      %v978 = vpop.f32.mrf.mxu0
      %v979 = vadd.f32 %v890, %v978
      %980 = vmatmul.bf16.gmra.mxu0 %v553
      %v981 = vpop.f32.mrf.mxu0
      %v982 = vadd.f32 %v893, %v981
      %v983 = vpop.f32.mrf.mxu0
      %v984 = vadd.f32 %v895, %v983
      %985 = vmatmul.bf16.gmra.mxu0 %v557
      %v986 = vpop.f32.mrf.mxu0
      %v987 = vadd.f32 %v898, %v986
      %v988 = vpop.f32.mrf.mxu0
      %v989 = vadd.f32 %v900, %v988
      %990 = vmatmul.bf16.gmra.mxu0 %v561
      %v991 = vpop.f32.mrf.mxu0
      %v992 = vadd.f32 %v903, %v991
      %v993 = vpop.f32.mrf.mxu0
      %v994 = vadd.f32 %v905, %v993
      %995 = vmatmul.bf16.gmra.mxu0 %v565
      %v996 = vpop.f32.mrf.mxu0
      %v997 = vadd.f32 %v908, %v996
      %v998 = vpop.f32.mrf.mxu0
      %v999 = vadd.f32 %v910, %v998
      %1000 = vmatmul.bf16.gmra.mxu0 %v569
      %v1001 = vpop.f32.mrf.mxu0
      %v1002 = vadd.f32 %v913, %v1001
      %v1003 = vpop.f32.mrf.mxu0
      %v1004 = vadd.f32 %v915, %v1003
      %1005 = vdwg.mxu0
      %1006 = vmatpush.bf16.msra.mxu0 %v787
      %1007 = vmatpush.bf16.msra.mxu0 %v786
      %1008 = vmatpush.bf16.msra.mxu0 %v785
      %1009 = vmatpush.bf16.msra.mxu0 %v784
      %1010 = vmatpush.bf16.msra.mxu0 %v783
      %1011 = vmatpush.bf16.msra.mxu0 %v782
      %1012 = vmatpush.bf16.msra.mxu0 %v781
      %1013 = vmatpush.bf16.msra.mxu0 %v780
      %1014 = vmatmul.bf16.gmra.mxu0 %v510
      %v1015 = vpop.f32.mrf.mxu0
      %v1016 = vadd.f32 %v927, %v1015
      %v1017 = vpop.f32.mrf.mxu0
      %v1018 = vadd.f32 %v929, %v1017
      %1019 = vmatmul.bf16.gmra.mxu0 %v514
      %v1020 = vpop.f32.mrf.mxu0
      %v1021 = vadd.f32 %v932, %v1020
      %v1022 = vpop.f32.mrf.mxu0
      %v1023 = vadd.f32 %v934, %v1022
      %1024 = vmatmul.bf16.gmra.mxu0 %v518
      %v1025 = vpop.f32.mrf.mxu0
      %v1026 = vadd.f32 %v937, %v1025
      %v1027 = vpop.f32.mrf.mxu0
      %v1028 = vadd.f32 %v939, %v1027
      %1029 = vmatmul.bf16.gmra.mxu0 %v522
      %v1030 = vpop.f32.mrf.mxu0
      %v1031 = vadd.f32 %v942, %v1030
      %v1032 = vpop.f32.mrf.mxu0
      %v1033 = vadd.f32 %v944, %v1032
      %1034 = vmatmul.bf16.gmra.mxu0 %v526
      %v1035 = vpop.f32.mrf.mxu0
      %v1036 = vadd.f32 %v947, %v1035
      %v1037 = vpop.f32.mrf.mxu0
      %v1038 = vadd.f32 %v949, %v1037
      %1039 = vmatmul.bf16.gmra.mxu0 %v530
      %v1040 = vpop.f32.mrf.mxu0
      %v1041 = vadd.f32 %v952, %v1040
      %v1042 = vpop.f32.mrf.mxu0
      %v1043 = vadd.f32 %v954, %v1042
      %1044 = vmatmul.bf16.gmra.mxu0 %v534
      %v1045 = vpop.f32.mrf.mxu0
      %v1046 = vadd.f32 %v957, %v1045
      %v1047 = vpop.f32.mrf.mxu0
      %v1048 = vadd.f32 %v959, %v1047
      %1049 = vmatmul.bf16.gmra.mxu0 %v538
      %v1050 = vpop.f32.mrf.mxu0
      %v1051 = vadd.f32 %v962, %v1050
      %v1052 = vpop.f32.mrf.mxu0
      %v1053 = vadd.f32 %v964, %v1052
      %1054 = vmatmul.bf16.gmra.mxu0 %v542
      %v1055 = vpop.f32.mrf.mxu0
      %v1056 = vadd.f32 %v967, %v1055
      %v1057 = vpop.f32.mrf.mxu0
      %v1058 = vadd.f32 %v969, %v1057
      %1059 = vmatmul.bf16.gmra.mxu0 %v546
      %v1060 = vpop.f32.mrf.mxu0
      %v1061 = vadd.f32 %v972, %v1060
      %v1062 = vpop.f32.mrf.mxu0
      %v1063 = vadd.f32 %v974, %v1062
      %1064 = vmatmul.bf16.gmra.mxu0 %v550
      %v1065 = vpop.f32.mrf.mxu0
      %v1066 = vadd.f32 %v977, %v1065
      %v1067 = vpop.f32.mrf.mxu0
      %v1068 = vadd.f32 %v979, %v1067
      %1069 = vmatmul.bf16.gmra.mxu0 %v554
      %v1070 = vpop.f32.mrf.mxu0
      %v1071 = vadd.f32 %v982, %v1070
      %v1072 = vpop.f32.mrf.mxu0
      %v1073 = vadd.f32 %v984, %v1072
      %1074 = vmatmul.bf16.gmra.mxu0 %v558
      %v1075 = vpop.f32.mrf.mxu0
      %v1076 = vadd.f32 %v987, %v1075
      %v1077 = vpop.f32.mrf.mxu0
      %v1078 = vadd.f32 %v989, %v1077
      %1079 = vmatmul.bf16.gmra.mxu0 %v562
      %v1080 = vpop.f32.mrf.mxu0
      %v1081 = vadd.f32 %v992, %v1080
      %v1082 = vpop.f32.mrf.mxu0
      %v1083 = vadd.f32 %v994, %v1082
      %1084 = vmatmul.bf16.gmra.mxu0 %v566
      %v1085 = vpop.f32.mrf.mxu0
      %v1086 = vadd.f32 %v997, %v1085
      %v1087 = vpop.f32.mrf.mxu0
      %v1088 = vadd.f32 %v999, %v1087
      %1089 = vmatmul.bf16.gmra.mxu0 %v570
      %v1090 = vpop.f32.mrf.mxu0
      %v1091 = vadd.f32 %v1002, %v1090
      %v1092 = vpop.f32.mrf.mxu0
      %v1093 = vadd.f32 %v1004, %v1092
      %1094 = vdwg.mxu0
      %1095 = vmatpush.bf16.msra.mxu0 %v795
      %1096 = vmatpush.bf16.msra.mxu0 %v794
      %1097 = vmatpush.bf16.msra.mxu0 %v793
      %1098 = vmatpush.bf16.msra.mxu0 %v792
      %1099 = vmatpush.bf16.msra.mxu0 %v791
      %1100 = vmatpush.bf16.msra.mxu0 %v790
      %1101 = vmatpush.bf16.msra.mxu0 %v789
      %1102 = vmatpush.bf16.msra.mxu0 %v788
      %1103 = vmatmul.bf16.gmra.mxu0 %v511
      %v1104 = vpop.f32.mrf.mxu0
      %v1105 = vadd.f32 %v1016, %v1104
      %v1106 = vpop.f32.mrf.mxu0
      %v1107 = vadd.f32 %v1018, %v1106
      %1108 = vmatmul.bf16.gmra.mxu0 %v515
      %v1109 = vpop.f32.mrf.mxu0
      %v1110 = vadd.f32 %v1021, %v1109
      %v1111 = vpop.f32.mrf.mxu0
      %v1112 = vadd.f32 %v1023, %v1111
      %1113 = vmatmul.bf16.gmra.mxu0 %v519
      %v1114 = vpop.f32.mrf.mxu0
      %v1115 = vadd.f32 %v1026, %v1114
      %v1116 = vpop.f32.mrf.mxu0
      %v1117 = vadd.f32 %v1028, %v1116
      %1118 = vmatmul.bf16.gmra.mxu0 %v523
      %v1119 = vpop.f32.mrf.mxu0
      %v1120 = vadd.f32 %v1031, %v1119
      %v1121 = vpop.f32.mrf.mxu0
      %v1122 = vadd.f32 %v1033, %v1121
      %1123 = vmatmul.bf16.gmra.mxu0 %v527
      %v1124 = vpop.f32.mrf.mxu0
      %v1125 = vadd.f32 %v1036, %v1124
      %v1126 = vpop.f32.mrf.mxu0
      %v1127 = vadd.f32 %v1038, %v1126
      %1128 = vmatmul.bf16.gmra.mxu0 %v531
      %v1129 = vpop.f32.mrf.mxu0
      %v1130 = vadd.f32 %v1041, %v1129
      %v1131 = vpop.f32.mrf.mxu0
      %v1132 = vadd.f32 %v1043, %v1131
      %1133 = vmatmul.bf16.gmra.mxu0 %v535
      %v1134 = vpop.f32.mrf.mxu0
      %v1135 = vadd.f32 %v1046, %v1134
      %v1136 = vpop.f32.mrf.mxu0
      %v1137 = vadd.f32 %v1048, %v1136
      %1138 = vmatmul.bf16.gmra.mxu0 %v539
      %v1139 = vpop.f32.mrf.mxu0
      %v1140 = vadd.f32 %v1051, %v1139
      %v1141 = vpop.f32.mrf.mxu0
      %v1142 = vadd.f32 %v1053, %v1141
      %1143 = vmatmul.bf16.gmra.mxu0 %v543
      %v1144 = vpop.f32.mrf.mxu0
      %v1145 = vadd.f32 %v1056, %v1144
      %v1146 = vpop.f32.mrf.mxu0
      %v1147 = vadd.f32 %v1058, %v1146
      %1148 = vmatmul.bf16.gmra.mxu0 %v547
      %v1149 = vpop.f32.mrf.mxu0
      %v1150 = vadd.f32 %v1061, %v1149
      %v1151 = vpop.f32.mrf.mxu0
      %v1152 = vadd.f32 %v1063, %v1151
      %1153 = vmatmul.bf16.gmra.mxu0 %v551
      %v1154 = vpop.f32.mrf.mxu0
      %v1155 = vadd.f32 %v1066, %v1154
      %v1156 = vpop.f32.mrf.mxu0
      %v1157 = vadd.f32 %v1068, %v1156
      %1158 = vmatmul.bf16.gmra.mxu0 %v555
      %v1159 = vpop.f32.mrf.mxu0
      %v1160 = vadd.f32 %v1071, %v1159
      %v1161 = vpop.f32.mrf.mxu0
      %v1162 = vadd.f32 %v1073, %v1161
      %1163 = vmatmul.bf16.gmra.mxu0 %v559
      %v1164 = vpop.f32.mrf.mxu0
      %v1165 = vadd.f32 %v1076, %v1164
      %v1166 = vpop.f32.mrf.mxu0
      %v1167 = vadd.f32 %v1078, %v1166
      %1168 = vmatmul.bf16.gmra.mxu0 %v563
      %v1169 = vpop.f32.mrf.mxu0
      %v1170 = vadd.f32 %v1081, %v1169
      %v1171 = vpop.f32.mrf.mxu0
      %v1172 = vadd.f32 %v1083, %v1171
      %1173 = vmatmul.bf16.gmra.mxu0 %v567
      %v1174 = vpop.f32.mrf.mxu0
      %v1175 = vadd.f32 %v1086, %v1174
      %v1176 = vpop.f32.mrf.mxu0
      %v1177 = vadd.f32 %v1088, %v1176
      %1178 = vmatmul.bf16.gmra.mxu0 %v571
      %v1179 = vpop.f32.mrf.mxu0
      %v1180 = vadd.f32 %v1091, %v1179
      %v1181 = vpop.f32.mrf.mxu0
      %v1182 = vadd.f32 %v1093, %v1181
      %1183 = vdwg.mxu0
      %v1184 = vpack.c.bf16 %v1105, %v1105
      %v1185 = vpack.c.bf16 %v1107, %v1107
      %v1186 = vpack.c.bf16 %v1110, %v1110
      %v1187 = vpack.c.bf16 %v1112, %v1112
      %v1188 = vpack.c.bf16 %v1115, %v1115
      %v1189 = vpack.c.bf16 %v1117, %v1117
      %v1190 = vpack.c.bf16 %v1120, %v1120
      %v1191 = vpack.c.bf16 %v1122, %v1122
      %v1192 = vpack.c.bf16 %v1125, %v1125
      %v1193 = vpack.c.bf16 %v1127, %v1127
      %v1194 = vpack.c.bf16 %v1130, %v1130
      %v1195 = vpack.c.bf16 %v1132, %v1132
      %v1196 = vpack.c.bf16 %v1135, %v1135
      %v1197 = vpack.c.bf16 %v1137, %v1137
      %v1198 = vpack.c.bf16 %v1140, %v1140
      %v1199 = vpack.c.bf16 %v1142, %v1142
      %v1200 = vpack.c.bf16 %v1145, %v1145
      %v1201 = vpack.c.bf16 %v1147, %v1147
      %v1202 = vpack.c.bf16 %v1150, %v1150
      %v1203 = vpack.c.bf16 %v1152, %v1152
      %v1204 = vpack.c.bf16 %v1155, %v1155
      %v1205 = vpack.c.bf16 %v1157, %v1157
      %v1206 = vpack.c.bf16 %v1160, %v1160
      %v1207 = vpack.c.bf16 %v1162, %v1162
      %v1208 = vpack.c.bf16 %v1165, %v1165
      %v1209 = vpack.c.bf16 %v1167, %v1167
      %v1210 = vpack.c.bf16 %v1170, %v1170
      %v1211 = vpack.c.bf16 %v1172, %v1172
      %v1212 = vpack.c.bf16 %v1175, %v1175
      %v1213 = vpack.c.bf16 %v1177, %v1177
      %v1214 = vpack.c.bf16 %v1180, %v1180
      %v1215 = vpack.c.bf16 %v1182, %v1182
      %1216 = vst [vmem:[%s182] sm:$0xf] %v1184
      %1217 = vst [vmem:[%s182 + $0x4] sm:$0xf] %v1185
      %1218 = vst [vmem:[%s182 + $0x8] sm:$0xf] %v1186
      %1219 = vst [vmem:[%s182 + $0xc] sm:$0xf] %v1187
      %1220 = vst [vmem:[%s182 + $0x10] sm:$0xf] %v1188
      %1221 = vst [vmem:[%s182 + $0x14] sm:$0xf] %v1189
      %1222 = vst [vmem:[%s182 + $0x18] sm:$0xf] %v1190
      %1223 = vst [vmem:[%s182 + $0x1c] sm:$0xf] %v1191
      %1224 = vst [vmem:[%s182 + $0x20] sm:$0xf] %v1192
      %1225 = vst [vmem:[%s182 + $0x24] sm:$0xf] %v1193
      %1226 = vst [vmem:[%s182 + $0x28] sm:$0xf] %v1194
      %1227 = vst [vmem:[%s182 + $0x2c] sm:$0xf] %v1195
      %1228 = vst [vmem:[%s182 + $0x30] sm:$0xf] %v1196
      %1229 = vst [vmem:[%s182 + $0x34] sm:$0xf] %v1197
      %1230 = vst [vmem:[%s182 + $0x38] sm:$0xf] %v1198
      %1231 = vst [vmem:[%s182 + $0x3c] sm:$0xf] %v1199
      %1232 = vst [vmem:[%s182 + $0x40] sm:$0xf] %v1200
      %1233 = vst [vmem:[%s182 + $0x44] sm:$0xf] %v1201
      %1234 = vst [vmem:[%s182 + $0x48] sm:$0xf] %v1202
      %1235 = vst [vmem:[%s182 + $0x4c] sm:$0xf] %v1203
      %1236 = vst [vmem:[%s182 + $0x50] sm:$0xf] %v1204
      %1237 = vst [vmem:[%s182 + $0x54] sm:$0xf] %v1205
      %1238 = vst [vmem:[%s182 + $0x58] sm:$0xf] %v1206
      %1239 = vst [vmem:[%s182 + $0x5c] sm:$0xf] %v1207
      %1240 = vst [vmem:[%s182 + $0x60] sm:$0xf] %v1208
      %1241 = vst [vmem:[%s182 + $0x64] sm:$0xf] %v1209
      %1242 = vst [vmem:[%s182 + $0x68] sm:$0xf] %v1210
      %1243 = vst [vmem:[%s182 + $0x6c] sm:$0xf] %v1211
      %1244 = vst [vmem:[%s182 + $0x70] sm:$0xf] %v1212
      %1245 = vst [vmem:[%s182 + $0x74] sm:$0xf] %v1213
      %1246 = vst [vmem:[%s182 + $0x78] sm:$0xf] %v1214
      %1247 = vst [vmem:[%s182 + $0x7c] sm:$0xf] %v1215
      %v1248 = vadd.f32 %v1105, %v1107
      %v1249 = vadd.f32 %v1248, %v1110
      %v1250 = vadd.f32 %v1249, %v1112
      %v1251 = vadd.f32 %v1250, %v1115
      %v1252 = vadd.f32 %v1251, %v1117
      %v1253 = vadd.f32 %v1252, %v1120
      %v1254 = vadd.f32 %v1253, %v1122
      %v1255 = vadd.f32 %v1254, %v1125
      %v1256 = vadd.f32 %v1255, %v1127
      %v1257 = vadd.f32 %v1256, %v1130
      %v1258 = vadd.f32 %v1257, %v1132
      %v1259 = vadd.f32 %v1258, %v1135
      %v1260 = vadd.f32 %v1259, %v1137
      %v1261 = vadd.f32 %v1260, %v1140
      %v1262 = vadd.f32 %v1261, %v1142
      %v1263 = vadd.f32 %v1262, %v1145
      %v1264 = vadd.f32 %v1263, %v1147
      %v1265 = vadd.f32 %v1264, %v1150
      %v1266 = vadd.f32 %v1265, %v1152
      %v1267 = vadd.f32 %v1266, %v1155
      %v1268 = vadd.f32 %v1267, %v1157
      %v1269 = vadd.f32 %v1268, %v1160
      %v1270 = vadd.f32 %v1269, %v1162
      %v1271 = vadd.f32 %v1270, %v1165
      %v1272 = vadd.f32 %v1271, %v1167
      %v1273 = vadd.f32 %v1272, %v1170
      %v1274 = vadd.f32 %v1273, %v1172
      %v1275 = vadd.f32 %v1274, %v1175
      %v1276 = vadd.f32 %v1275, %v1177
      %v1277 = vadd.f32 %v1276, %v1180
      %v1278 = vadd.f32 %v1277, %v1182
      %v1279 = vrot.slane %v1278, 4
      %v1280 = vadd.f32 %v1278, %v1279
      %v1281 = vrot.slane %v1280, 2
      %v1282 = vadd.f32 %v1280, %v1281
      %v1283 = vrot.slane %v1282, 1
      %v1284 = vadd.f32 %v1282, %v1283
      %1285 = vst [vmem:[%s187] sm:$0x1] %v1284
      %v1286 = vmul.f32 %v1105, %v1105
      %v1287 = vmul.f32 %v1107, %v1107
      %v1288 = vmul.f32 %v1110, %v1110
      %v1289 = vmul.f32 %v1112, %v1112
      %v1290 = vmul.f32 %v1115, %v1115
      %v1291 = vmul.f32 %v1117, %v1117
      %v1292 = vmul.f32 %v1120, %v1120
      %v1293 = vmul.f32 %v1122, %v1122
      %v1294 = vmul.f32 %v1125, %v1125
      %v1295 = vmul.f32 %v1127, %v1127
      %v1296 = vmul.f32 %v1130, %v1130
      %v1297 = vmul.f32 %v1132, %v1132
      %v1298 = vmul.f32 %v1135, %v1135
      %v1299 = vmul.f32 %v1137, %v1137
      %v1300 = vmul.f32 %v1140, %v1140
      %v1301 = vmul.f32 %v1142, %v1142
      %v1302 = vmul.f32 %v1145, %v1145
      %v1303 = vmul.f32 %v1147, %v1147
      %v1304 = vmul.f32 %v1150, %v1150
      %v1305 = vmul.f32 %v1152, %v1152
      %v1306 = vmul.f32 %v1155, %v1155
      %v1307 = vmul.f32 %v1157, %v1157
      %v1308 = vmul.f32 %v1160, %v1160
      %v1309 = vmul.f32 %v1162, %v1162
      %v1310 = vmul.f32 %v1165, %v1165
      %v1311 = vmul.f32 %v1167, %v1167
      %v1312 = vmul.f32 %v1170, %v1170
      %v1313 = vmul.f32 %v1172, %v1172
      %v1314 = vmul.f32 %v1175, %v1175
      %v1315 = vmul.f32 %v1177, %v1177
      %v1316 = vmul.f32 %v1180, %v1180
      %v1317 = vmul.f32 %v1182, %v1182
      %v1318 = vadd.f32 %v1286, %v1287
      %v1319 = vadd.f32 %v1318, %v1288
      %v1320 = vadd.f32 %v1319, %v1289
      %v1321 = vadd.f32 %v1320, %v1290
      %v1322 = vadd.f32 %v1321, %v1291
      %v1323 = vadd.f32 %v1322, %v1292
      %v1324 = vadd.f32 %v1323, %v1293
      %v1325 = vadd.f32 %v1324, %v1294
      %v1326 = vadd.f32 %v1325, %v1295
      %v1327 = vadd.f32 %v1326, %v1296
      %v1328 = vadd.f32 %v1327, %v1297
      %v1329 = vadd.f32 %v1328, %v1298
      %v1330 = vadd.f32 %v1329, %v1299
      %v1331 = vadd.f32 %v1330, %v1300
      %v1332 = vadd.f32 %v1331, %v1301
      %v1333 = vadd.f32 %v1332, %v1302
      %v1334 = vadd.f32 %v1333, %v1303
      %v1335 = vadd.f32 %v1334, %v1304
      %v1336 = vadd.f32 %v1335, %v1305
      %v1337 = vadd.f32 %v1336, %v1306
      %v1338 = vadd.f32 %v1337, %v1307
      %v1339 = vadd.f32 %v1338, %v1308
      %v1340 = vadd.f32 %v1339, %v1309
      %v1341 = vadd.f32 %v1340, %v1310
      %v1342 = vadd.f32 %v1341, %v1311
      %v1343 = vadd.f32 %v1342, %v1312
      %v1344 = vadd.f32 %v1343, %v1313
      %v1345 = vadd.f32 %v1344, %v1314
      %v1346 = vadd.f32 %v1345, %v1315
      %v1347 = vadd.f32 %v1346, %v1316
      %v1348 = vadd.f32 %v1347, %v1317
      %v1349 = vrot.slane %v1348, 4
      %v1350 = vadd.f32 %v1348, %v1349
      %v1351 = vrot.slane %v1350, 2
      %v1352 = vadd.f32 %v1350, %v1351
      %v1353 = vrot.slane %v1352, 1
      %v1354 = vadd.f32 %v1352, %v1353
      %1355 = vst [vmem:[%s187 + $0x1] sm:$0x1] %v1354
      %s1356 = smul.u32 32, %s15
      %p1357 = scmp.lt.s32.totalorder %s1356, 63
      %s1358 = scalar_select %p1357, %s1356, 63
      %s1359 = smul.addr %s1358, 4
      %s1360 = scalar_lea.vmem %s2, %s1359
      %p1361 = scmp.lt.s32.totalorder %s15, 1
      %s1362 = scalar_select %p1361, %s15, 1
      %s1363 = smul.addr %s1362, 2
      %s1364 = scalar_lea.vmem %s3, %s1363
      // Predicated region
      $region29: #{spp_bottleneck.6} parent=27 // pred_check
        %p1365 = pneg %p80
      $region30: #{spp_bottleneck.6} parent=27 // pred_check_branch
        %1367 = sbr.rel (%p1365) target = $region32
      $region31: #{spp_bottleneck.6} parent=27 // pred_region
        %s1368 = smul.u32 32, %s15
      $region32: #{spp_bottleneck.6} parent=27 // pred_fallthru
        _
      // Predicated region
      $region33: #{spp_bottleneck.6} parent=27 // pred_check
        %p1369 = pneg %p106
      $region34: #{spp_bottleneck.6} parent=27 // pred_check_branch
        %1371 = sbr.rel (%p1369) target = $region36
      $region35: #{spp_bottleneck.6} parent=27 // pred_region
        _
      $region36: #{spp_bottleneck.6} parent=27 // pred_fallthru
        _
    $region28: #{spp_bottleneck.6} parent=5 // pred_fallthru
      _
    %p1372 = scmp.le.s32.totalorder 2, %s10
    // Predicated region
    $region37: #{spp_bottleneck.6} parent=5 // pred_check
      %p1373 = pneg %p1372
    $region38: #{spp_bottleneck.6} parent=5 // pred_check_branch
      %1375 = sbr.rel (%p1373) target = $region40
    $region39: #{spp_bottleneck.6} parent=5 // pred_region
      %s1376 = ssub.s32 %s10, 2
      // Predicated region
      $region41: #{spp_bottleneck.6} parent=39 // pred_check
        %p1377 = pneg %p86
      $region42: #{spp_bottleneck.6} parent=39 // pred_check_branch
        %1379 = sbr.rel (%p1377) target = $region44
      $region43: #{spp_bottleneck.6} parent=39 // pred_region
        %s1380 = smul.u32 32, %s16
        %p1381 = scmp.lt.s32.totalorder %s1380, 63
        %s1382 = scalar_select %p1381, %s1380, 63
        %s1383 = smul.addr %s1382, 4
        %s1384 = scalar_lea.vmem %s2, %s1383
      $region44: #{spp_bottleneck.6} parent=39 // pred_fallthru
        _
      // Predicated region
      $region45: #{spp_bottleneck.6} parent=39 // pred_check
        %p1385 = pneg %p112
      $region46: #{spp_bottleneck.6} parent=39 // pred_check_branch
        %1387 = sbr.rel (%p1385) target = $region48
      $region47: #{spp_bottleneck.6} parent=39 // pred_region
        %p1388 = scmp.lt.s32.totalorder %s16, 1
        %s1389 = scalar_select %p1388, %s16, 1
        %s1390 = smul.addr %s1389, 2
        %s1391 = scalar_lea.vmem %s3, %s1390
      $region48: #{spp_bottleneck.6} parent=39 // pred_fallthru
        _
    $region40: #{spp_bottleneck.6} parent=5 // pred_fallthru
      _
  $region6: #{spp_bottleneck.6} parent=0 // loop_footer
    %s14 = sadd.s32 1, %s10
  $region7: #{spp_bottleneck.6} parent=0 // loop_footer_branch
    %9 = sbr.rel target = $region3
  $region8: #{spp_bottleneck.6} parent=0 // loop_exit
    _

// kernel: spp_bottleneck.5
$region0: #{spp_bottleneck.5}
  #allocation0 [shape = 'u32[]', space=smem, size = 0x4, offset = 0x4, fixed_abs, tag = 'smem constant byte address 0x4 - core index']
  #allocation1 [shape = 'u32[72,128]{1,0:T(1,128)}', space=vmem, size = 0x9000, scoped, tag = 'internal scratch']
  #allocation2 [shape = 'f32[1,20,20,128]{3,2,1,0:T(8,128)}', space=vmem, size = 0x3c000, scoped, tag = 'scratch operand']
  %s0 = inlined_call_operand.vmem [shape: bf16[2,16,16,128], index: 0, kind: input, shape index: {}]
  %s1 = inlined_call_operand.vmem [shape: f32[1,128], index: 1, kind: input, shape index: {}]
  %s2 = inlined_call_operand.vmem [shape: f32[1,128], index: 2, kind: input, shape index: {}]
  %s3 = inlined_call_operand.vmem [shape: bf16[2,16,16,512], index: 3, kind: output, shape index: {}]
  %s4 = sld [smem:[#allocation0]]
  $region45: #{spp_bottleneck.5} parent=0
    _
  %s6 = ssub.s32 1, %s4
  %s7 = scalar_select 0, %s6, %s4
  loop: start=0, step=1, limit=4
  $region2: #{spp_bottleneck.5} parent=0 // loop_pre_header
    _
  $region3: #{spp_bottleneck.5} parent=0 // loop_header
    %s9 = sphi 0, %s13
    %p10 = scmp.ge.s32.totalorder %s9, 4
    %s16 = sphi 0, %s28
    %s17 = sphi 0, %s24
    %s18 = sphi 0, %s16
    %s19 = sphi 0, %s17
    %s20 = sphi 0, %s18
    %s21 = sphi 0, %s19
    %s33 = sphi 0, %s35
    %s36 = sphi 0, %s33
    %s37 = sphi 0, %s36
    %s53 = sphi 0, %s37
    %s59 = sphi 0, %s61
    %s62 = sphi 0, %s59
    %s63 = sphi 0, %s62
    %s79 = sphi 0, %s63
    %s85 = sphi 0, %s87
    %s88 = sphi 0, %s85
    %s89 = sphi 0, %s88
    %s105 = sphi 0, %s89
    %s113 = sphi 0, %s115
    %s116 = sphi 0, %s113
    %s117 = sphi 0, %s116
    %s133 = sphi 0, %s117
  $region4: #{spp_bottleneck.5} parent=0 // loop_header_branch
    %12 = sbr.rel (%p10) target = $region8
  $region5: #{spp_bottleneck.5} parent=0 // loop_body
    %s14 = ssub.s32 %s9, 1
    %s15 = ssub.s32 %s9, 2
    %s22 = sadd.s32 1, %s17
    %p23 = scmp.ge.s32.totalorder %s22, 1
    %s24 = scalar_select %p23, 0, %s22
    %s25 = sadd.s32 1, %s16
    %s26 = scalar_select %p23, %s25, %s16
    %p27 = scmp.ge.s32.totalorder %s26, 2
    %s28 = scalar_select %p27, 0, %s26
    %s29 = ssub.s32 %s16, %s28
    %s30 = ssub.s32 %s17, %s24
    %s31 = sor.u32 %s29, %s30
    %p32 = scmp.eq.s32.totalorder %s31, 0
    %s34 = sadd.s32 %s33, 1
    %s35 = scalar_select %p32, %s33, %s34
    %p38 = pneg %p32
    %p39 = scmp.eq.s32.totalorder %s9, 1
    %p40 = por %p38, %p39
    %p41 = scmp.ne.s32.totalorder %s33, %s36
    %p42 = scmp.eq.s32.totalorder %s9, 0
    %p43 = por %p41, %p42
    %p44 = scmp.ne.s32.totalorder %s33, %s36
    %p45 = scmp.eq.s32.totalorder %s14, 1
    %p46 = por %p44, %p45
    %p47 = scmp.ne.s32.totalorder %s36, %s37
    %p48 = scmp.eq.s32.totalorder %s14, 0
    %p49 = por %p47, %p48
    %p50 = scmp.ne.s32.totalorder %s36, %s37
    %p51 = scmp.eq.s32.totalorder %s15, 1
    %p52 = por %p50, %p51
    %p54 = scmp.ne.s32.totalorder %s37, %s53
    %p55 = scmp.eq.s32.totalorder %s15, 0
    %p56 = por %p54, %p55
    %s57 = ssub.s32 %s17, %s24
    %p58 = scmp.eq.s32.totalorder %s57, 0
    %s60 = sadd.s32 %s59, 1
    %s61 = scalar_select %p58, %s59, %s60
    %p64 = pneg %p58
    %p65 = scmp.eq.s32.totalorder %s9, 1
    %p66 = por %p64, %p65
    %p67 = scmp.ne.s32.totalorder %s59, %s62
    %p68 = scmp.eq.s32.totalorder %s9, 0
    %p69 = por %p67, %p68
    %p70 = scmp.ne.s32.totalorder %s59, %s62
    %p71 = scmp.eq.s32.totalorder %s14, 1
    %p72 = por %p70, %p71
    %p73 = scmp.ne.s32.totalorder %s62, %s63
    %p74 = scmp.eq.s32.totalorder %s14, 0
    %p75 = por %p73, %p74
    %p76 = scmp.ne.s32.totalorder %s62, %s63
    %p77 = scmp.eq.s32.totalorder %s15, 1
    %p78 = por %p76, %p77
    %p80 = scmp.ne.s32.totalorder %s63, %s79
    %p81 = scmp.eq.s32.totalorder %s15, 0
    %p82 = por %p80, %p81
    %s83 = ssub.s32 %s17, %s24
    %p84 = scmp.eq.s32.totalorder %s83, 0
    %s86 = sadd.s32 %s85, 1
    %s87 = scalar_select %p84, %s85, %s86
    %p90 = pneg %p84
    %p91 = scmp.eq.s32.totalorder %s9, 1
    %p92 = por %p90, %p91
    %p93 = scmp.ne.s32.totalorder %s85, %s88
    %p94 = scmp.eq.s32.totalorder %s9, 0
    %p95 = por %p93, %p94
    %p96 = scmp.ne.s32.totalorder %s85, %s88
    %p97 = scmp.eq.s32.totalorder %s14, 1
    %p98 = por %p96, %p97
    %p99 = scmp.ne.s32.totalorder %s88, %s89
    %p100 = scmp.eq.s32.totalorder %s14, 0
    %p101 = por %p99, %p100
    %p102 = scmp.ne.s32.totalorder %s88, %s89
    %p103 = scmp.eq.s32.totalorder %s15, 1
    %p104 = por %p102, %p103
    %p106 = scmp.ne.s32.totalorder %s89, %s105
    %p107 = scmp.eq.s32.totalorder %s15, 0
    %p108 = por %p106, %p107
    %s109 = ssub.s32 %s16, %s28
    %s110 = ssub.s32 %s17, %s24
    %s111 = sor.u32 %s109, %s110
    %p112 = scmp.eq.s32.totalorder %s111, 0
    %s114 = sadd.s32 %s113, 1
    %s115 = scalar_select %p112, %s113, %s114
    %p118 = pneg %p112
    %p119 = scmp.eq.s32.totalorder %s9, 1
    %p120 = por %p118, %p119
    %p121 = scmp.ne.s32.totalorder %s113, %s116
    %p122 = scmp.eq.s32.totalorder %s9, 0
    %p123 = por %p121, %p122
    %p124 = scmp.ne.s32.totalorder %s113, %s116
    %p125 = scmp.eq.s32.totalorder %s14, 1
    %p126 = por %p124, %p125
    %p127 = scmp.ne.s32.totalorder %s116, %s117
    %p128 = scmp.eq.s32.totalorder %s14, 0
    %p129 = por %p127, %p128
    %p130 = scmp.ne.s32.totalorder %s116, %s117
    %p131 = scmp.eq.s32.totalorder %s15, 1
    %p132 = por %p130, %p131
    %p134 = scmp.ne.s32.totalorder %s117, %s133
    %p135 = scmp.eq.s32.totalorder %s15, 0
    %p136 = por %p134, %p135
    %p137 = scmp.le.s32.totalorder 1, %s9
    %p138 = scmp.lt.s32.totalorder %s9, 3
    %p139 = pnand %p137, %p138
    %p140 = pneg %p139
    // Predicated region
    $region9: #{spp_bottleneck.5} parent=5 // pred_check
      _
    $region10: #{spp_bottleneck.5} parent=5 // pred_check_branch
      %142 = sbr.rel (%p139) target = $region12
    $region11: #{spp_bottleneck.5} parent=5 // pred_region
      %s143 = ssub.s32 %s9, 1
      // Predicated region
      $region13: #{spp_bottleneck.5} parent=11 // pred_check
        %p144 = pneg %p75
      $region14: #{spp_bottleneck.5} parent=11 // pred_check_branch
        %146 = sbr.rel (%p144) target = $region16
      $region15: #{spp_bottleneck.5} parent=11 // pred_region
        %p147 = scmp.lt.s32.totalorder %s19, 0
        %s148 = scalar_select %p147, %s19, 0
        %s149 = scalar_lea.vmem %s1, %s148
      $region16: #{spp_bottleneck.5} parent=11 // pred_fallthru
        _
      // Predicated region
      $region17: #{spp_bottleneck.5} parent=11 // pred_check
        %p150 = pneg %p101
      $region18: #{spp_bottleneck.5} parent=11 // pred_check_branch
        %152 = sbr.rel (%p150) target = $region20
      $region19: #{spp_bottleneck.5} parent=11 // pred_region
        %p153 = scmp.lt.s32.totalorder %s19, 0
        %s154 = scalar_select %p153, %s19, 0
        %s155 = scalar_lea.vmem %s2, %s154
      $region20: #{spp_bottleneck.5} parent=11 // pred_fallthru
        _
    $region12: #{spp_bottleneck.5} parent=5 // pred_fallthru
      _
    %p156 = scmp.lt.s32.totalorder %s9, 2
    // Predicated region
    $region21: #{spp_bottleneck.5} parent=5 // pred_check
      %p157 = pneg %p156
    $region22: #{spp_bottleneck.5} parent=5 // pred_check_branch
      %159 = sbr.rel (%p157) target = $region24
    $region23: #{spp_bottleneck.5} parent=5 // pred_region
      // Predicated region
      $region25: #{spp_bottleneck.5} parent=23 // pred_check
        %p160 = pneg %p43
      $region26: #{spp_bottleneck.5} parent=23 // pred_check_branch
        %162 = sbr.rel (%p160) target = $region28
      $region27: #{spp_bottleneck.5} parent=23 // pred_region
        %p163 = scmp.lt.s32.totalorder %s16, 1
        %s164 = scalar_select %p163, %s16, 1
        %p165 = scmp.lt.s32.totalorder %s17, 0
        %s166 = scalar_select %p165, %s17, 0
        %s167 = smul.addr %s164, 32
        %s168 = sadd.s32 %s166, %s167
        %s169 = smul.addr %s168, 4
        %s170 = scalar_lea.vmem %s0, %s169
      $region28: #{spp_bottleneck.5} parent=23 // pred_fallthru
        _
    $region24: #{spp_bottleneck.5} parent=5 // pred_fallthru
      _
    %p171 = scmp.le.s32.totalorder 1, %s9
    %p172 = scmp.lt.s32.totalorder %s9, 3
    %p173 = pnand %p171, %p172
    %p174 = pneg %p173
    // Predicated region
    $region29: #{spp_bottleneck.5} parent=5 // pred_check
      _
    $region30: #{spp_bottleneck.5} parent=5 // pred_check_branch
      %176 = sbr.rel (%p173) target = $region32
    $region31: #{spp_bottleneck.5} parent=5 // pred_region
      %s177 = ssub.s32 %s9, 1
      %p178 = scmp.lt.s32.totalorder %s18, 1
      %s179 = scalar_select %p178, %s18, 1
      %p180 = scmp.lt.s32.totalorder %s19, 0
      %s181 = scalar_select %p180, %s19, 0
      %s182 = smul.addr %s179, 32
      %s183 = sadd.s32 %s181, %s182
      %s184 = smul.addr %s183, 4
      %s185 = scalar_lea.vmem %s0, %s184
      %p186 = pneg %p49
      %p187 = pneg %p46
      %p188 = scmp.lt.s32.totalorder %s19, 0
      %s189 = scalar_select %p188, %s19, 0
      %s190 = scalar_lea.vmem %s1, %s189
      %p191 = pneg %p75
      %p192 = pneg %p72
      %p193 = scmp.lt.s32.totalorder %s19, 0
      %s194 = scalar_select %p193, %s19, 0
      %s195 = scalar_lea.vmem %s2, %s194
      %p196 = pneg %p101
      %p197 = pneg %p98
      %p198 = pneg %p129
      %p199 = pneg %p126
      %s200 = smul.u32 4, %s19
      %p201 = scmp.lt.s32.totalorder %s18, 1
      %s202 = scalar_select %p201, %s18, 1
      %p203 = scmp.lt.s32.totalorder %s200, 3
      %s204 = scalar_select %p203, %s200, 3
      %s205 = smul.addr %s202, 128
      %s206 = sadd.s32 %s204, %s205
      %s207 = smul.addr %s206, 4
      %s208 = scalar_lea.vmem %s3, %s207
      %p209 = scmp.lt.s32.totalorder %s18, 1
      %s210 = scalar_select %p209, %s18, 1
      %p211 = scmp.lt.s32.totalorder %s19, 0
      %s212 = scalar_select %p211, %s19, 0
      %s213 = smul.addr %s210, 32
      %s214 = sadd.s32 %s212, %s213
      %s215 = smul.addr %s214, 4
      %s216 = scalar_lea.vmem %s0, %s215
      %p217 = scmp.lt.s32.totalorder %s19, 0
      %s218 = scalar_select %p217, %s19, 0
      %s219 = scalar_lea.vmem %s1, %s218
      %p220 = scmp.lt.s32.totalorder %s19, 0
      %s221 = scalar_select %p220, %s19, 0
      %s222 = scalar_lea.vmem %s2, %s221
      %s223 = smul.u32 4, %s19
      %p224 = scmp.lt.s32.totalorder %s18, 1
      %s225 = scalar_select %p224, %s18, 1
      %p226 = scmp.lt.s32.totalorder %s223, 3
      %s227 = scalar_select %p226, %s223, 3
      %s228 = smul.addr %s225, 128
      %s229 = sadd.s32 %s227, %s228
      %s230 = smul.addr %s229, 4
      %s231 = scalar_lea.vmem %s3, %s230
      %s232 = smul.u32 4, %s19
      %v233 = vld [vmem:[%s216] sm:$0xf]
      %v234 = vld [vmem:[%s216 + $0x4] sm:$0xf]
      %v235 = vld [vmem:[%s216 + $0x8] sm:$0xf]
      %v236 = vld [vmem:[%s216 + $0xc] sm:$0xf]
      %v237 = vld [vmem:[%s216 + $0x10] sm:$0xf]
      %v238 = vld [vmem:[%s216 + $0x14] sm:$0xf]
      %v239 = vld [vmem:[%s216 + $0x18] sm:$0xf]
      %v240 = vld [vmem:[%s216 + $0x1c] sm:$0xf]
      %v241 = vld [vmem:[%s216 + $0x20] sm:$0xf]
      %v242 = vld [vmem:[%s216 + $0x24] sm:$0xf]
      %v243 = vld [vmem:[%s216 + $0x28] sm:$0xf]
      %v244 = vld [vmem:[%s216 + $0x2c] sm:$0xf]
      %v245 = vld [vmem:[%s216 + $0x30] sm:$0xf]
      %v246 = vld [vmem:[%s216 + $0x34] sm:$0xf]
      %v247 = vld [vmem:[%s216 + $0x38] sm:$0xf]
      %v248 = vld [vmem:[%s216 + $0x3c] sm:$0xf]
      %v249 = vld [vmem:[%s216 + $0x40] sm:$0xf]
      %v250 = vld [vmem:[%s216 + $0x44] sm:$0xf]
      %v251 = vld [vmem:[%s216 + $0x48] sm:$0xf]
      %v252 = vld [vmem:[%s216 + $0x4c] sm:$0xf]
      %v253 = vld [vmem:[%s216 + $0x50] sm:$0xf]
      %v254 = vld [vmem:[%s216 + $0x54] sm:$0xf]
      %v255 = vld [vmem:[%s216 + $0x58] sm:$0xf]
      %v256 = vld [vmem:[%s216 + $0x5c] sm:$0xf]
      %v257 = vld [vmem:[%s216 + $0x60] sm:$0xf]
      %v258 = vld [vmem:[%s216 + $0x64] sm:$0xf]
      %v259 = vld [vmem:[%s216 + $0x68] sm:$0xf]
      %v260 = vld [vmem:[%s216 + $0x6c] sm:$0xf]
      %v261 = vld [vmem:[%s216 + $0x70] sm:$0xf]
      %v262 = vld [vmem:[%s216 + $0x74] sm:$0xf]
      %v263 = vld [vmem:[%s216 + $0x78] sm:$0xf]
      %v264 = vld [vmem:[%s216 + $0x7c] sm:$0xf]
      %v265 = vunpack.c.l.bf16 %v233
      %v266 = vunpack.c.l.bf16 %v234
      %v267 = vunpack.c.l.bf16 %v235
      %v268 = vunpack.c.l.bf16 %v236
      %v269 = vunpack.c.l.bf16 %v237
      %v270 = vunpack.c.l.bf16 %v238
      %v271 = vunpack.c.l.bf16 %v239
      %v272 = vunpack.c.l.bf16 %v240
      %v273 = vunpack.c.l.bf16 %v241
      %v274 = vunpack.c.l.bf16 %v242
      %v275 = vunpack.c.l.bf16 %v243
      %v276 = vunpack.c.l.bf16 %v244
      %v277 = vunpack.c.l.bf16 %v245
      %v278 = vunpack.c.l.bf16 %v246
      %v279 = vunpack.c.l.bf16 %v247
      %v280 = vunpack.c.l.bf16 %v248
      %v281 = vunpack.c.l.bf16 %v249
      %v282 = vunpack.c.l.bf16 %v250
      %v283 = vunpack.c.l.bf16 %v251
      %v284 = vunpack.c.l.bf16 %v252
      %v285 = vunpack.c.l.bf16 %v253
      %v286 = vunpack.c.l.bf16 %v254
      %v287 = vunpack.c.l.bf16 %v255
      %v288 = vunpack.c.l.bf16 %v256
      %v289 = vunpack.c.l.bf16 %v257
      %v290 = vunpack.c.l.bf16 %v258
      %v291 = vunpack.c.l.bf16 %v259
      %v292 = vunpack.c.l.bf16 %v260
      %v293 = vunpack.c.l.bf16 %v261
      %v294 = vunpack.c.l.bf16 %v262
      %v295 = vunpack.c.l.bf16 %v263
      %v296 = vunpack.c.l.bf16 %v264
      %v297 = vld [vmem:[%s219] sm:$0x1]
      %v299 = vperm.slane %v297, 0
      %v301 = vmul.f32 %v265, %v299
      %v302 = vmul.f32 %v266, %v299
      %v303 = vmul.f32 %v267, %v299
      %v304 = vmul.f32 %v268, %v299
      %v305 = vmul.f32 %v269, %v299
      %v306 = vmul.f32 %v270, %v299
      %v307 = vmul.f32 %v271, %v299
      %v308 = vmul.f32 %v272, %v299
      %v309 = vmul.f32 %v273, %v299
      %v310 = vmul.f32 %v274, %v299
      %v311 = vmul.f32 %v275, %v299
      %v312 = vmul.f32 %v276, %v299
      %v313 = vmul.f32 %v277, %v299
      %v314 = vmul.f32 %v278, %v299
      %v315 = vmul.f32 %v279, %v299
      %v316 = vmul.f32 %v280, %v299
      %v317 = vmul.f32 %v281, %v299
      %v318 = vmul.f32 %v282, %v299
      %v319 = vmul.f32 %v283, %v299
      %v320 = vmul.f32 %v284, %v299
      %v321 = vmul.f32 %v285, %v299
      %v322 = vmul.f32 %v286, %v299
      %v323 = vmul.f32 %v287, %v299
      %v324 = vmul.f32 %v288, %v299
      %v325 = vmul.f32 %v289, %v299
      %v326 = vmul.f32 %v290, %v299
      %v327 = vmul.f32 %v291, %v299
      %v328 = vmul.f32 %v292, %v299
      %v329 = vmul.f32 %v293, %v299
      %v330 = vmul.f32 %v294, %v299
      %v331 = vmul.f32 %v295, %v299
      %v332 = vmul.f32 %v296, %v299
      %v333 = vld [vmem:[%s222] sm:$0x1]
      %v335 = vperm.slane %v333, 0
      %v337 = vadd.f32 %v301, %v335
      %v338 = vadd.f32 %v302, %v335
      %v339 = vadd.f32 %v303, %v335
      %v340 = vadd.f32 %v304, %v335
      %v341 = vadd.f32 %v305, %v335
      %v342 = vadd.f32 %v306, %v335
      %v343 = vadd.f32 %v307, %v335
      %v344 = vadd.f32 %v308, %v335
      %v345 = vadd.f32 %v309, %v335
      %v346 = vadd.f32 %v310, %v335
      %v347 = vadd.f32 %v311, %v335
      %v348 = vadd.f32 %v312, %v335
      %v349 = vadd.f32 %v313, %v335
      %v350 = vadd.f32 %v314, %v335
      %v351 = vadd.f32 %v315, %v335
      %v352 = vadd.f32 %v316, %v335
      %v353 = vadd.f32 %v317, %v335
      %v354 = vadd.f32 %v318, %v335
      %v355 = vadd.f32 %v319, %v335
      %v356 = vadd.f32 %v320, %v335
      %v357 = vadd.f32 %v321, %v335
      %v358 = vadd.f32 %v322, %v335
      %v359 = vadd.f32 %v323, %v335
      %v360 = vadd.f32 %v324, %v335
      %v361 = vadd.f32 %v325, %v335
      %v362 = vadd.f32 %v326, %v335
      %v363 = vadd.f32 %v327, %v335
      %v364 = vadd.f32 %v328, %v335
      %v365 = vadd.f32 %v329, %v335
      %v366 = vadd.f32 %v330, %v335
      %v367 = vadd.f32 %v331, %v335
      %v368 = vadd.f32 %v332, %v335
      %v369 = vmul.f32 %v337, 0.5
      %v370 = vmul.f32 %v338, 0.5
      %v371 = vmul.f32 %v339, 0.5
      %v372 = vmul.f32 %v340, 0.5
      %v373 = vmul.f32 %v341, 0.5
      %v374 = vmul.f32 %v342, 0.5
      %v375 = vmul.f32 %v343, 0.5
      %v376 = vmul.f32 %v344, 0.5
      %v377 = vmul.f32 %v345, 0.5
      %v378 = vmul.f32 %v346, 0.5
      %v379 = vmul.f32 %v347, 0.5
      %v380 = vmul.f32 %v348, 0.5
      %v381 = vmul.f32 %v349, 0.5
      %v382 = vmul.f32 %v350, 0.5
      %v383 = vmul.f32 %v351, 0.5
      %v384 = vmul.f32 %v352, 0.5
      %v385 = vmul.f32 %v353, 0.5
      %v386 = vmul.f32 %v354, 0.5
      %v387 = vmul.f32 %v355, 0.5
      %v388 = vmul.f32 %v356, 0.5
      %v389 = vmul.f32 %v357, 0.5
      %v390 = vmul.f32 %v358, 0.5
      %v391 = vmul.f32 %v359, 0.5
      %v392 = vmul.f32 %v360, 0.5
      %v393 = vmul.f32 %v361, 0.5
      %v394 = vmul.f32 %v362, 0.5
      %v395 = vmul.f32 %v363, 0.5
      %v396 = vmul.f32 %v364, 0.5
      %v397 = vmul.f32 %v365, 0.5
      %v398 = vmul.f32 %v366, 0.5
      %v399 = vmul.f32 %v367, 0.5
      %v400 = vmul.f32 %v368, 0.5
      %v401 = vtanh.pop %v369
      %v402 = vtanh.pop %v370
      %v403 = vtanh.pop %v371
      %v404 = vtanh.pop %v372
      %v405 = vtanh.pop %v373
      %v406 = vtanh.pop %v374
      %v407 = vtanh.pop %v375
      %v408 = vtanh.pop %v376
      %v409 = vtanh.pop %v377
      %v410 = vtanh.pop %v378
      %v411 = vtanh.pop %v379
      %v412 = vtanh.pop %v380
      %v413 = vtanh.pop %v381
      %v414 = vtanh.pop %v382
      %v415 = vtanh.pop %v383
      %v416 = vtanh.pop %v384
      %v417 = vtanh.pop %v385
      %v418 = vtanh.pop %v386
      %v419 = vtanh.pop %v387
      %v420 = vtanh.pop %v388
      %v421 = vtanh.pop %v389
      %v422 = vtanh.pop %v390
      %v423 = vtanh.pop %v391
      %v424 = vtanh.pop %v392
      %v425 = vtanh.pop %v393
      %v426 = vtanh.pop %v394
      %v427 = vtanh.pop %v395
      %v428 = vtanh.pop %v396
      %v429 = vtanh.pop %v397
      %v430 = vtanh.pop %v398
      %v431 = vtanh.pop %v399
      %v432 = vtanh.pop %v400
      %v433 = vadd.f32 %v401, 1.0
      %v434 = vadd.f32 %v402, 1.0
      %v435 = vadd.f32 %v403, 1.0
      %v436 = vadd.f32 %v404, 1.0
      %v437 = vadd.f32 %v405, 1.0
      %v438 = vadd.f32 %v406, 1.0
      %v439 = vadd.f32 %v407, 1.0
      %v440 = vadd.f32 %v408, 1.0
      %v441 = vadd.f32 %v409, 1.0
      %v442 = vadd.f32 %v410, 1.0
      %v443 = vadd.f32 %v411, 1.0
      %v444 = vadd.f32 %v412, 1.0
      %v445 = vadd.f32 %v413, 1.0
      %v446 = vadd.f32 %v414, 1.0
      %v447 = vadd.f32 %v415, 1.0
      %v448 = vadd.f32 %v416, 1.0
      %v449 = vadd.f32 %v417, 1.0
      %v450 = vadd.f32 %v418, 1.0
      %v451 = vadd.f32 %v419, 1.0
      %v452 = vadd.f32 %v420, 1.0
      %v453 = vadd.f32 %v421, 1.0
      %v454 = vadd.f32 %v422, 1.0
      %v455 = vadd.f32 %v423, 1.0
      %v456 = vadd.f32 %v424, 1.0
      %v457 = vadd.f32 %v425, 1.0
      %v458 = vadd.f32 %v426, 1.0
      %v459 = vadd.f32 %v427, 1.0
      %v460 = vadd.f32 %v428, 1.0
      %v461 = vadd.f32 %v429, 1.0
      %v462 = vadd.f32 %v430, 1.0
      %v463 = vadd.f32 %v431, 1.0
      %v464 = vadd.f32 %v432, 1.0
      %v465 = vmul.f32 %v433, 0.5
      %v466 = vmul.f32 %v434, 0.5
      %v467 = vmul.f32 %v435, 0.5
      %v468 = vmul.f32 %v436, 0.5
      %v469 = vmul.f32 %v437, 0.5
      %v470 = vmul.f32 %v438, 0.5
      %v471 = vmul.f32 %v439, 0.5
      %v472 = vmul.f32 %v440, 0.5
      %v473 = vmul.f32 %v441, 0.5
      %v474 = vmul.f32 %v442, 0.5
      %v475 = vmul.f32 %v443, 0.5
      %v476 = vmul.f32 %v444, 0.5
      %v477 = vmul.f32 %v445, 0.5
      %v478 = vmul.f32 %v446, 0.5
      %v479 = vmul.f32 %v447, 0.5
      %v480 = vmul.f32 %v448, 0.5
      %v481 = vmul.f32 %v449, 0.5
      %v482 = vmul.f32 %v450, 0.5
      %v483 = vmul.f32 %v451, 0.5
      %v484 = vmul.f32 %v452, 0.5
      %v485 = vmul.f32 %v453, 0.5
      %v486 = vmul.f32 %v454, 0.5
      %v487 = vmul.f32 %v455, 0.5
      %v488 = vmul.f32 %v456, 0.5
      %v489 = vmul.f32 %v457, 0.5
      %v490 = vmul.f32 %v458, 0.5
      %v491 = vmul.f32 %v459, 0.5
      %v492 = vmul.f32 %v460, 0.5
      %v493 = vmul.f32 %v461, 0.5
      %v494 = vmul.f32 %v462, 0.5
      %v495 = vmul.f32 %v463, 0.5
      %v496 = vmul.f32 %v464, 0.5
      %v497 = vmul.f32 %v337, %v465
      %v498 = vmul.f32 %v338, %v466
      %v499 = vmul.f32 %v339, %v467
      %v500 = vmul.f32 %v340, %v468
      %v501 = vmul.f32 %v341, %v469
      %v502 = vmul.f32 %v342, %v470
      %v503 = vmul.f32 %v343, %v471
      %v504 = vmul.f32 %v344, %v472
      %v505 = vmul.f32 %v345, %v473
      %v506 = vmul.f32 %v346, %v474
      %v507 = vmul.f32 %v347, %v475
      %v508 = vmul.f32 %v348, %v476
      %v509 = vmul.f32 %v349, %v477
      %v510 = vmul.f32 %v350, %v478
      %v511 = vmul.f32 %v351, %v479
      %v512 = vmul.f32 %v352, %v480
      %v513 = vmul.f32 %v353, %v481
      %v514 = vmul.f32 %v354, %v482
      %v515 = vmul.f32 %v355, %v483
      %v516 = vmul.f32 %v356, %v484
      %v517 = vmul.f32 %v357, %v485
      %v518 = vmul.f32 %v358, %v486
      %v519 = vmul.f32 %v359, %v487
      %v520 = vmul.f32 %v360, %v488
      %v521 = vmul.f32 %v361, %v489
      %v522 = vmul.f32 %v362, %v490
      %v523 = vmul.f32 %v363, %v491
      %v524 = vmul.f32 %v364, %v492
      %v525 = vmul.f32 %v365, %v493
      %v526 = vmul.f32 %v366, %v494
      %v527 = vmul.f32 %v367, %v495
      %v528 = vmul.f32 %v368, %v496
      %v529 = vpack.c.bf16 %v497, %v497
      %v530 = vpack.c.bf16 %v498, %v498
      %v531 = vpack.c.bf16 %v499, %v499
      %v532 = vpack.c.bf16 %v500, %v500
      %v533 = vpack.c.bf16 %v501, %v501
      %v534 = vpack.c.bf16 %v502, %v502
      %v535 = vpack.c.bf16 %v503, %v503
      %v536 = vpack.c.bf16 %v504, %v504
      %v537 = vpack.c.bf16 %v505, %v505
      %v538 = vpack.c.bf16 %v506, %v506
      %v539 = vpack.c.bf16 %v507, %v507
      %v540 = vpack.c.bf16 %v508, %v508
      %v541 = vpack.c.bf16 %v509, %v509
      %v542 = vpack.c.bf16 %v510, %v510
      %v543 = vpack.c.bf16 %v511, %v511
      %v544 = vpack.c.bf16 %v512, %v512
      %v545 = vpack.c.bf16 %v513, %v513
      %v546 = vpack.c.bf16 %v514, %v514
      %v547 = vpack.c.bf16 %v515, %v515
      %v548 = vpack.c.bf16 %v516, %v516
      %v549 = vpack.c.bf16 %v517, %v517
      %v550 = vpack.c.bf16 %v518, %v518
      %v551 = vpack.c.bf16 %v519, %v519
      %v552 = vpack.c.bf16 %v520, %v520
      %v553 = vpack.c.bf16 %v521, %v521
      %v554 = vpack.c.bf16 %v522, %v522
      %v555 = vpack.c.bf16 %v523, %v523
      %v556 = vpack.c.bf16 %v524, %v524
      %v557 = vpack.c.bf16 %v525, %v525
      %v558 = vpack.c.bf16 %v526, %v526
      %v559 = vpack.c.bf16 %v527, %v527
      %v560 = vpack.c.bf16 %v528, %v528
      %561 = vst [vmem:[%s231] sm:$0xf] %v529
      %562 = vst [vmem:[%s231 + $0x10] sm:$0xf] %v530
      %563 = vst [vmem:[%s231 + $0x20] sm:$0xf] %v531
      %564 = vst [vmem:[%s231 + $0x30] sm:$0xf] %v532
      %565 = vst [vmem:[%s231 + $0x40] sm:$0xf] %v533
      %566 = vst [vmem:[%s231 + $0x50] sm:$0xf] %v534
      %567 = vst [vmem:[%s231 + $0x60] sm:$0xf] %v535
      %568 = vst [vmem:[%s231 + $0x70] sm:$0xf] %v536
      %569 = vst [vmem:[%s231 + $0x80] sm:$0xf] %v537
      %570 = vst [vmem:[%s231 + $0x90] sm:$0xf] %v538
      %571 = vst [vmem:[%s231 + $0xa0] sm:$0xf] %v539
      %572 = vst [vmem:[%s231 + $0xb0] sm:$0xf] %v540
      %573 = vst [vmem:[%s231 + $0xc0] sm:$0xf] %v541
      %574 = vst [vmem:[%s231 + $0xd0] sm:$0xf] %v542
      %575 = vst [vmem:[%s231 + $0xe0] sm:$0xf] %v543
      %576 = vst [vmem:[%s231 + $0xf0] sm:$0xf] %v544
      %577 = vst [vmem:[%s231 + $0x100] sm:$0xf] %v545
      %578 = vst [vmem:[%s231 + $0x110] sm:$0xf] %v546
      %579 = vst [vmem:[%s231 + $0x120] sm:$0xf] %v547
      %580 = vst [vmem:[%s231 + $0x130] sm:$0xf] %v548
      %581 = vst [vmem:[%s231 + $0x140] sm:$0xf] %v549
      %582 = vst [vmem:[%s231 + $0x150] sm:$0xf] %v550
      %583 = vst [vmem:[%s231 + $0x160] sm:$0xf] %v551
      %584 = vst [vmem:[%s231 + $0x170] sm:$0xf] %v552
      %585 = vst [vmem:[%s231 + $0x180] sm:$0xf] %v553
      %586 = vst [vmem:[%s231 + $0x190] sm:$0xf] %v554
      %587 = vst [vmem:[%s231 + $0x1a0] sm:$0xf] %v555
      %588 = vst [vmem:[%s231 + $0x1b0] sm:$0xf] %v556
      %589 = vst [vmem:[%s231 + $0x1c0] sm:$0xf] %v557
      %590 = vst [vmem:[%s231 + $0x1d0] sm:$0xf] %v558
      %591 = vst [vmem:[%s231 + $0x1e0] sm:$0xf] %v559
      %592 = vst [vmem:[%s231 + $0x1f0] sm:$0xf] %v560
      %593 = vst [vmem:[#allocation2] sm:$0xff] -inf
      %594 = vst [vmem:[#allocation2 + $0x8] sm:$0xff] -inf
      %595 = vst [vmem:[#allocation2 + $0x10] sm:$0xf] -inf
      %596 = vst [vmem:[#allocation2 + $0x18] sm:$0xff] -inf
      %597 = vst [vmem:[#allocation2 + $0x20] sm:$0xff] -inf
      %598 = vst [vmem:[#allocation2 + $0x28] sm:$0xf] -inf
      %599 = vst [vmem:[#allocation2 + $0x30] sm:$0xff] -inf
      %600 = vst [vmem:[#allocation2 + $0x38] sm:$0xff] -inf
      %601 = vst [vmem:[#allocation2 + $0x40] sm:$0xf] -inf
      %602 = vst [vmem:[#allocation2 + $0x48] sm:$0xff] -inf
      %603 = vst [vmem:[#allocation2 + $0x50] sm:$0xff] -inf
      %604 = vst [vmem:[#allocation2 + $0x58] sm:$0xf] -inf
      %605 = vst [vmem:[#allocation2 + $0x60] sm:$0xff] -inf
      %606 = vst [vmem:[#allocation2 + $0x68] sm:$0xff] -inf
      %607 = vst [vmem:[#allocation2 + $0x70] sm:$0xf] -inf
      %608 = vst [vmem:[#allocation2 + $0x78] sm:$0xff] -inf
      %609 = vst [vmem:[#allocation2 + $0x80] sm:$0xff] -inf
      %610 = vst [vmem:[#allocation2 + $0x88] sm:$0xf] -inf
      %611 = vst [vmem:[#allocation2 + $0x90] sm:$0xff] -inf
      %612 = vst [vmem:[#allocation2 + $0x98] sm:$0xff] -inf
      %613 = vst [vmem:[#allocation2 + $0xa0] sm:$0xf] -inf
      %614 = vst [vmem:[#allocation2 + $0xa8] sm:$0xff] -inf
      %615 = vst [vmem:[#allocation2 + $0xb0] sm:$0xff] -inf
      %616 = vst [vmem:[#allocation2 + $0xb8] sm:$0xf] -inf
      %617 = vst [vmem:[#allocation2 + $0xc0] sm:$0xff] -inf
      %618 = vst [vmem:[#allocation2 + $0xc8] sm:$0xff] -inf
      %619 = vst [vmem:[#allocation2 + $0xd0] sm:$0xf] -inf
      %620 = vst [vmem:[#allocation2 + $0xd8] sm:$0xff] -inf
      %621 = vst [vmem:[#allocation2 + $0xe0] sm:$0xff] -inf
      %622 = vst [vmem:[#allocation2 + $0xe8] sm:$0xf] -inf
      %623 = vst [vmem:[#allocation2 + $0xf0] sm:$0xff] -inf
      %624 = vst [vmem:[#allocation2 + $0xf8] sm:$0xff] -inf
      %625 = vst [vmem:[#allocation2 + $0x100] sm:$0xf] -inf
      %626 = vst [vmem:[#allocation2 + $0x108] sm:$0xff] -inf
      %627 = vst [vmem:[#allocation2 + $0x110] sm:$0xff] -inf
      %628 = vst [vmem:[#allocation2 + $0x118] sm:$0xf] -inf
      %629 = vst [vmem:[#allocation2 + $0x120] sm:$0xff] -inf
      %630 = vst [vmem:[#allocation2 + $0x128] sm:$0xff] -inf
      %631 = vst [vmem:[#allocation2 + $0x130] sm:$0xf] -inf
      %632 = vst [vmem:[#allocation2 + $0x138] sm:$0xff] -inf
      %633 = vst [vmem:[#allocation2 + $0x140] sm:$0xff] -inf
      %634 = vst [vmem:[#allocation2 + $0x148] sm:$0xf] -inf
      %635 = vst [vmem:[#allocation2 + $0x150] sm:$0xff] -inf
      %636 = vst [vmem:[#allocation2 + $0x158] sm:$0xff] -inf
      %637 = vst [vmem:[#allocation2 + $0x160] sm:$0xf] -inf
      %638 = vst [vmem:[#allocation2 + $0x168] sm:$0xff] -inf
      %639 = vst [vmem:[#allocation2 + $0x170] sm:$0xff] -inf
      %640 = vst [vmem:[#allocation2 + $0x178] sm:$0xf] -inf
      %641 = vst [vmem:[#allocation2 + $0x180] sm:$0xff] -inf
      %642 = vst [vmem:[#allocation2 + $0x188] sm:$0xff] -inf
      %643 = vst [vmem:[#allocation2 + $0x190] sm:$0xf] -inf
      %644 = vst [vmem:[#allocation2 + $0x198] sm:$0xff] -inf
      %645 = vst [vmem:[#allocation2 + $0x1a0] sm:$0xff] -inf
      %646 = vst [vmem:[#allocation2 + $0x1a8] sm:$0xf] -inf
      %647 = vst [vmem:[#allocation2 + $0x1b0] sm:$0xff] -inf
      %648 = vst [vmem:[#allocation2 + $0x1b8] sm:$0xff] -inf
      %649 = vst [vmem:[#allocation2 + $0x1c0] sm:$0xf] -inf
      %650 = vst [vmem:[#allocation2 + $0x1c8] sm:$0xff] -inf
      %651 = vst [vmem:[#allocation2 + $0x1d0] sm:$0xff] -inf
      %652 = vst [vmem:[#allocation2 + $0x1d8] sm:$0xf] -inf
      %s653 = scalar_lea.vmem [#allocation2], 48
      %654 = vst [vmem:[%s653 + $0x2] sm:$0xff] %v497
      %655 = vst [vmem:[%s653 + $0xa] sm:$0xff] %v498
      %656 = vst [vmem:[%s653 + $0x1a] sm:$0xff] %v499
      %657 = vst [vmem:[%s653 + $0x22] sm:$0xff] %v500
      %658 = vst [vmem:[%s653 + $0x32] sm:$0xff] %v501
      %659 = vst [vmem:[%s653 + $0x3a] sm:$0xff] %v502
      %660 = vst [vmem:[%s653 + $0x4a] sm:$0xff] %v503
      %661 = vst [vmem:[%s653 + $0x52] sm:$0xff] %v504
      %662 = vst [vmem:[%s653 + $0x62] sm:$0xff] %v505
      %663 = vst [vmem:[%s653 + $0x6a] sm:$0xff] %v506
      %664 = vst [vmem:[%s653 + $0x7a] sm:$0xff] %v507
      %665 = vst [vmem:[%s653 + $0x82] sm:$0xff] %v508
      %666 = vst [vmem:[%s653 + $0x92] sm:$0xff] %v509
      %667 = vst [vmem:[%s653 + $0x9a] sm:$0xff] %v510
      %668 = vst [vmem:[%s653 + $0xaa] sm:$0xff] %v511
      %669 = vst [vmem:[%s653 + $0xb2] sm:$0xff] %v512
      %670 = vst [vmem:[%s653 + $0xc2] sm:$0xff] %v513
      %671 = vst [vmem:[%s653 + $0xca] sm:$0xff] %v514
      %672 = vst [vmem:[%s653 + $0xda] sm:$0xff] %v515
      %673 = vst [vmem:[%s653 + $0xe2] sm:$0xff] %v516
      %674 = vst [vmem:[%s653 + $0xf2] sm:$0xff] %v517
      %675 = vst [vmem:[%s653 + $0xfa] sm:$0xff] %v518
      %676 = vst [vmem:[%s653 + $0x10a] sm:$0xff] %v519
      %677 = vst [vmem:[%s653 + $0x112] sm:$0xff] %v520
      %678 = vst [vmem:[%s653 + $0x122] sm:$0xff] %v521
      %679 = vst [vmem:[%s653 + $0x12a] sm:$0xff] %v522
      %680 = vst [vmem:[%s653 + $0x13a] sm:$0xff] %v523
      %681 = vst [vmem:[%s653 + $0x142] sm:$0xff] %v524
      %682 = vst [vmem:[%s653 + $0x152] sm:$0xff] %v525
      %683 = vst [vmem:[%s653 + $0x15a] sm:$0xff] %v526
      %684 = vst [vmem:[%s653 + $0x16a] sm:$0xff] %v527
      %685 = vst [vmem:[%s653 + $0x172] sm:$0xff] %v528
      %v686 = vld [vmem:[#allocation2] sm:$0xff]
      %v687 = vld [vmem:[#allocation2 + $0x8] sm:$0xff]
      %v688 = vld [vmem:[#allocation2 + $0x10] sm:$0xf]
      %v689 = vld [vmem:[#allocation2 + $0x18] sm:$0xff]
      %v690 = vld [vmem:[#allocation2 + $0x20] sm:$0xff]
      %v691 = vld [vmem:[#allocation2 + $0x28] sm:$0xf]
      %v692 = vld [vmem:[#allocation2 + $0x30] sm:$0xff]
      %v693 = vld [vmem:[#allocation2 + $0x38] sm:$0xff]
      %v694 = vld [vmem:[#allocation2 + $0x40] sm:$0xf]
      %v695 = vld [vmem:[#allocation2 + $0x48] sm:$0xff]
      %v696 = vld [vmem:[#allocation2 + $0x50] sm:$0xff]
      %v697 = vld [vmem:[#allocation2 + $0x58] sm:$0xf]
      %v698 = vld [vmem:[#allocation2 + $0x60] sm:$0xff]
      %v699 = vld [vmem:[#allocation2 + $0x68] sm:$0xff]
      %v700 = vld [vmem:[#allocation2 + $0x70] sm:$0xf]
      %v701 = vld [vmem:[#allocation2 + $0x78] sm:$0xff]
      %v702 = vld [vmem:[#allocation2 + $0x80] sm:$0xff]
      %v703 = vld [vmem:[#allocation2 + $0x88] sm:$0xf]
      %v704 = vld [vmem:[#allocation2 + $0x90] sm:$0xff]
      %v705 = vld [vmem:[#allocation2 + $0x98] sm:$0xff]
      %v706 = vld [vmem:[#allocation2 + $0xa0] sm:$0xf]
      %v707 = vld [vmem:[#allocation2 + $0xa8] sm:$0xff]
      %v708 = vld [vmem:[#allocation2 + $0xb0] sm:$0xff]
      %v709 = vld [vmem:[#allocation2 + $0xb8] sm:$0xf]
      %v710 = vld [vmem:[#allocation2 + $0xc0] sm:$0xff]
      %v711 = vld [vmem:[#allocation2 + $0xc8] sm:$0xff]
      %v712 = vld [vmem:[#allocation2 + $0xd0] sm:$0xf]
      %v713 = vld [vmem:[#allocation2 + $0xd8] sm:$0xff]
      %v714 = vld [vmem:[#allocation2 + $0xe0] sm:$0xff]
      %v715 = vld [vmem:[#allocation2 + $0xe8] sm:$0xf]
      %v716 = vld [vmem:[#allocation2 + $0xf0] sm:$0xff]
      %v717 = vld [vmem:[#allocation2 + $0xf8] sm:$0xff]
      %v718 = vld [vmem:[#allocation2 + $0x100] sm:$0xf]
      %v719 = vld [vmem:[#allocation2 + $0x108] sm:$0xff]
      %v720 = vld [vmem:[#allocation2 + $0x110] sm:$0xff]
      %v721 = vld [vmem:[#allocation2 + $0x118] sm:$0xf]
      %v722 = vld [vmem:[#allocation2 + $0x120] sm:$0xff]
      %v723 = vld [vmem:[#allocation2 + $0x128] sm:$0xff]
      %v724 = vld [vmem:[#allocation2 + $0x130] sm:$0xf]
      %v725 = vld [vmem:[#allocation2 + $0x138] sm:$0xff]
      %v726 = vld [vmem:[#allocation2 + $0x140] sm:$0xff]
      %v727 = vld [vmem:[#allocation2 + $0x148] sm:$0xf]
      %v728 = vld [vmem:[#allocation2 + $0x150] sm:$0xff]
      %v729 = vld [vmem:[#allocation2 + $0x158] sm:$0xff]
      %v730 = vld [vmem:[#allocation2 + $0x160] sm:$0xf]
      %v731 = vld [vmem:[#allocation2 + $0x168] sm:$0xff]
      %v732 = vld [vmem:[#allocation2 + $0x170] sm:$0xff]
      %v733 = vld [vmem:[#allocation2 + $0x178] sm:$0xf]
      %v734 = vld [vmem:[#allocation2 + $0x180] sm:$0xff]
      %v735 = vld [vmem:[#allocation2 + $0x188] sm:$0xff]
      %v736 = vld [vmem:[#allocation2 + $0x190] sm:$0xf]
      %v737 = vld [vmem:[#allocation2 + $0x198] sm:$0xff]
      %v738 = vld [vmem:[#allocation2 + $0x1a0] sm:$0xff]
      %v739 = vld [vmem:[#allocation2 + $0x1a8] sm:$0xf]
      %v740 = vld [vmem:[#allocation2 + $0x1b0] sm:$0xff]
      %v741 = vld [vmem:[#allocation2 + $0x1b8] sm:$0xff]
      %v742 = vld [vmem:[#allocation2 + $0x1c0] sm:$0xf]
      %v743 = vld [vmem:[#allocation2 + $0x1c8] sm:$0xff]
      %v744 = vld [vmem:[#allocation2 + $0x1d0] sm:$0xff]
      %v745 = vld [vmem:[#allocation2 + $0x1d8] sm:$0xf]
      %v746 = vmax.f32 %v686, %v689
      %v747 = vmax.f32 %v687, %v690
      %v748 = vmax.f32 %v688, %v691
      %v749 = vmax.f32 %v689, %v692
      %v750 = vmax.f32 %v690, %v693
      %v751 = vmax.f32 %v691, %v694
      %v752 = vmax.f32 %v692, %v695
      %v753 = vmax.f32 %v693, %v696
      %v754 = vmax.f32 %v694, %v697
      %v755 = vmax.f32 %v695, %v698
      %v756 = vmax.f32 %v696, %v699
      %v757 = vmax.f32 %v697, %v700
      %v758 = vmax.f32 %v698, %v701
      %v759 = vmax.f32 %v699, %v702
      %v760 = vmax.f32 %v700, %v703
      %v761 = vmax.f32 %v701, %v704
      %v762 = vmax.f32 %v702, %v705
      %v763 = vmax.f32 %v703, %v706
      %v764 = vmax.f32 %v704, %v707
      %v765 = vmax.f32 %v705, %v708
      %v766 = vmax.f32 %v706, %v709
      %v767 = vmax.f32 %v707, %v710
      %v768 = vmax.f32 %v708, %v711
      %v769 = vmax.f32 %v709, %v712
      %v770 = vmax.f32 %v710, %v713
      %v771 = vmax.f32 %v711, %v714
      %v772 = vmax.f32 %v712, %v715
      %v773 = vmax.f32 %v713, %v716
      %v774 = vmax.f32 %v714, %v717
      %v775 = vmax.f32 %v715, %v718
      %v776 = vmax.f32 %v716, %v719
      %v777 = vmax.f32 %v717, %v720
      %v778 = vmax.f32 %v718, %v721
      %v779 = vmax.f32 %v719, %v722
      %v780 = vmax.f32 %v720, %v723
      %v781 = vmax.f32 %v721, %v724
      %v782 = vmax.f32 %v722, %v725
      %v783 = vmax.f32 %v723, %v726
      %v784 = vmax.f32 %v724, %v727
      %v785 = vmax.f32 %v725, %v728
      %v786 = vmax.f32 %v726, %v729
      %v787 = vmax.f32 %v727, %v730
      %v788 = vmax.f32 %v728, %v731
      %v789 = vmax.f32 %v729, %v732
      %v790 = vmax.f32 %v730, %v733
      %v791 = vmax.f32 %v731, %v734
      %v792 = vmax.f32 %v732, %v735
      %v793 = vmax.f32 %v733, %v736
      %v794 = vmax.f32 %v746, %v692
      %v795 = vmax.f32 %v747, %v693
      %v796 = vmax.f32 %v748, %v694
      %v797 = vmax.f32 %v749, %v695
      %v798 = vmax.f32 %v750, %v696
      %v799 = vmax.f32 %v751, %v697
      %v800 = vmax.f32 %v752, %v698
      %v801 = vmax.f32 %v753, %v699
      %v802 = vmax.f32 %v754, %v700
      %v803 = vmax.f32 %v755, %v701
      %v804 = vmax.f32 %v756, %v702
      %v805 = vmax.f32 %v757, %v703
      %v806 = vmax.f32 %v758, %v704
      %v807 = vmax.f32 %v759, %v705
      %v808 = vmax.f32 %v760, %v706
      %v809 = vmax.f32 %v761, %v707
      %v810 = vmax.f32 %v762, %v708
      %v811 = vmax.f32 %v763, %v709
      %v812 = vmax.f32 %v764, %v710
      %v813 = vmax.f32 %v765, %v711
      %v814 = vmax.f32 %v766, %v712
      %v815 = vmax.f32 %v767, %v713
      %v816 = vmax.f32 %v768, %v714
      %v817 = vmax.f32 %v769, %v715
      %v818 = vmax.f32 %v770, %v716
      %v819 = vmax.f32 %v771, %v717
      %v820 = vmax.f32 %v772, %v718
      %v821 = vmax.f32 %v773, %v719
      %v822 = vmax.f32 %v774, %v720
      %v823 = vmax.f32 %v775, %v721
      %v824 = vmax.f32 %v776, %v722
      %v825 = vmax.f32 %v777, %v723
      %v826 = vmax.f32 %v778, %v724
      %v827 = vmax.f32 %v779, %v725
      %v828 = vmax.f32 %v780, %v726
      %v829 = vmax.f32 %v781, %v727
      %v830 = vmax.f32 %v782, %v728
      %v831 = vmax.f32 %v783, %v729
      %v832 = vmax.f32 %v784, %v730
      %v833 = vmax.f32 %v785, %v731
      %v834 = vmax.f32 %v786, %v732
      %v835 = vmax.f32 %v787, %v733
      %v836 = vmax.f32 %v788, %v734
      %v837 = vmax.f32 %v789, %v735
      %v838 = vmax.f32 %v790, %v736
      %v839 = vmax.f32 %v791, %v737
      %v840 = vmax.f32 %v792, %v738
      %v841 = vmax.f32 %v793, %v739
      %v842 = vmax.f32 %v794, %v695
      %v843 = vmax.f32 %v795, %v696
      %v844 = vmax.f32 %v796, %v697
      %v845 = vmax.f32 %v797, %v698
      %v846 = vmax.f32 %v798, %v699
      %v847 = vmax.f32 %v799, %v700
      %v848 = vmax.f32 %v800, %v701
      %v849 = vmax.f32 %v801, %v702
      %v850 = vmax.f32 %v802, %v703
      %v851 = vmax.f32 %v803, %v704
      %v852 = vmax.f32 %v804, %v705
      %v853 = vmax.f32 %v805, %v706
      %v854 = vmax.f32 %v806, %v707
      %v855 = vmax.f32 %v807, %v708
      %v856 = vmax.f32 %v808, %v709
      %v857 = vmax.f32 %v809, %v710
      %v858 = vmax.f32 %v810, %v711
      %v859 = vmax.f32 %v811, %v712
      %v860 = vmax.f32 %v812, %v713
      %v861 = vmax.f32 %v813, %v714
      %v862 = vmax.f32 %v814, %v715
      %v863 = vmax.f32 %v815, %v716
      %v864 = vmax.f32 %v816, %v717
      %v865 = vmax.f32 %v817, %v718
      %v866 = vmax.f32 %v818, %v719
      %v867 = vmax.f32 %v819, %v720
      %v868 = vmax.f32 %v820, %v721
      %v869 = vmax.f32 %v821, %v722
      %v870 = vmax.f32 %v822, %v723
      %v871 = vmax.f32 %v823, %v724
      %v872 = vmax.f32 %v824, %v725
      %v873 = vmax.f32 %v825, %v726
      %v874 = vmax.f32 %v826, %v727
      %v875 = vmax.f32 %v827, %v728
      %v876 = vmax.f32 %v828, %v729
      %v877 = vmax.f32 %v829, %v730
      %v878 = vmax.f32 %v830, %v731
      %v879 = vmax.f32 %v831, %v732
      %v880 = vmax.f32 %v832, %v733
      %v881 = vmax.f32 %v833, %v734
      %v882 = vmax.f32 %v834, %v735
      %v883 = vmax.f32 %v835, %v736
      %v884 = vmax.f32 %v836, %v737
      %v885 = vmax.f32 %v837, %v738
      %v886 = vmax.f32 %v838, %v739
      %v887 = vmax.f32 %v839, %v740
      %v888 = vmax.f32 %v840, %v741
      %v889 = vmax.f32 %v841, %v742
      %v890 = vmax.f32 %v842, %v698
      %v891 = vmax.f32 %v843, %v699
      %v892 = vmax.f32 %v844, %v700
      %v893 = vmax.f32 %v845, %v701
      %v894 = vmax.f32 %v846, %v702
      %v895 = vmax.f32 %v847, %v703
      %v896 = vmax.f32 %v848, %v704
      %v897 = vmax.f32 %v849, %v705
      %v898 = vmax.f32 %v850, %v706
      %v899 = vmax.f32 %v851, %v707
      %v900 = vmax.f32 %v852, %v708
      %v901 = vmax.f32 %v853, %v709
      %v902 = vmax.f32 %v854, %v710
      %v903 = vmax.f32 %v855, %v711
      %v904 = vmax.f32 %v856, %v712
      %v905 = vmax.f32 %v857, %v713
      %v906 = vmax.f32 %v858, %v714
      %v907 = vmax.f32 %v859, %v715
      %v908 = vmax.f32 %v860, %v716
      %v909 = vmax.f32 %v861, %v717
      %v910 = vmax.f32 %v862, %v718
      %v911 = vmax.f32 %v863, %v719
      %v912 = vmax.f32 %v864, %v720
      %v913 = vmax.f32 %v865, %v721
      %v914 = vmax.f32 %v866, %v722
      %v915 = vmax.f32 %v867, %v723
      %v916 = vmax.f32 %v868, %v724
      %v917 = vmax.f32 %v869, %v725
      %v918 = vmax.f32 %v870, %v726
      %v919 = vmax.f32 %v871, %v727
      %v920 = vmax.f32 %v872, %v728
      %v921 = vmax.f32 %v873, %v729
      %v922 = vmax.f32 %v874, %v730
      %v923 = vmax.f32 %v875, %v731
      %v924 = vmax.f32 %v876, %v732
      %v925 = vmax.f32 %v877, %v733
      %v926 = vmax.f32 %v878, %v734
      %v927 = vmax.f32 %v879, %v735
      %v928 = vmax.f32 %v880, %v736
      %v929 = vmax.f32 %v881, %v737
      %v930 = vmax.f32 %v882, %v738
      %v931 = vmax.f32 %v883, %v739
      %v932 = vmax.f32 %v884, %v740
      %v933 = vmax.f32 %v885, %v741
      %v934 = vmax.f32 %v886, %v742
      %v935 = vmax.f32 %v887, %v743
      %v936 = vmax.f32 %v888, %v744
      %v937 = vmax.f32 %v889, %v745
      %vm986 = vcmask 1046528
      %v987 = vrot.slane %v890, 1
      %v988 = vrot.slane %v891, 1
      %v989 = vsel %vm986, %v987, %v988
      %v990 = vrot.slane %v892, 1
      %v991 = vsel %vm986, %v988, %v990
      %v992 = vrot.slane %v893, 1
      %v993 = vrot.slane %v894, 1
      %v994 = vsel %vm986, %v992, %v993
      %v995 = vrot.slane %v895, 1
      %v996 = vsel %vm986, %v993, %v995
      %v997 = vrot.slane %v896, 1
      %v998 = vrot.slane %v897, 1
      %v999 = vsel %vm986, %v997, %v998
      %v1000 = vrot.slane %v898, 1
      %v1001 = vsel %vm986, %v998, %v1000
      %v1002 = vrot.slane %v899, 1
      %v1003 = vrot.slane %v900, 1
      %v1004 = vsel %vm986, %v1002, %v1003
      %v1005 = vrot.slane %v901, 1
      %v1006 = vsel %vm986, %v1003, %v1005
      %v1007 = vrot.slane %v902, 1
      %v1008 = vrot.slane %v903, 1
      %v1009 = vsel %vm986, %v1007, %v1008
      %v1010 = vrot.slane %v904, 1
      %v1011 = vsel %vm986, %v1008, %v1010
      %v1012 = vrot.slane %v905, 1
      %v1013 = vrot.slane %v906, 1
      %v1014 = vsel %vm986, %v1012, %v1013
      %v1015 = vrot.slane %v907, 1
      %v1016 = vsel %vm986, %v1013, %v1015
      %v1017 = vrot.slane %v908, 1
      %v1018 = vrot.slane %v909, 1
      %v1019 = vsel %vm986, %v1017, %v1018
      %v1020 = vrot.slane %v910, 1
      %v1021 = vsel %vm986, %v1018, %v1020
      %v1022 = vrot.slane %v911, 1
      %v1023 = vrot.slane %v912, 1
      %v1024 = vsel %vm986, %v1022, %v1023
      %v1025 = vrot.slane %v913, 1
      %v1026 = vsel %vm986, %v1023, %v1025
      %v1027 = vrot.slane %v914, 1
      %v1028 = vrot.slane %v915, 1
      %v1029 = vsel %vm986, %v1027, %v1028
      %v1030 = vrot.slane %v916, 1
      %v1031 = vsel %vm986, %v1028, %v1030
      %v1032 = vrot.slane %v917, 1
      %v1033 = vrot.slane %v918, 1
      %v1034 = vsel %vm986, %v1032, %v1033
      %v1035 = vrot.slane %v919, 1
      %v1036 = vsel %vm986, %v1033, %v1035
      %v1037 = vrot.slane %v920, 1
      %v1038 = vrot.slane %v921, 1
      %v1039 = vsel %vm986, %v1037, %v1038
      %v1040 = vrot.slane %v922, 1
      %v1041 = vsel %vm986, %v1038, %v1040
      %v1042 = vrot.slane %v923, 1
      %v1043 = vrot.slane %v924, 1
      %v1044 = vsel %vm986, %v1042, %v1043
      %v1045 = vrot.slane %v925, 1
      %v1046 = vsel %vm986, %v1043, %v1045
      %v1047 = vrot.slane %v926, 1
      %v1048 = vrot.slane %v927, 1
      %v1049 = vsel %vm986, %v1047, %v1048
      %v1050 = vrot.slane %v928, 1
      %v1051 = vsel %vm986, %v1048, %v1050
      %v1052 = vrot.slane %v929, 1
      %v1053 = vrot.slane %v930, 1
      %v1054 = vsel %vm986, %v1052, %v1053
      %v1055 = vrot.slane %v931, 1
      %v1056 = vsel %vm986, %v1053, %v1055
      %v1057 = vrot.slane %v932, 1
      %v1058 = vrot.slane %v933, 1
      %v1059 = vsel %vm986, %v1057, %v1058
      %v1060 = vrot.slane %v934, 1
      %v1061 = vsel %vm986, %v1058, %v1060
      %v1062 = vrot.slane %v935, 1
      %v1063 = vrot.slane %v936, 1
      %v1064 = vsel %vm986, %v1062, %v1063
      %v1065 = vrot.slane %v937, 1
      %v1066 = vsel %vm986, %v1063, %v1065
      %v1099 = vmax.f32 %v890, %v989
      %v1100 = vmax.f32 %v891, %v991
      %v1101 = vmax.f32 %v893, %v994
      %v1102 = vmax.f32 %v894, %v996
      %v1103 = vmax.f32 %v896, %v999
      %v1104 = vmax.f32 %v897, %v1001
      %v1105 = vmax.f32 %v899, %v1004
      %v1106 = vmax.f32 %v900, %v1006
      %v1107 = vmax.f32 %v902, %v1009
      %v1108 = vmax.f32 %v903, %v1011
      %v1109 = vmax.f32 %v905, %v1014
      %v1110 = vmax.f32 %v906, %v1016
      %v1111 = vmax.f32 %v908, %v1019
      %v1112 = vmax.f32 %v909, %v1021
      %v1113 = vmax.f32 %v911, %v1024
      %v1114 = vmax.f32 %v912, %v1026
      %v1115 = vmax.f32 %v914, %v1029
      %v1116 = vmax.f32 %v915, %v1031
      %v1117 = vmax.f32 %v917, %v1034
      %v1118 = vmax.f32 %v918, %v1036
      %v1119 = vmax.f32 %v920, %v1039
      %v1120 = vmax.f32 %v921, %v1041
      %v1121 = vmax.f32 %v923, %v1044
      %v1122 = vmax.f32 %v924, %v1046
      %v1123 = vmax.f32 %v926, %v1049
      %v1124 = vmax.f32 %v927, %v1051
      %v1125 = vmax.f32 %v929, %v1054
      %v1126 = vmax.f32 %v930, %v1056
      %v1127 = vmax.f32 %v932, %v1059
      %v1128 = vmax.f32 %v933, %v1061
      %v1129 = vmax.f32 %v935, %v1064
      %v1130 = vmax.f32 %v936, %v1066
      %vm1131 = vcmask 1045504
      %v1132 = vrot.slane %v890, 2
      %v1133 = vrot.slane %v891, 2
      %v1134 = vsel %vm1131, %v1132, %v1133
      %v1135 = vrot.slane %v892, 2
      %v1136 = vsel %vm1131, %v1133, %v1135
      %v1137 = vrot.slane %v893, 2
      %v1138 = vrot.slane %v894, 2
      %v1139 = vsel %vm1131, %v1137, %v1138
      %v1140 = vrot.slane %v895, 2
      %v1141 = vsel %vm1131, %v1138, %v1140
      %v1142 = vrot.slane %v896, 2
      %v1143 = vrot.slane %v897, 2
      %v1144 = vsel %vm1131, %v1142, %v1143
      %v1145 = vrot.slane %v898, 2
      %v1146 = vsel %vm1131, %v1143, %v1145
      %v1147 = vrot.slane %v899, 2
      %v1148 = vrot.slane %v900, 2
      %v1149 = vsel %vm1131, %v1147, %v1148
      %v1150 = vrot.slane %v901, 2
      %v1151 = vsel %vm1131, %v1148, %v1150
      %v1152 = vrot.slane %v902, 2
      %v1153 = vrot.slane %v903, 2
      %v1154 = vsel %vm1131, %v1152, %v1153
      %v1155 = vrot.slane %v904, 2
      %v1156 = vsel %vm1131, %v1153, %v1155
      %v1157 = vrot.slane %v905, 2
      %v1158 = vrot.slane %v906, 2
      %v1159 = vsel %vm1131, %v1157, %v1158
      %v1160 = vrot.slane %v907, 2
      %v1161 = vsel %vm1131, %v1158, %v1160
      %v1162 = vrot.slane %v908, 2
      %v1163 = vrot.slane %v909, 2
      %v1164 = vsel %vm1131, %v1162, %v1163
      %v1165 = vrot.slane %v910, 2
      %v1166 = vsel %vm1131, %v1163, %v1165
      %v1167 = vrot.slane %v911, 2
      %v1168 = vrot.slane %v912, 2
      %v1169 = vsel %vm1131, %v1167, %v1168
      %v1170 = vrot.slane %v913, 2
      %v1171 = vsel %vm1131, %v1168, %v1170
      %v1172 = vrot.slane %v914, 2
      %v1173 = vrot.slane %v915, 2
      %v1174 = vsel %vm1131, %v1172, %v1173
      %v1175 = vrot.slane %v916, 2
      %v1176 = vsel %vm1131, %v1173, %v1175
      %v1177 = vrot.slane %v917, 2
      %v1178 = vrot.slane %v918, 2
      %v1179 = vsel %vm1131, %v1177, %v1178
      %v1180 = vrot.slane %v919, 2
      %v1181 = vsel %vm1131, %v1178, %v1180
      %v1182 = vrot.slane %v920, 2
      %v1183 = vrot.slane %v921, 2
      %v1184 = vsel %vm1131, %v1182, %v1183
      %v1185 = vrot.slane %v922, 2
      %v1186 = vsel %vm1131, %v1183, %v1185
      %v1187 = vrot.slane %v923, 2
      %v1188 = vrot.slane %v924, 2
      %v1189 = vsel %vm1131, %v1187, %v1188
      %v1190 = vrot.slane %v925, 2
      %v1191 = vsel %vm1131, %v1188, %v1190
      %v1192 = vrot.slane %v926, 2
      %v1193 = vrot.slane %v927, 2
      %v1194 = vsel %vm1131, %v1192, %v1193
      %v1195 = vrot.slane %v928, 2
      %v1196 = vsel %vm1131, %v1193, %v1195
      %v1197 = vrot.slane %v929, 2
      %v1198 = vrot.slane %v930, 2
      %v1199 = vsel %vm1131, %v1197, %v1198
      %v1200 = vrot.slane %v931, 2
      %v1201 = vsel %vm1131, %v1198, %v1200
      %v1202 = vrot.slane %v932, 2
      %v1203 = vrot.slane %v933, 2
      %v1204 = vsel %vm1131, %v1202, %v1203
      %v1205 = vrot.slane %v934, 2
      %v1206 = vsel %vm1131, %v1203, %v1205
      %v1207 = vrot.slane %v935, 2
      %v1208 = vrot.slane %v936, 2
      %v1209 = vsel %vm1131, %v1207, %v1208
      %v1210 = vrot.slane %v937, 2
      %v1211 = vsel %vm1131, %v1208, %v1210
      %v1244 = vmax.f32 %v1099, %v1134
      %v1245 = vmax.f32 %v1100, %v1136
      %v1246 = vmax.f32 %v1101, %v1139
      %v1247 = vmax.f32 %v1102, %v1141
      %v1248 = vmax.f32 %v1103, %v1144
      %v1249 = vmax.f32 %v1104, %v1146
      %v1250 = vmax.f32 %v1105, %v1149
      %v1251 = vmax.f32 %v1106, %v1151
      %v1252 = vmax.f32 %v1107, %v1154
      %v1253 = vmax.f32 %v1108, %v1156
      %v1254 = vmax.f32 %v1109, %v1159
      %v1255 = vmax.f32 %v1110, %v1161
      %v1256 = vmax.f32 %v1111, %v1164
      %v1257 = vmax.f32 %v1112, %v1166
      %v1258 = vmax.f32 %v1113, %v1169
      %v1259 = vmax.f32 %v1114, %v1171
      %v1260 = vmax.f32 %v1115, %v1174
      %v1261 = vmax.f32 %v1116, %v1176
      %v1262 = vmax.f32 %v1117, %v1179
      %v1263 = vmax.f32 %v1118, %v1181
      %v1264 = vmax.f32 %v1119, %v1184
      %v1265 = vmax.f32 %v1120, %v1186
      %v1266 = vmax.f32 %v1121, %v1189
      %v1267 = vmax.f32 %v1122, %v1191
      %v1268 = vmax.f32 %v1123, %v1194
      %v1269 = vmax.f32 %v1124, %v1196
      %v1270 = vmax.f32 %v1125, %v1199
      %v1271 = vmax.f32 %v1126, %v1201
      %v1272 = vmax.f32 %v1127, %v1204
      %v1273 = vmax.f32 %v1128, %v1206
      %v1274 = vmax.f32 %v1129, %v1209
      %v1275 = vmax.f32 %v1130, %v1211
      %vm1276 = vcmask 1044480
      %v1277 = vrot.slane %v890, 3
      %v1278 = vrot.slane %v891, 3
      %v1279 = vsel %vm1276, %v1277, %v1278
      %v1280 = vrot.slane %v892, 3
      %v1281 = vsel %vm1276, %v1278, %v1280
      %v1282 = vrot.slane %v893, 3
      %v1283 = vrot.slane %v894, 3
      %v1284 = vsel %vm1276, %v1282, %v1283
      %v1285 = vrot.slane %v895, 3
      %v1286 = vsel %vm1276, %v1283, %v1285
      %v1287 = vrot.slane %v896, 3
      %v1288 = vrot.slane %v897, 3
      %v1289 = vsel %vm1276, %v1287, %v1288
      %v1290 = vrot.slane %v898, 3
      %v1291 = vsel %vm1276, %v1288, %v1290
      %v1292 = vrot.slane %v899, 3
      %v1293 = vrot.slane %v900, 3
      %v1294 = vsel %vm1276, %v1292, %v1293
      %v1295 = vrot.slane %v901, 3
      %v1296 = vsel %vm1276, %v1293, %v1295
      %v1297 = vrot.slane %v902, 3
      %v1298 = vrot.slane %v903, 3
      %v1299 = vsel %vm1276, %v1297, %v1298
      %v1300 = vrot.slane %v904, 3
      %v1301 = vsel %vm1276, %v1298, %v1300
      %v1302 = vrot.slane %v905, 3
      %v1303 = vrot.slane %v906, 3
      %v1304 = vsel %vm1276, %v1302, %v1303
      %v1305 = vrot.slane %v907, 3
      %v1306 = vsel %vm1276, %v1303, %v1305
      %v1307 = vrot.slane %v908, 3
      %v1308 = vrot.slane %v909, 3
      %v1309 = vsel %vm1276, %v1307, %v1308
      %v1310 = vrot.slane %v910, 3
      %v1311 = vsel %vm1276, %v1308, %v1310
      %v1312 = vrot.slane %v911, 3
      %v1313 = vrot.slane %v912, 3
      %v1314 = vsel %vm1276, %v1312, %v1313
      %v1315 = vrot.slane %v913, 3
      %v1316 = vsel %vm1276, %v1313, %v1315
      %v1317 = vrot.slane %v914, 3
      %v1318 = vrot.slane %v915, 3
      %v1319 = vsel %vm1276, %v1317, %v1318
      %v1320 = vrot.slane %v916, 3
      %v1321 = vsel %vm1276, %v1318, %v1320
      %v1322 = vrot.slane %v917, 3
      %v1323 = vrot.slane %v918, 3
      %v1324 = vsel %vm1276, %v1322, %v1323
      %v1325 = vrot.slane %v919, 3
      %v1326 = vsel %vm1276, %v1323, %v1325
      %v1327 = vrot.slane %v920, 3
      %v1328 = vrot.slane %v921, 3
      %v1329 = vsel %vm1276, %v1327, %v1328
      %v1330 = vrot.slane %v922, 3
      %v1331 = vsel %vm1276, %v1328, %v1330
      %v1332 = vrot.slane %v923, 3
      %v1333 = vrot.slane %v924, 3
      %v1334 = vsel %vm1276, %v1332, %v1333
      %v1335 = vrot.slane %v925, 3
      %v1336 = vsel %vm1276, %v1333, %v1335
      %v1337 = vrot.slane %v926, 3
      %v1338 = vrot.slane %v927, 3
      %v1339 = vsel %vm1276, %v1337, %v1338
      %v1340 = vrot.slane %v928, 3
      %v1341 = vsel %vm1276, %v1338, %v1340
      %v1342 = vrot.slane %v929, 3
      %v1343 = vrot.slane %v930, 3
      %v1344 = vsel %vm1276, %v1342, %v1343
      %v1345 = vrot.slane %v931, 3
      %v1346 = vsel %vm1276, %v1343, %v1345
      %v1347 = vrot.slane %v932, 3
      %v1348 = vrot.slane %v933, 3
      %v1349 = vsel %vm1276, %v1347, %v1348
      %v1350 = vrot.slane %v934, 3
      %v1351 = vsel %vm1276, %v1348, %v1350
      %v1352 = vrot.slane %v935, 3
      %v1353 = vrot.slane %v936, 3
      %v1354 = vsel %vm1276, %v1352, %v1353
      %v1355 = vrot.slane %v937, 3
      %v1356 = vsel %vm1276, %v1353, %v1355
      %v1389 = vmax.f32 %v1244, %v1279
      %v1390 = vmax.f32 %v1245, %v1281
      %v1391 = vmax.f32 %v1246, %v1284
      %v1392 = vmax.f32 %v1247, %v1286
      %v1393 = vmax.f32 %v1248, %v1289
      %v1394 = vmax.f32 %v1249, %v1291
      %v1395 = vmax.f32 %v1250, %v1294
      %v1396 = vmax.f32 %v1251, %v1296
      %v1397 = vmax.f32 %v1252, %v1299
      %v1398 = vmax.f32 %v1253, %v1301
      %v1399 = vmax.f32 %v1254, %v1304
      %v1400 = vmax.f32 %v1255, %v1306
      %v1401 = vmax.f32 %v1256, %v1309
      %v1402 = vmax.f32 %v1257, %v1311
      %v1403 = vmax.f32 %v1258, %v1314
      %v1404 = vmax.f32 %v1259, %v1316
      %v1405 = vmax.f32 %v1260, %v1319
      %v1406 = vmax.f32 %v1261, %v1321
      %v1407 = vmax.f32 %v1262, %v1324
      %v1408 = vmax.f32 %v1263, %v1326
      %v1409 = vmax.f32 %v1264, %v1329
      %v1410 = vmax.f32 %v1265, %v1331
      %v1411 = vmax.f32 %v1266, %v1334
      %v1412 = vmax.f32 %v1267, %v1336
      %v1413 = vmax.f32 %v1268, %v1339
      %v1414 = vmax.f32 %v1269, %v1341
      %v1415 = vmax.f32 %v1270, %v1344
      %v1416 = vmax.f32 %v1271, %v1346
      %v1417 = vmax.f32 %v1272, %v1349
      %v1418 = vmax.f32 %v1273, %v1351
      %v1419 = vmax.f32 %v1274, %v1354
      %v1420 = vmax.f32 %v1275, %v1356
      %vm1421 = vcmask 1043456
      %v1422 = vrot.slane %v890, 4
      %v1423 = vrot.slane %v891, 4
      %v1424 = vsel %vm1421, %v1422, %v1423
      %v1425 = vrot.slane %v892, 4
      %v1426 = vsel %vm1421, %v1423, %v1425
      %v1427 = vrot.slane %v893, 4
      %v1428 = vrot.slane %v894, 4
      %v1429 = vsel %vm1421, %v1427, %v1428
      %v1430 = vrot.slane %v895, 4
      %v1431 = vsel %vm1421, %v1428, %v1430
      %v1432 = vrot.slane %v896, 4
      %v1433 = vrot.slane %v897, 4
      %v1434 = vsel %vm1421, %v1432, %v1433
      %v1435 = vrot.slane %v898, 4
      %v1436 = vsel %vm1421, %v1433, %v1435
      %v1437 = vrot.slane %v899, 4
      %v1438 = vrot.slane %v900, 4
      %v1439 = vsel %vm1421, %v1437, %v1438
      %v1440 = vrot.slane %v901, 4
      %v1441 = vsel %vm1421, %v1438, %v1440
      %v1442 = vrot.slane %v902, 4
      %v1443 = vrot.slane %v903, 4
      %v1444 = vsel %vm1421, %v1442, %v1443
      %v1445 = vrot.slane %v904, 4
      %v1446 = vsel %vm1421, %v1443, %v1445
      %v1447 = vrot.slane %v905, 4
      %v1448 = vrot.slane %v906, 4
      %v1449 = vsel %vm1421, %v1447, %v1448
      %v1450 = vrot.slane %v907, 4
      %v1451 = vsel %vm1421, %v1448, %v1450
      %v1452 = vrot.slane %v908, 4
      %v1453 = vrot.slane %v909, 4
      %v1454 = vsel %vm1421, %v1452, %v1453
      %v1455 = vrot.slane %v910, 4
      %v1456 = vsel %vm1421, %v1453, %v1455
      %v1457 = vrot.slane %v911, 4
      %v1458 = vrot.slane %v912, 4
      %v1459 = vsel %vm1421, %v1457, %v1458
      %v1460 = vrot.slane %v913, 4
      %v1461 = vsel %vm1421, %v1458, %v1460
      %v1462 = vrot.slane %v914, 4
      %v1463 = vrot.slane %v915, 4
      %v1464 = vsel %vm1421, %v1462, %v1463
      %v1465 = vrot.slane %v916, 4
      %v1466 = vsel %vm1421, %v1463, %v1465
      %v1467 = vrot.slane %v917, 4
      %v1468 = vrot.slane %v918, 4
      %v1469 = vsel %vm1421, %v1467, %v1468
      %v1470 = vrot.slane %v919, 4
      %v1471 = vsel %vm1421, %v1468, %v1470
      %v1472 = vrot.slane %v920, 4
      %v1473 = vrot.slane %v921, 4
      %v1474 = vsel %vm1421, %v1472, %v1473
      %v1475 = vrot.slane %v922, 4
      %v1476 = vsel %vm1421, %v1473, %v1475
      %v1477 = vrot.slane %v923, 4
      %v1478 = vrot.slane %v924, 4
      %v1479 = vsel %vm1421, %v1477, %v1478
      %v1480 = vrot.slane %v925, 4
      %v1481 = vsel %vm1421, %v1478, %v1480
      %v1482 = vrot.slane %v926, 4
      %v1483 = vrot.slane %v927, 4
      %v1484 = vsel %vm1421, %v1482, %v1483
      %v1485 = vrot.slane %v928, 4
      %v1486 = vsel %vm1421, %v1483, %v1485
      %v1487 = vrot.slane %v929, 4
      %v1488 = vrot.slane %v930, 4
      %v1489 = vsel %vm1421, %v1487, %v1488
      %v1490 = vrot.slane %v931, 4
      %v1491 = vsel %vm1421, %v1488, %v1490
      %v1492 = vrot.slane %v932, 4
      %v1493 = vrot.slane %v933, 4
      %v1494 = vsel %vm1421, %v1492, %v1493
      %v1495 = vrot.slane %v934, 4
      %v1496 = vsel %vm1421, %v1493, %v1495
      %v1497 = vrot.slane %v935, 4
      %v1498 = vrot.slane %v936, 4
      %v1499 = vsel %vm1421, %v1497, %v1498
      %v1500 = vrot.slane %v937, 4
      %v1501 = vsel %vm1421, %v1498, %v1500
      %v1534 = vmax.f32 %v1389, %v1424
      %v1535 = vmax.f32 %v1390, %v1426
      %v1536 = vmax.f32 %v1391, %v1429
      %v1537 = vmax.f32 %v1392, %v1431
      %v1538 = vmax.f32 %v1393, %v1434
      %v1539 = vmax.f32 %v1394, %v1436
      %v1540 = vmax.f32 %v1395, %v1439
      %v1541 = vmax.f32 %v1396, %v1441
      %v1542 = vmax.f32 %v1397, %v1444
      %v1543 = vmax.f32 %v1398, %v1446
      %v1544 = vmax.f32 %v1399, %v1449
      %v1545 = vmax.f32 %v1400, %v1451
      %v1546 = vmax.f32 %v1401, %v1454
      %v1547 = vmax.f32 %v1402, %v1456
      %v1548 = vmax.f32 %v1403, %v1459
      %v1549 = vmax.f32 %v1404, %v1461
      %v1550 = vmax.f32 %v1405, %v1464
      %v1551 = vmax.f32 %v1406, %v1466
      %v1552 = vmax.f32 %v1407, %v1469
      %v1553 = vmax.f32 %v1408, %v1471
      %v1554 = vmax.f32 %v1409, %v1474
      %v1555 = vmax.f32 %v1410, %v1476
      %v1556 = vmax.f32 %v1411, %v1479
      %v1557 = vmax.f32 %v1412, %v1481
      %v1558 = vmax.f32 %v1413, %v1484
      %v1559 = vmax.f32 %v1414, %v1486
      %v1560 = vmax.f32 %v1415, %v1489
      %v1561 = vmax.f32 %v1416, %v1491
      %v1562 = vmax.f32 %v1417, %v1494
      %v1563 = vmax.f32 %v1418, %v1496
      %v1564 = vmax.f32 %v1419, %v1499
      %v1565 = vmax.f32 %v1420, %v1501
      %v1566 = vpack.c.bf16 %v1534, %v1534
      %v1567 = vpack.c.bf16 %v1535, %v1535
      %v1568 = vpack.c.bf16 %v1536, %v1536
      %v1569 = vpack.c.bf16 %v1537, %v1537
      %v1570 = vpack.c.bf16 %v1538, %v1538
      %v1571 = vpack.c.bf16 %v1539, %v1539
      %v1572 = vpack.c.bf16 %v1540, %v1540
      %v1573 = vpack.c.bf16 %v1541, %v1541
      %v1574 = vpack.c.bf16 %v1542, %v1542
      %v1575 = vpack.c.bf16 %v1543, %v1543
      %v1576 = vpack.c.bf16 %v1544, %v1544
      %v1577 = vpack.c.bf16 %v1545, %v1545
      %v1578 = vpack.c.bf16 %v1546, %v1546
      %v1579 = vpack.c.bf16 %v1547, %v1547
      %v1580 = vpack.c.bf16 %v1548, %v1548
      %v1581 = vpack.c.bf16 %v1549, %v1549
      %v1582 = vpack.c.bf16 %v1550, %v1550
      %v1583 = vpack.c.bf16 %v1551, %v1551
      %v1584 = vpack.c.bf16 %v1552, %v1552
      %v1585 = vpack.c.bf16 %v1553, %v1553
      %v1586 = vpack.c.bf16 %v1554, %v1554
      %v1587 = vpack.c.bf16 %v1555, %v1555
      %v1588 = vpack.c.bf16 %v1556, %v1556
      %v1589 = vpack.c.bf16 %v1557, %v1557
      %v1590 = vpack.c.bf16 %v1558, %v1558
      %v1591 = vpack.c.bf16 %v1559, %v1559
      %v1592 = vpack.c.bf16 %v1560, %v1560
      %v1593 = vpack.c.bf16 %v1561, %v1561
      %v1594 = vpack.c.bf16 %v1562, %v1562
      %v1595 = vpack.c.bf16 %v1563, %v1563
      %v1596 = vpack.c.bf16 %v1564, %v1564
      %v1597 = vpack.c.bf16 %v1565, %v1565
      %1598 = vst [vmem:[%s231 + $0x4] sm:$0xf] %v1566
      %1599 = vst [vmem:[%s231 + $0x14] sm:$0xf] %v1567
      %1600 = vst [vmem:[%s231 + $0x24] sm:$0xf] %v1568
      %1601 = vst [vmem:[%s231 + $0x34] sm:$0xf] %v1569
      %1602 = vst [vmem:[%s231 + $0x44] sm:$0xf] %v1570
      %1603 = vst [vmem:[%s231 + $0x54] sm:$0xf] %v1571
      %1604 = vst [vmem:[%s231 + $0x64] sm:$0xf] %v1572
      %1605 = vst [vmem:[%s231 + $0x74] sm:$0xf] %v1573
      %1606 = vst [vmem:[%s231 + $0x84] sm:$0xf] %v1574
      %1607 = vst [vmem:[%s231 + $0x94] sm:$0xf] %v1575
      %1608 = vst [vmem:[%s231 + $0xa4] sm:$0xf] %v1576
      %1609 = vst [vmem:[%s231 + $0xb4] sm:$0xf] %v1577
      %1610 = vst [vmem:[%s231 + $0xc4] sm:$0xf] %v1578
      %1611 = vst [vmem:[%s231 + $0xd4] sm:$0xf] %v1579
      %1612 = vst [vmem:[%s231 + $0xe4] sm:$0xf] %v1580
      %1613 = vst [vmem:[%s231 + $0xf4] sm:$0xf] %v1581
      %1614 = vst [vmem:[%s231 + $0x104] sm:$0xf] %v1582
      %1615 = vst [vmem:[%s231 + $0x114] sm:$0xf] %v1583
      %1616 = vst [vmem:[%s231 + $0x124] sm:$0xf] %v1584
      %1617 = vst [vmem:[%s231 + $0x134] sm:$0xf] %v1585
      %1618 = vst [vmem:[%s231 + $0x144] sm:$0xf] %v1586
      %1619 = vst [vmem:[%s231 + $0x154] sm:$0xf] %v1587
      %1620 = vst [vmem:[%s231 + $0x164] sm:$0xf] %v1588
      %1621 = vst [vmem:[%s231 + $0x174] sm:$0xf] %v1589
      %1622 = vst [vmem:[%s231 + $0x184] sm:$0xf] %v1590
      %1623 = vst [vmem:[%s231 + $0x194] sm:$0xf] %v1591
      %1624 = vst [vmem:[%s231 + $0x1a4] sm:$0xf] %v1592
      %1625 = vst [vmem:[%s231 + $0x1b4] sm:$0xf] %v1593
      %1626 = vst [vmem:[%s231 + $0x1c4] sm:$0xf] %v1594
      %1627 = vst [vmem:[%s231 + $0x1d4] sm:$0xf] %v1595
      %1628 = vst [vmem:[%s231 + $0x1e4] sm:$0xf] %v1596
      %1629 = vst [vmem:[%s231 + $0x1f4] sm:$0xf] %v1597
      %1630 = vst [vmem:[#allocation2] sm:$0xff] -inf
      %1631 = vst [vmem:[#allocation2 + $0x8] sm:$0xff] -inf
      %1632 = vst [vmem:[#allocation2 + $0x10] sm:$0xf] -inf
      %1633 = vst [vmem:[#allocation2 + $0x18] sm:$0xff] -inf
      %1634 = vst [vmem:[#allocation2 + $0x20] sm:$0xff] -inf
      %1635 = vst [vmem:[#allocation2 + $0x28] sm:$0xf] -inf
      %1636 = vst [vmem:[#allocation2 + $0x30] sm:$0xff] -inf
      %1637 = vst [vmem:[#allocation2 + $0x38] sm:$0xff] -inf
      %1638 = vst [vmem:[#allocation2 + $0x40] sm:$0xf] -inf
      %1639 = vst [vmem:[#allocation2 + $0x48] sm:$0xff] -inf
      %1640 = vst [vmem:[#allocation2 + $0x50] sm:$0xff] -inf
      %1641 = vst [vmem:[#allocation2 + $0x58] sm:$0xf] -inf
      %1642 = vst [vmem:[#allocation2 + $0x60] sm:$0xff] -inf
      %1643 = vst [vmem:[#allocation2 + $0x68] sm:$0xff] -inf
      %1644 = vst [vmem:[#allocation2 + $0x70] sm:$0xf] -inf
      %1645 = vst [vmem:[#allocation2 + $0x78] sm:$0xff] -inf
      %1646 = vst [vmem:[#allocation2 + $0x80] sm:$0xff] -inf
      %1647 = vst [vmem:[#allocation2 + $0x88] sm:$0xf] -inf
      %1648 = vst [vmem:[#allocation2 + $0x90] sm:$0xff] -inf
      %1649 = vst [vmem:[#allocation2 + $0x98] sm:$0xff] -inf
      %1650 = vst [vmem:[#allocation2 + $0xa0] sm:$0xf] -inf
      %1651 = vst [vmem:[#allocation2 + $0xa8] sm:$0xff] -inf
      %1652 = vst [vmem:[#allocation2 + $0xb0] sm:$0xff] -inf
      %1653 = vst [vmem:[#allocation2 + $0xb8] sm:$0xf] -inf
      %1654 = vst [vmem:[#allocation2 + $0xc0] sm:$0xff] -inf
      %1655 = vst [vmem:[#allocation2 + $0xc8] sm:$0xff] -inf
      %1656 = vst [vmem:[#allocation2 + $0xd0] sm:$0xf] -inf
      %1657 = vst [vmem:[#allocation2 + $0xd8] sm:$0xff] -inf
      %1658 = vst [vmem:[#allocation2 + $0xe0] sm:$0xff] -inf
      %1659 = vst [vmem:[#allocation2 + $0xe8] sm:$0xf] -inf
      %1660 = vst [vmem:[#allocation2 + $0xf0] sm:$0xff] -inf
      %1661 = vst [vmem:[#allocation2 + $0xf8] sm:$0xff] -inf
      %1662 = vst [vmem:[#allocation2 + $0x100] sm:$0xf] -inf
      %1663 = vst [vmem:[#allocation2 + $0x108] sm:$0xff] -inf
      %1664 = vst [vmem:[#allocation2 + $0x110] sm:$0xff] -inf
      %1665 = vst [vmem:[#allocation2 + $0x118] sm:$0xf] -inf
      %1666 = vst [vmem:[#allocation2 + $0x120] sm:$0xff] -inf
      %1667 = vst [vmem:[#allocation2 + $0x128] sm:$0xff] -inf
      %1668 = vst [vmem:[#allocation2 + $0x130] sm:$0xf] -inf
      %1669 = vst [vmem:[#allocation2 + $0x138] sm:$0xff] -inf
      %1670 = vst [vmem:[#allocation2 + $0x140] sm:$0xff] -inf
      %1671 = vst [vmem:[#allocation2 + $0x148] sm:$0xf] -inf
      %1672 = vst [vmem:[#allocation2 + $0x150] sm:$0xff] -inf
      %1673 = vst [vmem:[#allocation2 + $0x158] sm:$0xff] -inf
      %1674 = vst [vmem:[#allocation2 + $0x160] sm:$0xf] -inf
      %1675 = vst [vmem:[#allocation2 + $0x168] sm:$0xff] -inf
      %1676 = vst [vmem:[#allocation2 + $0x170] sm:$0xff] -inf
      %1677 = vst [vmem:[#allocation2 + $0x178] sm:$0xf] -inf
      %1678 = vst [vmem:[#allocation2 + $0x180] sm:$0xff] -inf
      %1679 = vst [vmem:[#allocation2 + $0x188] sm:$0xff] -inf
      %1680 = vst [vmem:[#allocation2 + $0x190] sm:$0xf] -inf
      %1681 = vst [vmem:[#allocation2 + $0x198] sm:$0xff] -inf
      %1682 = vst [vmem:[#allocation2 + $0x1a0] sm:$0xff] -inf
      %1683 = vst [vmem:[#allocation2 + $0x1a8] sm:$0xf] -inf
      %1684 = vst [vmem:[#allocation2 + $0x1b0] sm:$0xff] -inf
      %1685 = vst [vmem:[#allocation2 + $0x1b8] sm:$0xff] -inf
      %1686 = vst [vmem:[#allocation2 + $0x1c0] sm:$0xf] -inf
      %1687 = vst [vmem:[#allocation2 + $0x1c8] sm:$0xff] -inf
      %1688 = vst [vmem:[#allocation2 + $0x1d0] sm:$0xff] -inf
      %1689 = vst [vmem:[#allocation2 + $0x1d8] sm:$0xf] -inf
      %1690 = vst [vmem:[%s653 + $0x2] sm:$0xff] %v1534
      %1691 = vst [vmem:[%s653 + $0xa] sm:$0xff] %v1535
      %1692 = vst [vmem:[%s653 + $0x1a] sm:$0xff] %v1536
      %1693 = vst [vmem:[%s653 + $0x22] sm:$0xff] %v1537
      %1694 = vst [vmem:[%s653 + $0x32] sm:$0xff] %v1538
      %1695 = vst [vmem:[%s653 + $0x3a] sm:$0xff] %v1539
      %1696 = vst [vmem:[%s653 + $0x4a] sm:$0xff] %v1540
      %1697 = vst [vmem:[%s653 + $0x52] sm:$0xff] %v1541
      %1698 = vst [vmem:[%s653 + $0x62] sm:$0xff] %v1542
      %1699 = vst [vmem:[%s653 + $0x6a] sm:$0xff] %v1543
      %1700 = vst [vmem:[%s653 + $0x7a] sm:$0xff] %v1544
      %1701 = vst [vmem:[%s653 + $0x82] sm:$0xff] %v1545
      %1702 = vst [vmem:[%s653 + $0x92] sm:$0xff] %v1546
      %1703 = vst [vmem:[%s653 + $0x9a] sm:$0xff] %v1547
      %1704 = vst [vmem:[%s653 + $0xaa] sm:$0xff] %v1548
      %1705 = vst [vmem:[%s653 + $0xb2] sm:$0xff] %v1549
      %1706 = vst [vmem:[%s653 + $0xc2] sm:$0xff] %v1550
      %1707 = vst [vmem:[%s653 + $0xca] sm:$0xff] %v1551
      %1708 = vst [vmem:[%s653 + $0xda] sm:$0xff] %v1552
      %1709 = vst [vmem:[%s653 + $0xe2] sm:$0xff] %v1553
      %1710 = vst [vmem:[%s653 + $0xf2] sm:$0xff] %v1554
      %1711 = vst [vmem:[%s653 + $0xfa] sm:$0xff] %v1555
      %1712 = vst [vmem:[%s653 + $0x10a] sm:$0xff] %v1556
      %1713 = vst [vmem:[%s653 + $0x112] sm:$0xff] %v1557
      %1714 = vst [vmem:[%s653 + $0x122] sm:$0xff] %v1558
      %1715 = vst [vmem:[%s653 + $0x12a] sm:$0xff] %v1559
      %1716 = vst [vmem:[%s653 + $0x13a] sm:$0xff] %v1560
      %1717 = vst [vmem:[%s653 + $0x142] sm:$0xff] %v1561
      %1718 = vst [vmem:[%s653 + $0x152] sm:$0xff] %v1562
      %1719 = vst [vmem:[%s653 + $0x15a] sm:$0xff] %v1563
      %1720 = vst [vmem:[%s653 + $0x16a] sm:$0xff] %v1564
      %1721 = vst [vmem:[%s653 + $0x172] sm:$0xff] %v1565
      %v1722 = vld [vmem:[#allocation2] sm:$0xff]
      %v1723 = vld [vmem:[#allocation2 + $0x8] sm:$0xff]
      %v1724 = vld [vmem:[#allocation2 + $0x10] sm:$0xf]
      %v1725 = vld [vmem:[#allocation2 + $0x18] sm:$0xff]
      %v1726 = vld [vmem:[#allocation2 + $0x20] sm:$0xff]
      %v1727 = vld [vmem:[#allocation2 + $0x28] sm:$0xf]
      %v1728 = vld [vmem:[#allocation2 + $0x30] sm:$0xff]
      %v1729 = vld [vmem:[#allocation2 + $0x38] sm:$0xff]
      %v1730 = vld [vmem:[#allocation2 + $0x40] sm:$0xf]
      %v1731 = vld [vmem:[#allocation2 + $0x48] sm:$0xff]
      %v1732 = vld [vmem:[#allocation2 + $0x50] sm:$0xff]
      %v1733 = vld [vmem:[#allocation2 + $0x58] sm:$0xf]
      %v1734 = vld [vmem:[#allocation2 + $0x60] sm:$0xff]
      %v1735 = vld [vmem:[#allocation2 + $0x68] sm:$0xff]
      %v1736 = vld [vmem:[#allocation2 + $0x70] sm:$0xf]
      %v1737 = vld [vmem:[#allocation2 + $0x78] sm:$0xff]
      %v1738 = vld [vmem:[#allocation2 + $0x80] sm:$0xff]
      %v1739 = vld [vmem:[#allocation2 + $0x88] sm:$0xf]
      %v1740 = vld [vmem:[#allocation2 + $0x90] sm:$0xff]
      %v1741 = vld [vmem:[#allocation2 + $0x98] sm:$0xff]
      %v1742 = vld [vmem:[#allocation2 + $0xa0] sm:$0xf]
      %v1743 = vld [vmem:[#allocation2 + $0xa8] sm:$0xff]
      %v1744 = vld [vmem:[#allocation2 + $0xb0] sm:$0xff]
      %v1745 = vld [vmem:[#allocation2 + $0xb8] sm:$0xf]
      %v1746 = vld [vmem:[#allocation2 + $0xc0] sm:$0xff]
      %v1747 = vld [vmem:[#allocation2 + $0xc8] sm:$0xff]
      %v1748 = vld [vmem:[#allocation2 + $0xd0] sm:$0xf]
      %v1749 = vld [vmem:[#allocation2 + $0xd8] sm:$0xff]
      %v1750 = vld [vmem:[#allocation2 + $0xe0] sm:$0xff]
      %v1751 = vld [vmem:[#allocation2 + $0xe8] sm:$0xf]
      %v1752 = vld [vmem:[#allocation2 + $0xf0] sm:$0xff]
      %v1753 = vld [vmem:[#allocation2 + $0xf8] sm:$0xff]
      %v1754 = vld [vmem:[#allocation2 + $0x100] sm:$0xf]
      %v1755 = vld [vmem:[#allocation2 + $0x108] sm:$0xff]
      %v1756 = vld [vmem:[#allocation2 + $0x110] sm:$0xff]
      %v1757 = vld [vmem:[#allocation2 + $0x118] sm:$0xf]
      %v1758 = vld [vmem:[#allocation2 + $0x120] sm:$0xff]
      %v1759 = vld [vmem:[#allocation2 + $0x128] sm:$0xff]
      %v1760 = vld [vmem:[#allocation2 + $0x130] sm:$0xf]
      %v1761 = vld [vmem:[#allocation2 + $0x138] sm:$0xff]
      %v1762 = vld [vmem:[#allocation2 + $0x140] sm:$0xff]
      %v1763 = vld [vmem:[#allocation2 + $0x148] sm:$0xf]
      %v1764 = vld [vmem:[#allocation2 + $0x150] sm:$0xff]
      %v1765 = vld [vmem:[#allocation2 + $0x158] sm:$0xff]
      %v1766 = vld [vmem:[#allocation2 + $0x160] sm:$0xf]
      %v1767 = vld [vmem:[#allocation2 + $0x168] sm:$0xff]
      %v1768 = vld [vmem:[#allocation2 + $0x170] sm:$0xff]
      %v1769 = vld [vmem:[#allocation2 + $0x178] sm:$0xf]
      %v1770 = vld [vmem:[#allocation2 + $0x180] sm:$0xff]
      %v1771 = vld [vmem:[#allocation2 + $0x188] sm:$0xff]
      %v1772 = vld [vmem:[#allocation2 + $0x190] sm:$0xf]
      %v1773 = vld [vmem:[#allocation2 + $0x198] sm:$0xff]
      %v1774 = vld [vmem:[#allocation2 + $0x1a0] sm:$0xff]
      %v1775 = vld [vmem:[#allocation2 + $0x1a8] sm:$0xf]
      %v1776 = vld [vmem:[#allocation2 + $0x1b0] sm:$0xff]
      %v1777 = vld [vmem:[#allocation2 + $0x1b8] sm:$0xff]
      %v1778 = vld [vmem:[#allocation2 + $0x1c0] sm:$0xf]
      %v1779 = vld [vmem:[#allocation2 + $0x1c8] sm:$0xff]
      %v1780 = vld [vmem:[#allocation2 + $0x1d0] sm:$0xff]
      %v1781 = vld [vmem:[#allocation2 + $0x1d8] sm:$0xf]
      %v1782 = vmax.f32 %v1722, %v1725
      %v1783 = vmax.f32 %v1723, %v1726
      %v1784 = vmax.f32 %v1724, %v1727
      %v1785 = vmax.f32 %v1725, %v1728
      %v1786 = vmax.f32 %v1726, %v1729
      %v1787 = vmax.f32 %v1727, %v1730
      %v1788 = vmax.f32 %v1728, %v1731
      %v1789 = vmax.f32 %v1729, %v1732
      %v1790 = vmax.f32 %v1730, %v1733
      %v1791 = vmax.f32 %v1731, %v1734
      %v1792 = vmax.f32 %v1732, %v1735
      %v1793 = vmax.f32 %v1733, %v1736
      %v1794 = vmax.f32 %v1734, %v1737
      %v1795 = vmax.f32 %v1735, %v1738
      %v1796 = vmax.f32 %v1736, %v1739
      %v1797 = vmax.f32 %v1737, %v1740
      %v1798 = vmax.f32 %v1738, %v1741
      %v1799 = vmax.f32 %v1739, %v1742
      %v1800 = vmax.f32 %v1740, %v1743
      %v1801 = vmax.f32 %v1741, %v1744
      %v1802 = vmax.f32 %v1742, %v1745
      %v1803 = vmax.f32 %v1743, %v1746
      %v1804 = vmax.f32 %v1744, %v1747
      %v1805 = vmax.f32 %v1745, %v1748
      %v1806 = vmax.f32 %v1746, %v1749
      %v1807 = vmax.f32 %v1747, %v1750
      %v1808 = vmax.f32 %v1748, %v1751
      %v1809 = vmax.f32 %v1749, %v1752
      %v1810 = vmax.f32 %v1750, %v1753
      %v1811 = vmax.f32 %v1751, %v1754
      %v1812 = vmax.f32 %v1752, %v1755
      %v1813 = vmax.f32 %v1753, %v1756
      %v1814 = vmax.f32 %v1754, %v1757
      %v1815 = vmax.f32 %v1755, %v1758
      %v1816 = vmax.f32 %v1756, %v1759
      %v1817 = vmax.f32 %v1757, %v1760
      %v1818 = vmax.f32 %v1758, %v1761
      %v1819 = vmax.f32 %v1759, %v1762
      %v1820 = vmax.f32 %v1760, %v1763
      %v1821 = vmax.f32 %v1761, %v1764
      %v1822 = vmax.f32 %v1762, %v1765
      %v1823 = vmax.f32 %v1763, %v1766
      %v1824 = vmax.f32 %v1764, %v1767
      %v1825 = vmax.f32 %v1765, %v1768
      %v1826 = vmax.f32 %v1766, %v1769
      %v1827 = vmax.f32 %v1767, %v1770
      %v1828 = vmax.f32 %v1768, %v1771
      %v1829 = vmax.f32 %v1769, %v1772
      %v1830 = vmax.f32 %v1782, %v1728
      %v1831 = vmax.f32 %v1783, %v1729
      %v1832 = vmax.f32 %v1784, %v1730
      %v1833 = vmax.f32 %v1785, %v1731
      %v1834 = vmax.f32 %v1786, %v1732
      %v1835 = vmax.f32 %v1787, %v1733
      %v1836 = vmax.f32 %v1788, %v1734
      %v1837 = vmax.f32 %v1789, %v1735
      %v1838 = vmax.f32 %v1790, %v1736
      %v1839 = vmax.f32 %v1791, %v1737
      %v1840 = vmax.f32 %v1792, %v1738
      %v1841 = vmax.f32 %v1793, %v1739
      %v1842 = vmax.f32 %v1794, %v1740
      %v1843 = vmax.f32 %v1795, %v1741
      %v1844 = vmax.f32 %v1796, %v1742
      %v1845 = vmax.f32 %v1797, %v1743
      %v1846 = vmax.f32 %v1798, %v1744
      %v1847 = vmax.f32 %v1799, %v1745
      %v1848 = vmax.f32 %v1800, %v1746
      %v1849 = vmax.f32 %v1801, %v1747
      %v1850 = vmax.f32 %v1802, %v1748
      %v1851 = vmax.f32 %v1803, %v1749
      %v1852 = vmax.f32 %v1804, %v1750
      %v1853 = vmax.f32 %v1805, %v1751
      %v1854 = vmax.f32 %v1806, %v1752
      %v1855 = vmax.f32 %v1807, %v1753
      %v1856 = vmax.f32 %v1808, %v1754
      %v1857 = vmax.f32 %v1809, %v1755
      %v1858 = vmax.f32 %v1810, %v1756
      %v1859 = vmax.f32 %v1811, %v1757
      %v1860 = vmax.f32 %v1812, %v1758
      %v1861 = vmax.f32 %v1813, %v1759
      %v1862 = vmax.f32 %v1814, %v1760
      %v1863 = vmax.f32 %v1815, %v1761
      %v1864 = vmax.f32 %v1816, %v1762
      %v1865 = vmax.f32 %v1817, %v1763
      %v1866 = vmax.f32 %v1818, %v1764
      %v1867 = vmax.f32 %v1819, %v1765
      %v1868 = vmax.f32 %v1820, %v1766
      %v1869 = vmax.f32 %v1821, %v1767
      %v1870 = vmax.f32 %v1822, %v1768
      %v1871 = vmax.f32 %v1823, %v1769
      %v1872 = vmax.f32 %v1824, %v1770
      %v1873 = vmax.f32 %v1825, %v1771
      %v1874 = vmax.f32 %v1826, %v1772
      %v1875 = vmax.f32 %v1827, %v1773
      %v1876 = vmax.f32 %v1828, %v1774
      %v1877 = vmax.f32 %v1829, %v1775
      %v1878 = vmax.f32 %v1830, %v1731
      %v1879 = vmax.f32 %v1831, %v1732
      %v1880 = vmax.f32 %v1832, %v1733
      %v1881 = vmax.f32 %v1833, %v1734
      %v1882 = vmax.f32 %v1834, %v1735
      %v1883 = vmax.f32 %v1835, %v1736
      %v1884 = vmax.f32 %v1836, %v1737
      %v1885 = vmax.f32 %v1837, %v1738
      %v1886 = vmax.f32 %v1838, %v1739
      %v1887 = vmax.f32 %v1839, %v1740
      %v1888 = vmax.f32 %v1840, %v1741
      %v1889 = vmax.f32 %v1841, %v1742
      %v1890 = vmax.f32 %v1842, %v1743
      %v1891 = vmax.f32 %v1843, %v1744
      %v1892 = vmax.f32 %v1844, %v1745
      %v1893 = vmax.f32 %v1845, %v1746
      %v1894 = vmax.f32 %v1846, %v1747
      %v1895 = vmax.f32 %v1847, %v1748
      %v1896 = vmax.f32 %v1848, %v1749
      %v1897 = vmax.f32 %v1849, %v1750
      %v1898 = vmax.f32 %v1850, %v1751
      %v1899 = vmax.f32 %v1851, %v1752
      %v1900 = vmax.f32 %v1852, %v1753
      %v1901 = vmax.f32 %v1853, %v1754
      %v1902 = vmax.f32 %v1854, %v1755
      %v1903 = vmax.f32 %v1855, %v1756
      %v1904 = vmax.f32 %v1856, %v1757
      %v1905 = vmax.f32 %v1857, %v1758
      %v1906 = vmax.f32 %v1858, %v1759
      %v1907 = vmax.f32 %v1859, %v1760
      %v1908 = vmax.f32 %v1860, %v1761
      %v1909 = vmax.f32 %v1861, %v1762
      %v1910 = vmax.f32 %v1862, %v1763
      %v1911 = vmax.f32 %v1863, %v1764
      %v1912 = vmax.f32 %v1864, %v1765
      %v1913 = vmax.f32 %v1865, %v1766
      %v1914 = vmax.f32 %v1866, %v1767
      %v1915 = vmax.f32 %v1867, %v1768
      %v1916 = vmax.f32 %v1868, %v1769
      %v1917 = vmax.f32 %v1869, %v1770
      %v1918 = vmax.f32 %v1870, %v1771
      %v1919 = vmax.f32 %v1871, %v1772
      %v1920 = vmax.f32 %v1872, %v1773
      %v1921 = vmax.f32 %v1873, %v1774
      %v1922 = vmax.f32 %v1874, %v1775
      %v1923 = vmax.f32 %v1875, %v1776
      %v1924 = vmax.f32 %v1876, %v1777
      %v1925 = vmax.f32 %v1877, %v1778
      %v1926 = vmax.f32 %v1878, %v1734
      %v1927 = vmax.f32 %v1879, %v1735
      %v1928 = vmax.f32 %v1880, %v1736
      %v1929 = vmax.f32 %v1881, %v1737
      %v1930 = vmax.f32 %v1882, %v1738
      %v1931 = vmax.f32 %v1883, %v1739
      %v1932 = vmax.f32 %v1884, %v1740
      %v1933 = vmax.f32 %v1885, %v1741
      %v1934 = vmax.f32 %v1886, %v1742
      %v1935 = vmax.f32 %v1887, %v1743
      %v1936 = vmax.f32 %v1888, %v1744
      %v1937 = vmax.f32 %v1889, %v1745
      %v1938 = vmax.f32 %v1890, %v1746
      %v1939 = vmax.f32 %v1891, %v1747
      %v1940 = vmax.f32 %v1892, %v1748
      %v1941 = vmax.f32 %v1893, %v1749
      %v1942 = vmax.f32 %v1894, %v1750
      %v1943 = vmax.f32 %v1895, %v1751
      %v1944 = vmax.f32 %v1896, %v1752
      %v1945 = vmax.f32 %v1897, %v1753
      %v1946 = vmax.f32 %v1898, %v1754
      %v1947 = vmax.f32 %v1899, %v1755
      %v1948 = vmax.f32 %v1900, %v1756
      %v1949 = vmax.f32 %v1901, %v1757
      %v1950 = vmax.f32 %v1902, %v1758
      %v1951 = vmax.f32 %v1903, %v1759
      %v1952 = vmax.f32 %v1904, %v1760
      %v1953 = vmax.f32 %v1905, %v1761
      %v1954 = vmax.f32 %v1906, %v1762
      %v1955 = vmax.f32 %v1907, %v1763
      %v1956 = vmax.f32 %v1908, %v1764
      %v1957 = vmax.f32 %v1909, %v1765
      %v1958 = vmax.f32 %v1910, %v1766
      %v1959 = vmax.f32 %v1911, %v1767
      %v1960 = vmax.f32 %v1912, %v1768
      %v1961 = vmax.f32 %v1913, %v1769
      %v1962 = vmax.f32 %v1914, %v1770
      %v1963 = vmax.f32 %v1915, %v1771
      %v1964 = vmax.f32 %v1916, %v1772
      %v1965 = vmax.f32 %v1917, %v1773
      %v1966 = vmax.f32 %v1918, %v1774
      %v1967 = vmax.f32 %v1919, %v1775
      %v1968 = vmax.f32 %v1920, %v1776
      %v1969 = vmax.f32 %v1921, %v1777
      %v1970 = vmax.f32 %v1922, %v1778
      %v1971 = vmax.f32 %v1923, %v1779
      %v1972 = vmax.f32 %v1924, %v1780
      %v1973 = vmax.f32 %v1925, %v1781
      %v2022 = vrot.slane %v1926, 1
      %v2023 = vrot.slane %v1927, 1
      %v2024 = vsel %vm986, %v2022, %v2023
      %v2025 = vrot.slane %v1928, 1
      %v2026 = vsel %vm986, %v2023, %v2025
      %v2027 = vrot.slane %v1929, 1
      %v2028 = vrot.slane %v1930, 1
      %v2029 = vsel %vm986, %v2027, %v2028
      %v2030 = vrot.slane %v1931, 1
      %v2031 = vsel %vm986, %v2028, %v2030
      %v2032 = vrot.slane %v1932, 1
      %v2033 = vrot.slane %v1933, 1
      %v2034 = vsel %vm986, %v2032, %v2033
      %v2035 = vrot.slane %v1934, 1
      %v2036 = vsel %vm986, %v2033, %v2035
      %v2037 = vrot.slane %v1935, 1
      %v2038 = vrot.slane %v1936, 1
      %v2039 = vsel %vm986, %v2037, %v2038
      %v2040 = vrot.slane %v1937, 1
      %v2041 = vsel %vm986, %v2038, %v2040
      %v2042 = vrot.slane %v1938, 1
      %v2043 = vrot.slane %v1939, 1
      %v2044 = vsel %vm986, %v2042, %v2043
      %v2045 = vrot.slane %v1940, 1
      %v2046 = vsel %vm986, %v2043, %v2045
      %v2047 = vrot.slane %v1941, 1
      %v2048 = vrot.slane %v1942, 1
      %v2049 = vsel %vm986, %v2047, %v2048
      %v2050 = vrot.slane %v1943, 1
      %v2051 = vsel %vm986, %v2048, %v2050
      %v2052 = vrot.slane %v1944, 1
      %v2053 = vrot.slane %v1945, 1
      %v2054 = vsel %vm986, %v2052, %v2053
      %v2055 = vrot.slane %v1946, 1
      %v2056 = vsel %vm986, %v2053, %v2055
      %v2057 = vrot.slane %v1947, 1
      %v2058 = vrot.slane %v1948, 1
      %v2059 = vsel %vm986, %v2057, %v2058
      %v2060 = vrot.slane %v1949, 1
      %v2061 = vsel %vm986, %v2058, %v2060
      %v2062 = vrot.slane %v1950, 1
      %v2063 = vrot.slane %v1951, 1
      %v2064 = vsel %vm986, %v2062, %v2063
      %v2065 = vrot.slane %v1952, 1
      %v2066 = vsel %vm986, %v2063, %v2065
      %v2067 = vrot.slane %v1953, 1
      %v2068 = vrot.slane %v1954, 1
      %v2069 = vsel %vm986, %v2067, %v2068
      %v2070 = vrot.slane %v1955, 1
      %v2071 = vsel %vm986, %v2068, %v2070
      %v2072 = vrot.slane %v1956, 1
      %v2073 = vrot.slane %v1957, 1
      %v2074 = vsel %vm986, %v2072, %v2073
      %v2075 = vrot.slane %v1958, 1
      %v2076 = vsel %vm986, %v2073, %v2075
      %v2077 = vrot.slane %v1959, 1
      %v2078 = vrot.slane %v1960, 1
      %v2079 = vsel %vm986, %v2077, %v2078
      %v2080 = vrot.slane %v1961, 1
      %v2081 = vsel %vm986, %v2078, %v2080
      %v2082 = vrot.slane %v1962, 1
      %v2083 = vrot.slane %v1963, 1
      %v2084 = vsel %vm986, %v2082, %v2083
      %v2085 = vrot.slane %v1964, 1
      %v2086 = vsel %vm986, %v2083, %v2085
      %v2087 = vrot.slane %v1965, 1
      %v2088 = vrot.slane %v1966, 1
      %v2089 = vsel %vm986, %v2087, %v2088
      %v2090 = vrot.slane %v1967, 1
      %v2091 = vsel %vm986, %v2088, %v2090
      %v2092 = vrot.slane %v1968, 1
      %v2093 = vrot.slane %v1969, 1
      %v2094 = vsel %vm986, %v2092, %v2093
      %v2095 = vrot.slane %v1970, 1
      %v2096 = vsel %vm986, %v2093, %v2095
      %v2097 = vrot.slane %v1971, 1
      %v2098 = vrot.slane %v1972, 1
      %v2099 = vsel %vm986, %v2097, %v2098
      %v2100 = vrot.slane %v1973, 1
      %v2101 = vsel %vm986, %v2098, %v2100
      %v2134 = vmax.f32 %v1926, %v2024
      %v2135 = vmax.f32 %v1927, %v2026
      %v2136 = vmax.f32 %v1929, %v2029
      %v2137 = vmax.f32 %v1930, %v2031
      %v2138 = vmax.f32 %v1932, %v2034
      %v2139 = vmax.f32 %v1933, %v2036
      %v2140 = vmax.f32 %v1935, %v2039
      %v2141 = vmax.f32 %v1936, %v2041
      %v2142 = vmax.f32 %v1938, %v2044
      %v2143 = vmax.f32 %v1939, %v2046
      %v2144 = vmax.f32 %v1941, %v2049
      %v2145 = vmax.f32 %v1942, %v2051
      %v2146 = vmax.f32 %v1944, %v2054
      %v2147 = vmax.f32 %v1945, %v2056
      %v2148 = vmax.f32 %v1947, %v2059
      %v2149 = vmax.f32 %v1948, %v2061
      %v2150 = vmax.f32 %v1950, %v2064
      %v2151 = vmax.f32 %v1951, %v2066
      %v2152 = vmax.f32 %v1953, %v2069
      %v2153 = vmax.f32 %v1954, %v2071
      %v2154 = vmax.f32 %v1956, %v2074
      %v2155 = vmax.f32 %v1957, %v2076
      %v2156 = vmax.f32 %v1959, %v2079
      %v2157 = vmax.f32 %v1960, %v2081
      %v2158 = vmax.f32 %v1962, %v2084
      %v2159 = vmax.f32 %v1963, %v2086
      %v2160 = vmax.f32 %v1965, %v2089
      %v2161 = vmax.f32 %v1966, %v2091
      %v2162 = vmax.f32 %v1968, %v2094
      %v2163 = vmax.f32 %v1969, %v2096
      %v2164 = vmax.f32 %v1971, %v2099
      %v2165 = vmax.f32 %v1972, %v2101
      %v2166 = vrot.slane %v1926, 2
      %v2167 = vrot.slane %v1927, 2
      %v2168 = vsel %vm1131, %v2166, %v2167
      %v2169 = vrot.slane %v1928, 2
      %v2170 = vsel %vm1131, %v2167, %v2169
      %v2171 = vrot.slane %v1929, 2
      %v2172 = vrot.slane %v1930, 2
      %v2173 = vsel %vm1131, %v2171, %v2172
      %v2174 = vrot.slane %v1931, 2
      %v2175 = vsel %vm1131, %v2172, %v2174
      %v2176 = vrot.slane %v1932, 2
      %v2177 = vrot.slane %v1933, 2
      %v2178 = vsel %vm1131, %v2176, %v2177
      %v2179 = vrot.slane %v1934, 2
      %v2180 = vsel %vm1131, %v2177, %v2179
      %v2181 = vrot.slane %v1935, 2
      %v2182 = vrot.slane %v1936, 2
      %v2183 = vsel %vm1131, %v2181, %v2182
      %v2184 = vrot.slane %v1937, 2
      %v2185 = vsel %vm1131, %v2182, %v2184
      %v2186 = vrot.slane %v1938, 2
      %v2187 = vrot.slane %v1939, 2
      %v2188 = vsel %vm1131, %v2186, %v2187
      %v2189 = vrot.slane %v1940, 2
      %v2190 = vsel %vm1131, %v2187, %v2189
      %v2191 = vrot.slane %v1941, 2
      %v2192 = vrot.slane %v1942, 2
      %v2193 = vsel %vm1131, %v2191, %v2192
      %v2194 = vrot.slane %v1943, 2
      %v2195 = vsel %vm1131, %v2192, %v2194
      %v2196 = vrot.slane %v1944, 2
      %v2197 = vrot.slane %v1945, 2
      %v2198 = vsel %vm1131, %v2196, %v2197
      %v2199 = vrot.slane %v1946, 2
      %v2200 = vsel %vm1131, %v2197, %v2199
      %v2201 = vrot.slane %v1947, 2
      %v2202 = vrot.slane %v1948, 2
      %v2203 = vsel %vm1131, %v2201, %v2202
      %v2204 = vrot.slane %v1949, 2
      %v2205 = vsel %vm1131, %v2202, %v2204
      %v2206 = vrot.slane %v1950, 2
      %v2207 = vrot.slane %v1951, 2
      %v2208 = vsel %vm1131, %v2206, %v2207
      %v2209 = vrot.slane %v1952, 2
      %v2210 = vsel %vm1131, %v2207, %v2209
      %v2211 = vrot.slane %v1953, 2
      %v2212 = vrot.slane %v1954, 2
      %v2213 = vsel %vm1131, %v2211, %v2212
      %v2214 = vrot.slane %v1955, 2
      %v2215 = vsel %vm1131, %v2212, %v2214
      %v2216 = vrot.slane %v1956, 2
      %v2217 = vrot.slane %v1957, 2
      %v2218 = vsel %vm1131, %v2216, %v2217
      %v2219 = vrot.slane %v1958, 2
      %v2220 = vsel %vm1131, %v2217, %v2219
      %v2221 = vrot.slane %v1959, 2
      %v2222 = vrot.slane %v1960, 2
      %v2223 = vsel %vm1131, %v2221, %v2222
      %v2224 = vrot.slane %v1961, 2
      %v2225 = vsel %vm1131, %v2222, %v2224
      %v2226 = vrot.slane %v1962, 2
      %v2227 = vrot.slane %v1963, 2
      %v2228 = vsel %vm1131, %v2226, %v2227
      %v2229 = vrot.slane %v1964, 2
      %v2230 = vsel %vm1131, %v2227, %v2229
      %v2231 = vrot.slane %v1965, 2
      %v2232 = vrot.slane %v1966, 2
      %v2233 = vsel %vm1131, %v2231, %v2232
      %v2234 = vrot.slane %v1967, 2
      %v2235 = vsel %vm1131, %v2232, %v2234
      %v2236 = vrot.slane %v1968, 2
      %v2237 = vrot.slane %v1969, 2
      %v2238 = vsel %vm1131, %v2236, %v2237
      %v2239 = vrot.slane %v1970, 2
      %v2240 = vsel %vm1131, %v2237, %v2239
      %v2241 = vrot.slane %v1971, 2
      %v2242 = vrot.slane %v1972, 2
      %v2243 = vsel %vm1131, %v2241, %v2242
      %v2244 = vrot.slane %v1973, 2
      %v2245 = vsel %vm1131, %v2242, %v2244
      %v2278 = vmax.f32 %v2134, %v2168
      %v2279 = vmax.f32 %v2135, %v2170
      %v2280 = vmax.f32 %v2136, %v2173
      %v2281 = vmax.f32 %v2137, %v2175
      %v2282 = vmax.f32 %v2138, %v2178
      %v2283 = vmax.f32 %v2139, %v2180
      %v2284 = vmax.f32 %v2140, %v2183
      %v2285 = vmax.f32 %v2141, %v2185
      %v2286 = vmax.f32 %v2142, %v2188
      %v2287 = vmax.f32 %v2143, %v2190
      %v2288 = vmax.f32 %v2144, %v2193
      %v2289 = vmax.f32 %v2145, %v2195
      %v2290 = vmax.f32 %v2146, %v2198
      %v2291 = vmax.f32 %v2147, %v2200
      %v2292 = vmax.f32 %v2148, %v2203
      %v2293 = vmax.f32 %v2149, %v2205
      %v2294 = vmax.f32 %v2150, %v2208
      %v2295 = vmax.f32 %v2151, %v2210
      %v2296 = vmax.f32 %v2152, %v2213
      %v2297 = vmax.f32 %v2153, %v2215
      %v2298 = vmax.f32 %v2154, %v2218
      %v2299 = vmax.f32 %v2155, %v2220
      %v2300 = vmax.f32 %v2156, %v2223
      %v2301 = vmax.f32 %v2157, %v2225
      %v2302 = vmax.f32 %v2158, %v2228
      %v2303 = vmax.f32 %v2159, %v2230
      %v2304 = vmax.f32 %v2160, %v2233
      %v2305 = vmax.f32 %v2161, %v2235
      %v2306 = vmax.f32 %v2162, %v2238
      %v2307 = vmax.f32 %v2163, %v2240
      %v2308 = vmax.f32 %v2164, %v2243
      %v2309 = vmax.f32 %v2165, %v2245
      %v2310 = vrot.slane %v1926, 3
      %v2311 = vrot.slane %v1927, 3
      %v2312 = vsel %vm1276, %v2310, %v2311
      %v2313 = vrot.slane %v1928, 3
      %v2314 = vsel %vm1276, %v2311, %v2313
      %v2315 = vrot.slane %v1929, 3
      %v2316 = vrot.slane %v1930, 3
      %v2317 = vsel %vm1276, %v2315, %v2316
      %v2318 = vrot.slane %v1931, 3
      %v2319 = vsel %vm1276, %v2316, %v2318
      %v2320 = vrot.slane %v1932, 3
      %v2321 = vrot.slane %v1933, 3
      %v2322 = vsel %vm1276, %v2320, %v2321
      %v2323 = vrot.slane %v1934, 3
      %v2324 = vsel %vm1276, %v2321, %v2323
      %v2325 = vrot.slane %v1935, 3
      %v2326 = vrot.slane %v1936, 3
      %v2327 = vsel %vm1276, %v2325, %v2326
      %v2328 = vrot.slane %v1937, 3
      %v2329 = vsel %vm1276, %v2326, %v2328
      %v2330 = vrot.slane %v1938, 3
      %v2331 = vrot.slane %v1939, 3
      %v2332 = vsel %vm1276, %v2330, %v2331
      %v2333 = vrot.slane %v1940, 3
      %v2334 = vsel %vm1276, %v2331, %v2333
      %v2335 = vrot.slane %v1941, 3
      %v2336 = vrot.slane %v1942, 3
      %v2337 = vsel %vm1276, %v2335, %v2336
      %v2338 = vrot.slane %v1943, 3
      %v2339 = vsel %vm1276, %v2336, %v2338
      %v2340 = vrot.slane %v1944, 3
      %v2341 = vrot.slane %v1945, 3
      %v2342 = vsel %vm1276, %v2340, %v2341
      %v2343 = vrot.slane %v1946, 3
      %v2344 = vsel %vm1276, %v2341, %v2343
      %v2345 = vrot.slane %v1947, 3
      %v2346 = vrot.slane %v1948, 3
      %v2347 = vsel %vm1276, %v2345, %v2346
      %v2348 = vrot.slane %v1949, 3
      %v2349 = vsel %vm1276, %v2346, %v2348
      %v2350 = vrot.slane %v1950, 3
      %v2351 = vrot.slane %v1951, 3
      %v2352 = vsel %vm1276, %v2350, %v2351
      %v2353 = vrot.slane %v1952, 3
      %v2354 = vsel %vm1276, %v2351, %v2353
      %v2355 = vrot.slane %v1953, 3
      %v2356 = vrot.slane %v1954, 3
      %v2357 = vsel %vm1276, %v2355, %v2356
      %v2358 = vrot.slane %v1955, 3
      %v2359 = vsel %vm1276, %v2356, %v2358
      %v2360 = vrot.slane %v1956, 3
      %v2361 = vrot.slane %v1957, 3
      %v2362 = vsel %vm1276, %v2360, %v2361
      %v2363 = vrot.slane %v1958, 3
      %v2364 = vsel %vm1276, %v2361, %v2363
      %v2365 = vrot.slane %v1959, 3
      %v2366 = vrot.slane %v1960, 3
      %v2367 = vsel %vm1276, %v2365, %v2366
      %v2368 = vrot.slane %v1961, 3
      %v2369 = vsel %vm1276, %v2366, %v2368
      %v2370 = vrot.slane %v1962, 3
      %v2371 = vrot.slane %v1963, 3
      %v2372 = vsel %vm1276, %v2370, %v2371
      %v2373 = vrot.slane %v1964, 3
      %v2374 = vsel %vm1276, %v2371, %v2373
      %v2375 = vrot.slane %v1965, 3
      %v2376 = vrot.slane %v1966, 3
      %v2377 = vsel %vm1276, %v2375, %v2376
      %v2378 = vrot.slane %v1967, 3
      %v2379 = vsel %vm1276, %v2376, %v2378
      %v2380 = vrot.slane %v1968, 3
      %v2381 = vrot.slane %v1969, 3
      %v2382 = vsel %vm1276, %v2380, %v2381
      %v2383 = vrot.slane %v1970, 3
      %v2384 = vsel %vm1276, %v2381, %v2383
      %v2385 = vrot.slane %v1971, 3
      %v2386 = vrot.slane %v1972, 3
      %v2387 = vsel %vm1276, %v2385, %v2386
      %v2388 = vrot.slane %v1973, 3
      %v2389 = vsel %vm1276, %v2386, %v2388
      %v2422 = vmax.f32 %v2278, %v2312
      %v2423 = vmax.f32 %v2279, %v2314
      %v2424 = vmax.f32 %v2280, %v2317
      %v2425 = vmax.f32 %v2281, %v2319
      %v2426 = vmax.f32 %v2282, %v2322
      %v2427 = vmax.f32 %v2283, %v2324
      %v2428 = vmax.f32 %v2284, %v2327
      %v2429 = vmax.f32 %v2285, %v2329
      %v2430 = vmax.f32 %v2286, %v2332
      %v2431 = vmax.f32 %v2287, %v2334
      %v2432 = vmax.f32 %v2288, %v2337
      %v2433 = vmax.f32 %v2289, %v2339
      %v2434 = vmax.f32 %v2290, %v2342
      %v2435 = vmax.f32 %v2291, %v2344
      %v2436 = vmax.f32 %v2292, %v2347
      %v2437 = vmax.f32 %v2293, %v2349
      %v2438 = vmax.f32 %v2294, %v2352
      %v2439 = vmax.f32 %v2295, %v2354
      %v2440 = vmax.f32 %v2296, %v2357
      %v2441 = vmax.f32 %v2297, %v2359
      %v2442 = vmax.f32 %v2298, %v2362
      %v2443 = vmax.f32 %v2299, %v2364
      %v2444 = vmax.f32 %v2300, %v2367
      %v2445 = vmax.f32 %v2301, %v2369
      %v2446 = vmax.f32 %v2302, %v2372
      %v2447 = vmax.f32 %v2303, %v2374
      %v2448 = vmax.f32 %v2304, %v2377
      %v2449 = vmax.f32 %v2305, %v2379
      %v2450 = vmax.f32 %v2306, %v2382
      %v2451 = vmax.f32 %v2307, %v2384
      %v2452 = vmax.f32 %v2308, %v2387
      %v2453 = vmax.f32 %v2309, %v2389
      %v2454 = vrot.slane %v1926, 4
      %v2455 = vrot.slane %v1927, 4
      %v2456 = vsel %vm1421, %v2454, %v2455
      %v2457 = vrot.slane %v1928, 4
      %v2458 = vsel %vm1421, %v2455, %v2457
      %v2459 = vrot.slane %v1929, 4
      %v2460 = vrot.slane %v1930, 4
      %v2461 = vsel %vm1421, %v2459, %v2460
      %v2462 = vrot.slane %v1931, 4
      %v2463 = vsel %vm1421, %v2460, %v2462
      %v2464 = vrot.slane %v1932, 4
      %v2465 = vrot.slane %v1933, 4
      %v2466 = vsel %vm1421, %v2464, %v2465
      %v2467 = vrot.slane %v1934, 4
      %v2468 = vsel %vm1421, %v2465, %v2467
      %v2469 = vrot.slane %v1935, 4
      %v2470 = vrot.slane %v1936, 4
      %v2471 = vsel %vm1421, %v2469, %v2470
      %v2472 = vrot.slane %v1937, 4
      %v2473 = vsel %vm1421, %v2470, %v2472
      %v2474 = vrot.slane %v1938, 4
      %v2475 = vrot.slane %v1939, 4
      %v2476 = vsel %vm1421, %v2474, %v2475
      %v2477 = vrot.slane %v1940, 4
      %v2478 = vsel %vm1421, %v2475, %v2477
      %v2479 = vrot.slane %v1941, 4
      %v2480 = vrot.slane %v1942, 4
      %v2481 = vsel %vm1421, %v2479, %v2480
      %v2482 = vrot.slane %v1943, 4
      %v2483 = vsel %vm1421, %v2480, %v2482
      %v2484 = vrot.slane %v1944, 4
      %v2485 = vrot.slane %v1945, 4
      %v2486 = vsel %vm1421, %v2484, %v2485
      %v2487 = vrot.slane %v1946, 4
      %v2488 = vsel %vm1421, %v2485, %v2487
      %v2489 = vrot.slane %v1947, 4
      %v2490 = vrot.slane %v1948, 4
      %v2491 = vsel %vm1421, %v2489, %v2490
      %v2492 = vrot.slane %v1949, 4
      %v2493 = vsel %vm1421, %v2490, %v2492
      %v2494 = vrot.slane %v1950, 4
      %v2495 = vrot.slane %v1951, 4
      %v2496 = vsel %vm1421, %v2494, %v2495
      %v2497 = vrot.slane %v1952, 4
      %v2498 = vsel %vm1421, %v2495, %v2497
      %v2499 = vrot.slane %v1953, 4
      %v2500 = vrot.slane %v1954, 4
      %v2501 = vsel %vm1421, %v2499, %v2500
      %v2502 = vrot.slane %v1955, 4
      %v2503 = vsel %vm1421, %v2500, %v2502
      %v2504 = vrot.slane %v1956, 4
      %v2505 = vrot.slane %v1957, 4
      %v2506 = vsel %vm1421, %v2504, %v2505
      %v2507 = vrot.slane %v1958, 4
      %v2508 = vsel %vm1421, %v2505, %v2507
      %v2509 = vrot.slane %v1959, 4
      %v2510 = vrot.slane %v1960, 4
      %v2511 = vsel %vm1421, %v2509, %v2510
      %v2512 = vrot.slane %v1961, 4
      %v2513 = vsel %vm1421, %v2510, %v2512
      %v2514 = vrot.slane %v1962, 4
      %v2515 = vrot.slane %v1963, 4
      %v2516 = vsel %vm1421, %v2514, %v2515
      %v2517 = vrot.slane %v1964, 4
      %v2518 = vsel %vm1421, %v2515, %v2517
      %v2519 = vrot.slane %v1965, 4
      %v2520 = vrot.slane %v1966, 4
      %v2521 = vsel %vm1421, %v2519, %v2520
      %v2522 = vrot.slane %v1967, 4
      %v2523 = vsel %vm1421, %v2520, %v2522
      %v2524 = vrot.slane %v1968, 4
      %v2525 = vrot.slane %v1969, 4
      %v2526 = vsel %vm1421, %v2524, %v2525
      %v2527 = vrot.slane %v1970, 4
      %v2528 = vsel %vm1421, %v2525, %v2527
      %v2529 = vrot.slane %v1971, 4
      %v2530 = vrot.slane %v1972, 4
      %v2531 = vsel %vm1421, %v2529, %v2530
      %v2532 = vrot.slane %v1973, 4
      %v2533 = vsel %vm1421, %v2530, %v2532
      %v2566 = vmax.f32 %v2422, %v2456
      %v2567 = vmax.f32 %v2423, %v2458
      %v2568 = vmax.f32 %v2424, %v2461
      %v2569 = vmax.f32 %v2425, %v2463
      %v2570 = vmax.f32 %v2426, %v2466
      %v2571 = vmax.f32 %v2427, %v2468
      %v2572 = vmax.f32 %v2428, %v2471
      %v2573 = vmax.f32 %v2429, %v2473
      %v2574 = vmax.f32 %v2430, %v2476
      %v2575 = vmax.f32 %v2431, %v2478
      %v2576 = vmax.f32 %v2432, %v2481
      %v2577 = vmax.f32 %v2433, %v2483
      %v2578 = vmax.f32 %v2434, %v2486
      %v2579 = vmax.f32 %v2435, %v2488
      %v2580 = vmax.f32 %v2436, %v2491
      %v2581 = vmax.f32 %v2437, %v2493
      %v2582 = vmax.f32 %v2438, %v2496
      %v2583 = vmax.f32 %v2439, %v2498
      %v2584 = vmax.f32 %v2440, %v2501
      %v2585 = vmax.f32 %v2441, %v2503
      %v2586 = vmax.f32 %v2442, %v2506
      %v2587 = vmax.f32 %v2443, %v2508
      %v2588 = vmax.f32 %v2444, %v2511
      %v2589 = vmax.f32 %v2445, %v2513
      %v2590 = vmax.f32 %v2446, %v2516
      %v2591 = vmax.f32 %v2447, %v2518
      %v2592 = vmax.f32 %v2448, %v2521
      %v2593 = vmax.f32 %v2449, %v2523
      %v2594 = vmax.f32 %v2450, %v2526
      %v2595 = vmax.f32 %v2451, %v2528
      %v2596 = vmax.f32 %v2452, %v2531
      %v2597 = vmax.f32 %v2453, %v2533
      %v2598 = vpack.c.bf16 %v2566, %v2566
      %v2599 = vpack.c.bf16 %v2567, %v2567
      %v2600 = vpack.c.bf16 %v2568, %v2568
      %v2601 = vpack.c.bf16 %v2569, %v2569
      %v2602 = vpack.c.bf16 %v2570, %v2570
      %v2603 = vpack.c.bf16 %v2571, %v2571
      %v2604 = vpack.c.bf16 %v2572, %v2572
      %v2605 = vpack.c.bf16 %v2573, %v2573
      %v2606 = vpack.c.bf16 %v2574, %v2574
      %v2607 = vpack.c.bf16 %v2575, %v2575
      %v2608 = vpack.c.bf16 %v2576, %v2576
      %v2609 = vpack.c.bf16 %v2577, %v2577
      %v2610 = vpack.c.bf16 %v2578, %v2578
      %v2611 = vpack.c.bf16 %v2579, %v2579
      %v2612 = vpack.c.bf16 %v2580, %v2580
      %v2613 = vpack.c.bf16 %v2581, %v2581
      %v2614 = vpack.c.bf16 %v2582, %v2582
      %v2615 = vpack.c.bf16 %v2583, %v2583
      %v2616 = vpack.c.bf16 %v2584, %v2584
      %v2617 = vpack.c.bf16 %v2585, %v2585
      %v2618 = vpack.c.bf16 %v2586, %v2586
      %v2619 = vpack.c.bf16 %v2587, %v2587
      %v2620 = vpack.c.bf16 %v2588, %v2588
      %v2621 = vpack.c.bf16 %v2589, %v2589
      %v2622 = vpack.c.bf16 %v2590, %v2590
      %v2623 = vpack.c.bf16 %v2591, %v2591
      %v2624 = vpack.c.bf16 %v2592, %v2592
      %v2625 = vpack.c.bf16 %v2593, %v2593
      %v2626 = vpack.c.bf16 %v2594, %v2594
      %v2627 = vpack.c.bf16 %v2595, %v2595
      %v2628 = vpack.c.bf16 %v2596, %v2596
      %v2629 = vpack.c.bf16 %v2597, %v2597
      %2630 = vst [vmem:[%s231 + $0x8] sm:$0xf] %v2598
      %2631 = vst [vmem:[%s231 + $0x18] sm:$0xf] %v2599
      %2632 = vst [vmem:[%s231 + $0x28] sm:$0xf] %v2600
      %2633 = vst [vmem:[%s231 + $0x38] sm:$0xf] %v2601
      %2634 = vst [vmem:[%s231 + $0x48] sm:$0xf] %v2602
      %2635 = vst [vmem:[%s231 + $0x58] sm:$0xf] %v2603
      %2636 = vst [vmem:[%s231 + $0x68] sm:$0xf] %v2604
      %2637 = vst [vmem:[%s231 + $0x78] sm:$0xf] %v2605
      %2638 = vst [vmem:[%s231 + $0x88] sm:$0xf] %v2606
      %2639 = vst [vmem:[%s231 + $0x98] sm:$0xf] %v2607
      %2640 = vst [vmem:[%s231 + $0xa8] sm:$0xf] %v2608
      %2641 = vst [vmem:[%s231 + $0xb8] sm:$0xf] %v2609
      %2642 = vst [vmem:[%s231 + $0xc8] sm:$0xf] %v2610
      %2643 = vst [vmem:[%s231 + $0xd8] sm:$0xf] %v2611
      %2644 = vst [vmem:[%s231 + $0xe8] sm:$0xf] %v2612
      %2645 = vst [vmem:[%s231 + $0xf8] sm:$0xf] %v2613
      %2646 = vst [vmem:[%s231 + $0x108] sm:$0xf] %v2614
      %2647 = vst [vmem:[%s231 + $0x118] sm:$0xf] %v2615
      %2648 = vst [vmem:[%s231 + $0x128] sm:$0xf] %v2616
      %2649 = vst [vmem:[%s231 + $0x138] sm:$0xf] %v2617
      %2650 = vst [vmem:[%s231 + $0x148] sm:$0xf] %v2618
      %2651 = vst [vmem:[%s231 + $0x158] sm:$0xf] %v2619
      %2652 = vst [vmem:[%s231 + $0x168] sm:$0xf] %v2620
      %2653 = vst [vmem:[%s231 + $0x178] sm:$0xf] %v2621
      %2654 = vst [vmem:[%s231 + $0x188] sm:$0xf] %v2622
      %2655 = vst [vmem:[%s231 + $0x198] sm:$0xf] %v2623
      %2656 = vst [vmem:[%s231 + $0x1a8] sm:$0xf] %v2624
      %2657 = vst [vmem:[%s231 + $0x1b8] sm:$0xf] %v2625
      %2658 = vst [vmem:[%s231 + $0x1c8] sm:$0xf] %v2626
      %2659 = vst [vmem:[%s231 + $0x1d8] sm:$0xf] %v2627
      %2660 = vst [vmem:[%s231 + $0x1e8] sm:$0xf] %v2628
      %2661 = vst [vmem:[%s231 + $0x1f8] sm:$0xf] %v2629
      %2662 = vst [vmem:[#allocation2] sm:$0xff] -inf
      %2663 = vst [vmem:[#allocation2 + $0x8] sm:$0xff] -inf
      %2664 = vst [vmem:[#allocation2 + $0x10] sm:$0xf] -inf
      %2665 = vst [vmem:[#allocation2 + $0x18] sm:$0xff] -inf
      %2666 = vst [vmem:[#allocation2 + $0x20] sm:$0xff] -inf
      %2667 = vst [vmem:[#allocation2 + $0x28] sm:$0xf] -inf
      %2668 = vst [vmem:[#allocation2 + $0x30] sm:$0xff] -inf
      %2669 = vst [vmem:[#allocation2 + $0x38] sm:$0xff] -inf
      %2670 = vst [vmem:[#allocation2 + $0x40] sm:$0xf] -inf
      %2671 = vst [vmem:[#allocation2 + $0x48] sm:$0xff] -inf
      %2672 = vst [vmem:[#allocation2 + $0x50] sm:$0xff] -inf
      %2673 = vst [vmem:[#allocation2 + $0x58] sm:$0xf] -inf
      %2674 = vst [vmem:[#allocation2 + $0x60] sm:$0xff] -inf
      %2675 = vst [vmem:[#allocation2 + $0x68] sm:$0xff] -inf
      %2676 = vst [vmem:[#allocation2 + $0x70] sm:$0xf] -inf
      %2677 = vst [vmem:[#allocation2 + $0x78] sm:$0xff] -inf
      %2678 = vst [vmem:[#allocation2 + $0x80] sm:$0xff] -inf
      %2679 = vst [vmem:[#allocation2 + $0x88] sm:$0xf] -inf
      %2680 = vst [vmem:[#allocation2 + $0x90] sm:$0xff] -inf
      %2681 = vst [vmem:[#allocation2 + $0x98] sm:$0xff] -inf
      %2682 = vst [vmem:[#allocation2 + $0xa0] sm:$0xf] -inf
      %2683 = vst [vmem:[#allocation2 + $0xa8] sm:$0xff] -inf
      %2684 = vst [vmem:[#allocation2 + $0xb0] sm:$0xff] -inf
      %2685 = vst [vmem:[#allocation2 + $0xb8] sm:$0xf] -inf
      %2686 = vst [vmem:[#allocation2 + $0xc0] sm:$0xff] -inf
      %2687 = vst [vmem:[#allocation2 + $0xc8] sm:$0xff] -inf
      %2688 = vst [vmem:[#allocation2 + $0xd0] sm:$0xf] -inf
      %2689 = vst [vmem:[#allocation2 + $0xd8] sm:$0xff] -inf
      %2690 = vst [vmem:[#allocation2 + $0xe0] sm:$0xff] -inf
      %2691 = vst [vmem:[#allocation2 + $0xe8] sm:$0xf] -inf
      %2692 = vst [vmem:[#allocation2 + $0xf0] sm:$0xff] -inf
      %2693 = vst [vmem:[#allocation2 + $0xf8] sm:$0xff] -inf
      %2694 = vst [vmem:[#allocation2 + $0x100] sm:$0xf] -inf
      %2695 = vst [vmem:[#allocation2 + $0x108] sm:$0xff] -inf
      %2696 = vst [vmem:[#allocation2 + $0x110] sm:$0xff] -inf
      %2697 = vst [vmem:[#allocation2 + $0x118] sm:$0xf] -inf
      %2698 = vst [vmem:[#allocation2 + $0x120] sm:$0xff] -inf
      %2699 = vst [vmem:[#allocation2 + $0x128] sm:$0xff] -inf
      %2700 = vst [vmem:[#allocation2 + $0x130] sm:$0xf] -inf
      %2701 = vst [vmem:[#allocation2 + $0x138] sm:$0xff] -inf
      %2702 = vst [vmem:[#allocation2 + $0x140] sm:$0xff] -inf
      %2703 = vst [vmem:[#allocation2 + $0x148] sm:$0xf] -inf
      %2704 = vst [vmem:[#allocation2 + $0x150] sm:$0xff] -inf
      %2705 = vst [vmem:[#allocation2 + $0x158] sm:$0xff] -inf
      %2706 = vst [vmem:[#allocation2 + $0x160] sm:$0xf] -inf
      %2707 = vst [vmem:[#allocation2 + $0x168] sm:$0xff] -inf
      %2708 = vst [vmem:[#allocation2 + $0x170] sm:$0xff] -inf
      %2709 = vst [vmem:[#allocation2 + $0x178] sm:$0xf] -inf
      %2710 = vst [vmem:[#allocation2 + $0x180] sm:$0xff] -inf
      %2711 = vst [vmem:[#allocation2 + $0x188] sm:$0xff] -inf
      %2712 = vst [vmem:[#allocation2 + $0x190] sm:$0xf] -inf
      %2713 = vst [vmem:[#allocation2 + $0x198] sm:$0xff] -inf
      %2714 = vst [vmem:[#allocation2 + $0x1a0] sm:$0xff] -inf
      %2715 = vst [vmem:[#allocation2 + $0x1a8] sm:$0xf] -inf
      %2716 = vst [vmem:[#allocation2 + $0x1b0] sm:$0xff] -inf
      %2717 = vst [vmem:[#allocation2 + $0x1b8] sm:$0xff] -inf
      %2718 = vst [vmem:[#allocation2 + $0x1c0] sm:$0xf] -inf
      %2719 = vst [vmem:[#allocation2 + $0x1c8] sm:$0xff] -inf
      %2720 = vst [vmem:[#allocation2 + $0x1d0] sm:$0xff] -inf
      %2721 = vst [vmem:[#allocation2 + $0x1d8] sm:$0xf] -inf
      %2722 = vst [vmem:[%s653 + $0x2] sm:$0xff] %v2566
      %2723 = vst [vmem:[%s653 + $0xa] sm:$0xff] %v2567
      %2724 = vst [vmem:[%s653 + $0x1a] sm:$0xff] %v2568
      %2725 = vst [vmem:[%s653 + $0x22] sm:$0xff] %v2569
      %2726 = vst [vmem:[%s653 + $0x32] sm:$0xff] %v2570
      %2727 = vst [vmem:[%s653 + $0x3a] sm:$0xff] %v2571
      %2728 = vst [vmem:[%s653 + $0x4a] sm:$0xff] %v2572
      %2729 = vst [vmem:[%s653 + $0x52] sm:$0xff] %v2573
      %2730 = vst [vmem:[%s653 + $0x62] sm:$0xff] %v2574
      %2731 = vst [vmem:[%s653 + $0x6a] sm:$0xff] %v2575
      %2732 = vst [vmem:[%s653 + $0x7a] sm:$0xff] %v2576
      %2733 = vst [vmem:[%s653 + $0x82] sm:$0xff] %v2577
      %2734 = vst [vmem:[%s653 + $0x92] sm:$0xff] %v2578
      %2735 = vst [vmem:[%s653 + $0x9a] sm:$0xff] %v2579
      %2736 = vst [vmem:[%s653 + $0xaa] sm:$0xff] %v2580
      %2737 = vst [vmem:[%s653 + $0xb2] sm:$0xff] %v2581
      %2738 = vst [vmem:[%s653 + $0xc2] sm:$0xff] %v2582
      %2739 = vst [vmem:[%s653 + $0xca] sm:$0xff] %v2583
      %2740 = vst [vmem:[%s653 + $0xda] sm:$0xff] %v2584
      %2741 = vst [vmem:[%s653 + $0xe2] sm:$0xff] %v2585
      %2742 = vst [vmem:[%s653 + $0xf2] sm:$0xff] %v2586
      %2743 = vst [vmem:[%s653 + $0xfa] sm:$0xff] %v2587
      %2744 = vst [vmem:[%s653 + $0x10a] sm:$0xff] %v2588
      %2745 = vst [vmem:[%s653 + $0x112] sm:$0xff] %v2589
      %2746 = vst [vmem:[%s653 + $0x122] sm:$0xff] %v2590
      %2747 = vst [vmem:[%s653 + $0x12a] sm:$0xff] %v2591
      %2748 = vst [vmem:[%s653 + $0x13a] sm:$0xff] %v2592
      %2749 = vst [vmem:[%s653 + $0x142] sm:$0xff] %v2593
      %2750 = vst [vmem:[%s653 + $0x152] sm:$0xff] %v2594
      %2751 = vst [vmem:[%s653 + $0x15a] sm:$0xff] %v2595
      %2752 = vst [vmem:[%s653 + $0x16a] sm:$0xff] %v2596
      %2753 = vst [vmem:[%s653 + $0x172] sm:$0xff] %v2597
      %v2754 = vld [vmem:[#allocation2] sm:$0xff]
      %v2755 = vld [vmem:[#allocation2 + $0x8] sm:$0xff]
      %v2756 = vld [vmem:[#allocation2 + $0x10] sm:$0xf]
      %v2757 = vld [vmem:[#allocation2 + $0x18] sm:$0xff]
      %v2758 = vld [vmem:[#allocation2 + $0x20] sm:$0xff]
      %v2759 = vld [vmem:[#allocation2 + $0x28] sm:$0xf]
      %v2760 = vld [vmem:[#allocation2 + $0x30] sm:$0xff]
      %v2761 = vld [vmem:[#allocation2 + $0x38] sm:$0xff]
      %v2762 = vld [vmem:[#allocation2 + $0x40] sm:$0xf]
      %v2763 = vld [vmem:[#allocation2 + $0x48] sm:$0xff]
      %v2764 = vld [vmem:[#allocation2 + $0x50] sm:$0xff]
      %v2765 = vld [vmem:[#allocation2 + $0x58] sm:$0xf]
      %v2766 = vld [vmem:[#allocation2 + $0x60] sm:$0xff]
      %v2767 = vld [vmem:[#allocation2 + $0x68] sm:$0xff]
      %v2768 = vld [vmem:[#allocation2 + $0x70] sm:$0xf]
      %v2769 = vld [vmem:[#allocation2 + $0x78] sm:$0xff]
      %v2770 = vld [vmem:[#allocation2 + $0x80] sm:$0xff]
      %v2771 = vld [vmem:[#allocation2 + $0x88] sm:$0xf]
      %v2772 = vld [vmem:[#allocation2 + $0x90] sm:$0xff]
      %v2773 = vld [vmem:[#allocation2 + $0x98] sm:$0xff]
      %v2774 = vld [vmem:[#allocation2 + $0xa0] sm:$0xf]
      %v2775 = vld [vmem:[#allocation2 + $0xa8] sm:$0xff]
      %v2776 = vld [vmem:[#allocation2 + $0xb0] sm:$0xff]
      %v2777 = vld [vmem:[#allocation2 + $0xb8] sm:$0xf]
      %v2778 = vld [vmem:[#allocation2 + $0xc0] sm:$0xff]
      %v2779 = vld [vmem:[#allocation2 + $0xc8] sm:$0xff]
      %v2780 = vld [vmem:[#allocation2 + $0xd0] sm:$0xf]
      %v2781 = vld [vmem:[#allocation2 + $0xd8] sm:$0xff]
      %v2782 = vld [vmem:[#allocation2 + $0xe0] sm:$0xff]
      %v2783 = vld [vmem:[#allocation2 + $0xe8] sm:$0xf]
      %v2784 = vld [vmem:[#allocation2 + $0xf0] sm:$0xff]
      %v2785 = vld [vmem:[#allocation2 + $0xf8] sm:$0xff]
      %v2786 = vld [vmem:[#allocation2 + $0x100] sm:$0xf]
      %v2787 = vld [vmem:[#allocation2 + $0x108] sm:$0xff]
      %v2788 = vld [vmem:[#allocation2 + $0x110] sm:$0xff]
      %v2789 = vld [vmem:[#allocation2 + $0x118] sm:$0xf]
      %v2790 = vld [vmem:[#allocation2 + $0x120] sm:$0xff]
      %v2791 = vld [vmem:[#allocation2 + $0x128] sm:$0xff]
      %v2792 = vld [vmem:[#allocation2 + $0x130] sm:$0xf]
      %v2793 = vld [vmem:[#allocation2 + $0x138] sm:$0xff]
      %v2794 = vld [vmem:[#allocation2 + $0x140] sm:$0xff]
      %v2795 = vld [vmem:[#allocation2 + $0x148] sm:$0xf]
      %v2796 = vld [vmem:[#allocation2 + $0x150] sm:$0xff]
      %v2797 = vld [vmem:[#allocation2 + $0x158] sm:$0xff]
      %v2798 = vld [vmem:[#allocation2 + $0x160] sm:$0xf]
      %v2799 = vld [vmem:[#allocation2 + $0x168] sm:$0xff]
      %v2800 = vld [vmem:[#allocation2 + $0x170] sm:$0xff]
      %v2801 = vld [vmem:[#allocation2 + $0x178] sm:$0xf]
      %v2802 = vld [vmem:[#allocation2 + $0x180] sm:$0xff]
      %v2803 = vld [vmem:[#allocation2 + $0x188] sm:$0xff]
      %v2804 = vld [vmem:[#allocation2 + $0x190] sm:$0xf]
      %v2805 = vld [vmem:[#allocation2 + $0x198] sm:$0xff]
      %v2806 = vld [vmem:[#allocation2 + $0x1a0] sm:$0xff]
      %v2807 = vld [vmem:[#allocation2 + $0x1a8] sm:$0xf]
      %v2808 = vld [vmem:[#allocation2 + $0x1b0] sm:$0xff]
      %v2809 = vld [vmem:[#allocation2 + $0x1b8] sm:$0xff]
      %v2810 = vld [vmem:[#allocation2 + $0x1c0] sm:$0xf]
      %v2811 = vld [vmem:[#allocation2 + $0x1c8] sm:$0xff]
      %v2812 = vld [vmem:[#allocation2 + $0x1d0] sm:$0xff]
      %v2813 = vld [vmem:[#allocation2 + $0x1d8] sm:$0xf]
      %v2814 = vmax.f32 %v2754, %v2757
      %v2815 = vmax.f32 %v2755, %v2758
      %v2816 = vmax.f32 %v2756, %v2759
      %v2817 = vmax.f32 %v2757, %v2760
      %v2818 = vmax.f32 %v2758, %v2761
      %v2819 = vmax.f32 %v2759, %v2762
      %v2820 = vmax.f32 %v2760, %v2763
      %v2821 = vmax.f32 %v2761, %v2764
      %v2822 = vmax.f32 %v2762, %v2765
      %v2823 = vmax.f32 %v2763, %v2766
      %v2824 = vmax.f32 %v2764, %v2767
      %v2825 = vmax.f32 %v2765, %v2768
      %v2826 = vmax.f32 %v2766, %v2769
      %v2827 = vmax.f32 %v2767, %v2770
      %v2828 = vmax.f32 %v2768, %v2771
      %v2829 = vmax.f32 %v2769, %v2772
      %v2830 = vmax.f32 %v2770, %v2773
      %v2831 = vmax.f32 %v2771, %v2774
      %v2832 = vmax.f32 %v2772, %v2775
      %v2833 = vmax.f32 %v2773, %v2776
      %v2834 = vmax.f32 %v2774, %v2777
      %v2835 = vmax.f32 %v2775, %v2778
      %v2836 = vmax.f32 %v2776, %v2779
      %v2837 = vmax.f32 %v2777, %v2780
      %v2838 = vmax.f32 %v2778, %v2781
      %v2839 = vmax.f32 %v2779, %v2782
      %v2840 = vmax.f32 %v2780, %v2783
      %v2841 = vmax.f32 %v2781, %v2784
      %v2842 = vmax.f32 %v2782, %v2785
      %v2843 = vmax.f32 %v2783, %v2786
      %v2844 = vmax.f32 %v2784, %v2787
      %v2845 = vmax.f32 %v2785, %v2788
      %v2846 = vmax.f32 %v2786, %v2789
      %v2847 = vmax.f32 %v2787, %v2790
      %v2848 = vmax.f32 %v2788, %v2791
      %v2849 = vmax.f32 %v2789, %v2792
      %v2850 = vmax.f32 %v2790, %v2793
      %v2851 = vmax.f32 %v2791, %v2794
      %v2852 = vmax.f32 %v2792, %v2795
      %v2853 = vmax.f32 %v2793, %v2796
      %v2854 = vmax.f32 %v2794, %v2797
      %v2855 = vmax.f32 %v2795, %v2798
      %v2856 = vmax.f32 %v2796, %v2799
      %v2857 = vmax.f32 %v2797, %v2800
      %v2858 = vmax.f32 %v2798, %v2801
      %v2859 = vmax.f32 %v2799, %v2802
      %v2860 = vmax.f32 %v2800, %v2803
      %v2861 = vmax.f32 %v2801, %v2804
      %v2862 = vmax.f32 %v2814, %v2760
      %v2863 = vmax.f32 %v2815, %v2761
      %v2864 = vmax.f32 %v2816, %v2762
      %v2865 = vmax.f32 %v2817, %v2763
      %v2866 = vmax.f32 %v2818, %v2764
      %v2867 = vmax.f32 %v2819, %v2765
      %v2868 = vmax.f32 %v2820, %v2766
      %v2869 = vmax.f32 %v2821, %v2767
      %v2870 = vmax.f32 %v2822, %v2768
      %v2871 = vmax.f32 %v2823, %v2769
      %v2872 = vmax.f32 %v2824, %v2770
      %v2873 = vmax.f32 %v2825, %v2771
      %v2874 = vmax.f32 %v2826, %v2772
      %v2875 = vmax.f32 %v2827, %v2773
      %v2876 = vmax.f32 %v2828, %v2774
      %v2877 = vmax.f32 %v2829, %v2775
      %v2878 = vmax.f32 %v2830, %v2776
      %v2879 = vmax.f32 %v2831, %v2777
      %v2880 = vmax.f32 %v2832, %v2778
      %v2881 = vmax.f32 %v2833, %v2779
      %v2882 = vmax.f32 %v2834, %v2780
      %v2883 = vmax.f32 %v2835, %v2781
      %v2884 = vmax.f32 %v2836, %v2782
      %v2885 = vmax.f32 %v2837, %v2783
      %v2886 = vmax.f32 %v2838, %v2784
      %v2887 = vmax.f32 %v2839, %v2785
      %v2888 = vmax.f32 %v2840, %v2786
      %v2889 = vmax.f32 %v2841, %v2787
      %v2890 = vmax.f32 %v2842, %v2788
      %v2891 = vmax.f32 %v2843, %v2789
      %v2892 = vmax.f32 %v2844, %v2790
      %v2893 = vmax.f32 %v2845, %v2791
      %v2894 = vmax.f32 %v2846, %v2792
      %v2895 = vmax.f32 %v2847, %v2793
      %v2896 = vmax.f32 %v2848, %v2794
      %v2897 = vmax.f32 %v2849, %v2795
      %v2898 = vmax.f32 %v2850, %v2796
      %v2899 = vmax.f32 %v2851, %v2797
      %v2900 = vmax.f32 %v2852, %v2798
      %v2901 = vmax.f32 %v2853, %v2799
      %v2902 = vmax.f32 %v2854, %v2800
      %v2903 = vmax.f32 %v2855, %v2801
      %v2904 = vmax.f32 %v2856, %v2802
      %v2905 = vmax.f32 %v2857, %v2803
      %v2906 = vmax.f32 %v2858, %v2804
      %v2907 = vmax.f32 %v2859, %v2805
      %v2908 = vmax.f32 %v2860, %v2806
      %v2909 = vmax.f32 %v2861, %v2807
      %v2910 = vmax.f32 %v2862, %v2763
      %v2911 = vmax.f32 %v2863, %v2764
      %v2912 = vmax.f32 %v2864, %v2765
      %v2913 = vmax.f32 %v2865, %v2766
      %v2914 = vmax.f32 %v2866, %v2767
      %v2915 = vmax.f32 %v2867, %v2768
      %v2916 = vmax.f32 %v2868, %v2769
      %v2917 = vmax.f32 %v2869, %v2770
      %v2918 = vmax.f32 %v2870, %v2771
      %v2919 = vmax.f32 %v2871, %v2772
      %v2920 = vmax.f32 %v2872, %v2773
      %v2921 = vmax.f32 %v2873, %v2774
      %v2922 = vmax.f32 %v2874, %v2775
      %v2923 = vmax.f32 %v2875, %v2776
      %v2924 = vmax.f32 %v2876, %v2777
      %v2925 = vmax.f32 %v2877, %v2778
      %v2926 = vmax.f32 %v2878, %v2779
      %v2927 = vmax.f32 %v2879, %v2780
      %v2928 = vmax.f32 %v2880, %v2781
      %v2929 = vmax.f32 %v2881, %v2782
      %v2930 = vmax.f32 %v2882, %v2783
      %v2931 = vmax.f32 %v2883, %v2784
      %v2932 = vmax.f32 %v2884, %v2785
      %v2933 = vmax.f32 %v2885, %v2786
      %v2934 = vmax.f32 %v2886, %v2787
      %v2935 = vmax.f32 %v2887, %v2788
      %v2936 = vmax.f32 %v2888, %v2789
      %v2937 = vmax.f32 %v2889, %v2790
      %v2938 = vmax.f32 %v2890, %v2791
      %v2939 = vmax.f32 %v2891, %v2792
      %v2940 = vmax.f32 %v2892, %v2793
      %v2941 = vmax.f32 %v2893, %v2794
      %v2942 = vmax.f32 %v2894, %v2795
      %v2943 = vmax.f32 %v2895, %v2796
      %v2944 = vmax.f32 %v2896, %v2797
      %v2945 = vmax.f32 %v2897, %v2798
      %v2946 = vmax.f32 %v2898, %v2799
      %v2947 = vmax.f32 %v2899, %v2800
      %v2948 = vmax.f32 %v2900, %v2801
      %v2949 = vmax.f32 %v2901, %v2802
      %v2950 = vmax.f32 %v2902, %v2803
      %v2951 = vmax.f32 %v2903, %v2804
      %v2952 = vmax.f32 %v2904, %v2805
      %v2953 = vmax.f32 %v2905, %v2806
      %v2954 = vmax.f32 %v2906, %v2807
      %v2955 = vmax.f32 %v2907, %v2808
      %v2956 = vmax.f32 %v2908, %v2809
      %v2957 = vmax.f32 %v2909, %v2810
      %v2958 = vmax.f32 %v2910, %v2766
      %v2959 = vmax.f32 %v2911, %v2767
      %v2960 = vmax.f32 %v2912, %v2768
      %v2961 = vmax.f32 %v2913, %v2769
      %v2962 = vmax.f32 %v2914, %v2770
      %v2963 = vmax.f32 %v2915, %v2771
      %v2964 = vmax.f32 %v2916, %v2772
      %v2965 = vmax.f32 %v2917, %v2773
      %v2966 = vmax.f32 %v2918, %v2774
      %v2967 = vmax.f32 %v2919, %v2775
      %v2968 = vmax.f32 %v2920, %v2776
      %v2969 = vmax.f32 %v2921, %v2777
      %v2970 = vmax.f32 %v2922, %v2778
      %v2971 = vmax.f32 %v2923, %v2779
      %v2972 = vmax.f32 %v2924, %v2780
      %v2973 = vmax.f32 %v2925, %v2781
      %v2974 = vmax.f32 %v2926, %v2782
      %v2975 = vmax.f32 %v2927, %v2783
      %v2976 = vmax.f32 %v2928, %v2784
      %v2977 = vmax.f32 %v2929, %v2785
      %v2978 = vmax.f32 %v2930, %v2786
      %v2979 = vmax.f32 %v2931, %v2787
      %v2980 = vmax.f32 %v2932, %v2788
      %v2981 = vmax.f32 %v2933, %v2789
      %v2982 = vmax.f32 %v2934, %v2790
      %v2983 = vmax.f32 %v2935, %v2791
      %v2984 = vmax.f32 %v2936, %v2792
      %v2985 = vmax.f32 %v2937, %v2793
      %v2986 = vmax.f32 %v2938, %v2794
      %v2987 = vmax.f32 %v2939, %v2795
      %v2988 = vmax.f32 %v2940, %v2796
      %v2989 = vmax.f32 %v2941, %v2797
      %v2990 = vmax.f32 %v2942, %v2798
      %v2991 = vmax.f32 %v2943, %v2799
      %v2992 = vmax.f32 %v2944, %v2800
      %v2993 = vmax.f32 %v2945, %v2801
      %v2994 = vmax.f32 %v2946, %v2802
      %v2995 = vmax.f32 %v2947, %v2803
      %v2996 = vmax.f32 %v2948, %v2804
      %v2997 = vmax.f32 %v2949, %v2805
      %v2998 = vmax.f32 %v2950, %v2806
      %v2999 = vmax.f32 %v2951, %v2807
      %v3000 = vmax.f32 %v2952, %v2808
      %v3001 = vmax.f32 %v2953, %v2809
      %v3002 = vmax.f32 %v2954, %v2810
      %v3003 = vmax.f32 %v2955, %v2811
      %v3004 = vmax.f32 %v2956, %v2812
      %v3005 = vmax.f32 %v2957, %v2813
      %v3054 = vrot.slane %v2958, 1
      %v3055 = vrot.slane %v2959, 1
      %v3056 = vsel %vm986, %v3054, %v3055
      %v3057 = vrot.slane %v2960, 1
      %v3058 = vsel %vm986, %v3055, %v3057
      %v3059 = vrot.slane %v2961, 1
      %v3060 = vrot.slane %v2962, 1
      %v3061 = vsel %vm986, %v3059, %v3060
      %v3062 = vrot.slane %v2963, 1
      %v3063 = vsel %vm986, %v3060, %v3062
      %v3064 = vrot.slane %v2964, 1
      %v3065 = vrot.slane %v2965, 1
      %v3066 = vsel %vm986, %v3064, %v3065
      %v3067 = vrot.slane %v2966, 1
      %v3068 = vsel %vm986, %v3065, %v3067
      %v3069 = vrot.slane %v2967, 1
      %v3070 = vrot.slane %v2968, 1
      %v3071 = vsel %vm986, %v3069, %v3070
      %v3072 = vrot.slane %v2969, 1
      %v3073 = vsel %vm986, %v3070, %v3072
      %v3074 = vrot.slane %v2970, 1
      %v3075 = vrot.slane %v2971, 1
      %v3076 = vsel %vm986, %v3074, %v3075
      %v3077 = vrot.slane %v2972, 1
      %v3078 = vsel %vm986, %v3075, %v3077
      %v3079 = vrot.slane %v2973, 1
      %v3080 = vrot.slane %v2974, 1
      %v3081 = vsel %vm986, %v3079, %v3080
      %v3082 = vrot.slane %v2975, 1
      %v3083 = vsel %vm986, %v3080, %v3082
      %v3084 = vrot.slane %v2976, 1
      %v3085 = vrot.slane %v2977, 1
      %v3086 = vsel %vm986, %v3084, %v3085
      %v3087 = vrot.slane %v2978, 1
      %v3088 = vsel %vm986, %v3085, %v3087
      %v3089 = vrot.slane %v2979, 1
      %v3090 = vrot.slane %v2980, 1
      %v3091 = vsel %vm986, %v3089, %v3090
      %v3092 = vrot.slane %v2981, 1
      %v3093 = vsel %vm986, %v3090, %v3092
      %v3094 = vrot.slane %v2982, 1
      %v3095 = vrot.slane %v2983, 1
      %v3096 = vsel %vm986, %v3094, %v3095
      %v3097 = vrot.slane %v2984, 1
      %v3098 = vsel %vm986, %v3095, %v3097
      %v3099 = vrot.slane %v2985, 1
      %v3100 = vrot.slane %v2986, 1
      %v3101 = vsel %vm986, %v3099, %v3100
      %v3102 = vrot.slane %v2987, 1
      %v3103 = vsel %vm986, %v3100, %v3102
      %v3104 = vrot.slane %v2988, 1
      %v3105 = vrot.slane %v2989, 1
      %v3106 = vsel %vm986, %v3104, %v3105
      %v3107 = vrot.slane %v2990, 1
      %v3108 = vsel %vm986, %v3105, %v3107
      %v3109 = vrot.slane %v2991, 1
      %v3110 = vrot.slane %v2992, 1
      %v3111 = vsel %vm986, %v3109, %v3110
      %v3112 = vrot.slane %v2993, 1
      %v3113 = vsel %vm986, %v3110, %v3112
      %v3114 = vrot.slane %v2994, 1
      %v3115 = vrot.slane %v2995, 1
      %v3116 = vsel %vm986, %v3114, %v3115
      %v3117 = vrot.slane %v2996, 1
      %v3118 = vsel %vm986, %v3115, %v3117
      %v3119 = vrot.slane %v2997, 1
      %v3120 = vrot.slane %v2998, 1
      %v3121 = vsel %vm986, %v3119, %v3120
      %v3122 = vrot.slane %v2999, 1
      %v3123 = vsel %vm986, %v3120, %v3122
      %v3124 = vrot.slane %v3000, 1
      %v3125 = vrot.slane %v3001, 1
      %v3126 = vsel %vm986, %v3124, %v3125
      %v3127 = vrot.slane %v3002, 1
      %v3128 = vsel %vm986, %v3125, %v3127
      %v3129 = vrot.slane %v3003, 1
      %v3130 = vrot.slane %v3004, 1
      %v3131 = vsel %vm986, %v3129, %v3130
      %v3132 = vrot.slane %v3005, 1
      %v3133 = vsel %vm986, %v3130, %v3132
      %v3166 = vmax.f32 %v2958, %v3056
      %v3167 = vmax.f32 %v2959, %v3058
      %v3168 = vmax.f32 %v2961, %v3061
      %v3169 = vmax.f32 %v2962, %v3063
      %v3170 = vmax.f32 %v2964, %v3066
      %v3171 = vmax.f32 %v2965, %v3068
      %v3172 = vmax.f32 %v2967, %v3071
      %v3173 = vmax.f32 %v2968, %v3073
      %v3174 = vmax.f32 %v2970, %v3076
      %v3175 = vmax.f32 %v2971, %v3078
      %v3176 = vmax.f32 %v2973, %v3081
      %v3177 = vmax.f32 %v2974, %v3083
      %v3178 = vmax.f32 %v2976, %v3086
      %v3179 = vmax.f32 %v2977, %v3088
      %v3180 = vmax.f32 %v2979, %v3091
      %v3181 = vmax.f32 %v2980, %v3093
      %v3182 = vmax.f32 %v2982, %v3096
      %v3183 = vmax.f32 %v2983, %v3098
      %v3184 = vmax.f32 %v2985, %v3101
      %v3185 = vmax.f32 %v2986, %v3103
      %v3186 = vmax.f32 %v2988, %v3106
      %v3187 = vmax.f32 %v2989, %v3108
      %v3188 = vmax.f32 %v2991, %v3111
      %v3189 = vmax.f32 %v2992, %v3113
      %v3190 = vmax.f32 %v2994, %v3116
      %v3191 = vmax.f32 %v2995, %v3118
      %v3192 = vmax.f32 %v2997, %v3121
      %v3193 = vmax.f32 %v2998, %v3123
      %v3194 = vmax.f32 %v3000, %v3126
      %v3195 = vmax.f32 %v3001, %v3128
      %v3196 = vmax.f32 %v3003, %v3131
      %v3197 = vmax.f32 %v3004, %v3133
      %v3198 = vrot.slane %v2958, 2
      %v3199 = vrot.slane %v2959, 2
      %v3200 = vsel %vm1131, %v3198, %v3199
      %v3201 = vrot.slane %v2960, 2
      %v3202 = vsel %vm1131, %v3199, %v3201
      %v3203 = vrot.slane %v2961, 2
      %v3204 = vrot.slane %v2962, 2
      %v3205 = vsel %vm1131, %v3203, %v3204
      %v3206 = vrot.slane %v2963, 2
      %v3207 = vsel %vm1131, %v3204, %v3206
      %v3208 = vrot.slane %v2964, 2
      %v3209 = vrot.slane %v2965, 2
      %v3210 = vsel %vm1131, %v3208, %v3209
      %v3211 = vrot.slane %v2966, 2
      %v3212 = vsel %vm1131, %v3209, %v3211
      %v3213 = vrot.slane %v2967, 2
      %v3214 = vrot.slane %v2968, 2
      %v3215 = vsel %vm1131, %v3213, %v3214
      %v3216 = vrot.slane %v2969, 2
      %v3217 = vsel %vm1131, %v3214, %v3216
      %v3218 = vrot.slane %v2970, 2
      %v3219 = vrot.slane %v2971, 2
      %v3220 = vsel %vm1131, %v3218, %v3219
      %v3221 = vrot.slane %v2972, 2
      %v3222 = vsel %vm1131, %v3219, %v3221
      %v3223 = vrot.slane %v2973, 2
      %v3224 = vrot.slane %v2974, 2
      %v3225 = vsel %vm1131, %v3223, %v3224
      %v3226 = vrot.slane %v2975, 2
      %v3227 = vsel %vm1131, %v3224, %v3226
      %v3228 = vrot.slane %v2976, 2
      %v3229 = vrot.slane %v2977, 2
      %v3230 = vsel %vm1131, %v3228, %v3229
      %v3231 = vrot.slane %v2978, 2
      %v3232 = vsel %vm1131, %v3229, %v3231
      %v3233 = vrot.slane %v2979, 2
      %v3234 = vrot.slane %v2980, 2
      %v3235 = vsel %vm1131, %v3233, %v3234
      %v3236 = vrot.slane %v2981, 2
      %v3237 = vsel %vm1131, %v3234, %v3236
      %v3238 = vrot.slane %v2982, 2
      %v3239 = vrot.slane %v2983, 2
      %v3240 = vsel %vm1131, %v3238, %v3239
      %v3241 = vrot.slane %v2984, 2
      %v3242 = vsel %vm1131, %v3239, %v3241
      %v3243 = vrot.slane %v2985, 2
      %v3244 = vrot.slane %v2986, 2
      %v3245 = vsel %vm1131, %v3243, %v3244
      %v3246 = vrot.slane %v2987, 2
      %v3247 = vsel %vm1131, %v3244, %v3246
      %v3248 = vrot.slane %v2988, 2
      %v3249 = vrot.slane %v2989, 2
      %v3250 = vsel %vm1131, %v3248, %v3249
      %v3251 = vrot.slane %v2990, 2
      %v3252 = vsel %vm1131, %v3249, %v3251
      %v3253 = vrot.slane %v2991, 2
      %v3254 = vrot.slane %v2992, 2
      %v3255 = vsel %vm1131, %v3253, %v3254
      %v3256 = vrot.slane %v2993, 2
      %v3257 = vsel %vm1131, %v3254, %v3256
      %v3258 = vrot.slane %v2994, 2
      %v3259 = vrot.slane %v2995, 2
      %v3260 = vsel %vm1131, %v3258, %v3259
      %v3261 = vrot.slane %v2996, 2
      %v3262 = vsel %vm1131, %v3259, %v3261
      %v3263 = vrot.slane %v2997, 2
      %v3264 = vrot.slane %v2998, 2
      %v3265 = vsel %vm1131, %v3263, %v3264
      %v3266 = vrot.slane %v2999, 2
      %v3267 = vsel %vm1131, %v3264, %v3266
      %v3268 = vrot.slane %v3000, 2
      %v3269 = vrot.slane %v3001, 2
      %v3270 = vsel %vm1131, %v3268, %v3269
      %v3271 = vrot.slane %v3002, 2
      %v3272 = vsel %vm1131, %v3269, %v3271
      %v3273 = vrot.slane %v3003, 2
      %v3274 = vrot.slane %v3004, 2
      %v3275 = vsel %vm1131, %v3273, %v3274
      %v3276 = vrot.slane %v3005, 2
      %v3277 = vsel %vm1131, %v3274, %v3276
      %v3310 = vmax.f32 %v3166, %v3200
      %v3311 = vmax.f32 %v3167, %v3202
      %v3312 = vmax.f32 %v3168, %v3205
      %v3313 = vmax.f32 %v3169, %v3207
      %v3314 = vmax.f32 %v3170, %v3210
      %v3315 = vmax.f32 %v3171, %v3212
      %v3316 = vmax.f32 %v3172, %v3215
      %v3317 = vmax.f32 %v3173, %v3217
      %v3318 = vmax.f32 %v3174, %v3220
      %v3319 = vmax.f32 %v3175, %v3222
      %v3320 = vmax.f32 %v3176, %v3225
      %v3321 = vmax.f32 %v3177, %v3227
      %v3322 = vmax.f32 %v3178, %v3230
      %v3323 = vmax.f32 %v3179, %v3232
      %v3324 = vmax.f32 %v3180, %v3235
      %v3325 = vmax.f32 %v3181, %v3237
      %v3326 = vmax.f32 %v3182, %v3240
      %v3327 = vmax.f32 %v3183, %v3242
      %v3328 = vmax.f32 %v3184, %v3245
      %v3329 = vmax.f32 %v3185, %v3247
      %v3330 = vmax.f32 %v3186, %v3250
      %v3331 = vmax.f32 %v3187, %v3252
      %v3332 = vmax.f32 %v3188, %v3255
      %v3333 = vmax.f32 %v3189, %v3257
      %v3334 = vmax.f32 %v3190, %v3260
      %v3335 = vmax.f32 %v3191, %v3262
      %v3336 = vmax.f32 %v3192, %v3265
      %v3337 = vmax.f32 %v3193, %v3267
      %v3338 = vmax.f32 %v3194, %v3270
      %v3339 = vmax.f32 %v3195, %v3272
      %v3340 = vmax.f32 %v3196, %v3275
      %v3341 = vmax.f32 %v3197, %v3277
      %v3342 = vrot.slane %v2958, 3
      %v3343 = vrot.slane %v2959, 3
      %v3344 = vsel %vm1276, %v3342, %v3343
      %v3345 = vrot.slane %v2960, 3
      %v3346 = vsel %vm1276, %v3343, %v3345
      %v3347 = vrot.slane %v2961, 3
      %v3348 = vrot.slane %v2962, 3
      %v3349 = vsel %vm1276, %v3347, %v3348
      %v3350 = vrot.slane %v2963, 3
      %v3351 = vsel %vm1276, %v3348, %v3350
      %v3352 = vrot.slane %v2964, 3
      %v3353 = vrot.slane %v2965, 3
      %v3354 = vsel %vm1276, %v3352, %v3353
      %v3355 = vrot.slane %v2966, 3
      %v3356 = vsel %vm1276, %v3353, %v3355
      %v3357 = vrot.slane %v2967, 3
      %v3358 = vrot.slane %v2968, 3
      %v3359 = vsel %vm1276, %v3357, %v3358
      %v3360 = vrot.slane %v2969, 3
      %v3361 = vsel %vm1276, %v3358, %v3360
      %v3362 = vrot.slane %v2970, 3
      %v3363 = vrot.slane %v2971, 3
      %v3364 = vsel %vm1276, %v3362, %v3363
      %v3365 = vrot.slane %v2972, 3
      %v3366 = vsel %vm1276, %v3363, %v3365
      %v3367 = vrot.slane %v2973, 3
      %v3368 = vrot.slane %v2974, 3
      %v3369 = vsel %vm1276, %v3367, %v3368
      %v3370 = vrot.slane %v2975, 3
      %v3371 = vsel %vm1276, %v3368, %v3370
      %v3372 = vrot.slane %v2976, 3
      %v3373 = vrot.slane %v2977, 3
      %v3374 = vsel %vm1276, %v3372, %v3373
      %v3375 = vrot.slane %v2978, 3
      %v3376 = vsel %vm1276, %v3373, %v3375
      %v3377 = vrot.slane %v2979, 3
      %v3378 = vrot.slane %v2980, 3
      %v3379 = vsel %vm1276, %v3377, %v3378
      %v3380 = vrot.slane %v2981, 3
      %v3381 = vsel %vm1276, %v3378, %v3380
      %v3382 = vrot.slane %v2982, 3
      %v3383 = vrot.slane %v2983, 3
      %v3384 = vsel %vm1276, %v3382, %v3383
      %v3385 = vrot.slane %v2984, 3
      %v3386 = vsel %vm1276, %v3383, %v3385
      %v3387 = vrot.slane %v2985, 3
      %v3388 = vrot.slane %v2986, 3
      %v3389 = vsel %vm1276, %v3387, %v3388
      %v3390 = vrot.slane %v2987, 3
      %v3391 = vsel %vm1276, %v3388, %v3390
      %v3392 = vrot.slane %v2988, 3
      %v3393 = vrot.slane %v2989, 3
      %v3394 = vsel %vm1276, %v3392, %v3393
      %v3395 = vrot.slane %v2990, 3
      %v3396 = vsel %vm1276, %v3393, %v3395
      %v3397 = vrot.slane %v2991, 3
      %v3398 = vrot.slane %v2992, 3
      %v3399 = vsel %vm1276, %v3397, %v3398
      %v3400 = vrot.slane %v2993, 3
      %v3401 = vsel %vm1276, %v3398, %v3400
      %v3402 = vrot.slane %v2994, 3
      %v3403 = vrot.slane %v2995, 3
      %v3404 = vsel %vm1276, %v3402, %v3403
      %v3405 = vrot.slane %v2996, 3
      %v3406 = vsel %vm1276, %v3403, %v3405
      %v3407 = vrot.slane %v2997, 3
      %v3408 = vrot.slane %v2998, 3
      %v3409 = vsel %vm1276, %v3407, %v3408
      %v3410 = vrot.slane %v2999, 3
      %v3411 = vsel %vm1276, %v3408, %v3410
      %v3412 = vrot.slane %v3000, 3
      %v3413 = vrot.slane %v3001, 3
      %v3414 = vsel %vm1276, %v3412, %v3413
      %v3415 = vrot.slane %v3002, 3
      %v3416 = vsel %vm1276, %v3413, %v3415
      %v3417 = vrot.slane %v3003, 3
      %v3418 = vrot.slane %v3004, 3
      %v3419 = vsel %vm1276, %v3417, %v3418
      %v3420 = vrot.slane %v3005, 3
      %v3421 = vsel %vm1276, %v3418, %v3420
      %v3454 = vmax.f32 %v3310, %v3344
      %v3455 = vmax.f32 %v3311, %v3346
      %v3456 = vmax.f32 %v3312, %v3349
      %v3457 = vmax.f32 %v3313, %v3351
      %v3458 = vmax.f32 %v3314, %v3354
      %v3459 = vmax.f32 %v3315, %v3356
      %v3460 = vmax.f32 %v3316, %v3359
      %v3461 = vmax.f32 %v3317, %v3361
      %v3462 = vmax.f32 %v3318, %v3364
      %v3463 = vmax.f32 %v3319, %v3366
      %v3464 = vmax.f32 %v3320, %v3369
      %v3465 = vmax.f32 %v3321, %v3371
      %v3466 = vmax.f32 %v3322, %v3374
      %v3467 = vmax.f32 %v3323, %v3376
      %v3468 = vmax.f32 %v3324, %v3379
      %v3469 = vmax.f32 %v3325, %v3381
      %v3470 = vmax.f32 %v3326, %v3384
      %v3471 = vmax.f32 %v3327, %v3386
      %v3472 = vmax.f32 %v3328, %v3389
      %v3473 = vmax.f32 %v3329, %v3391
      %v3474 = vmax.f32 %v3330, %v3394
      %v3475 = vmax.f32 %v3331, %v3396
      %v3476 = vmax.f32 %v3332, %v3399
      %v3477 = vmax.f32 %v3333, %v3401
      %v3478 = vmax.f32 %v3334, %v3404
      %v3479 = vmax.f32 %v3335, %v3406
      %v3480 = vmax.f32 %v3336, %v3409
      %v3481 = vmax.f32 %v3337, %v3411
      %v3482 = vmax.f32 %v3338, %v3414
      %v3483 = vmax.f32 %v3339, %v3416
      %v3484 = vmax.f32 %v3340, %v3419
      %v3485 = vmax.f32 %v3341, %v3421
      %v3486 = vrot.slane %v2958, 4
      %v3487 = vrot.slane %v2959, 4
      %v3488 = vsel %vm1421, %v3486, %v3487
      %v3489 = vrot.slane %v2960, 4
      %v3490 = vsel %vm1421, %v3487, %v3489
      %v3491 = vrot.slane %v2961, 4
      %v3492 = vrot.slane %v2962, 4
      %v3493 = vsel %vm1421, %v3491, %v3492
      %v3494 = vrot.slane %v2963, 4
      %v3495 = vsel %vm1421, %v3492, %v3494
      %v3496 = vrot.slane %v2964, 4
      %v3497 = vrot.slane %v2965, 4
      %v3498 = vsel %vm1421, %v3496, %v3497
      %v3499 = vrot.slane %v2966, 4
      %v3500 = vsel %vm1421, %v3497, %v3499
      %v3501 = vrot.slane %v2967, 4
      %v3502 = vrot.slane %v2968, 4
      %v3503 = vsel %vm1421, %v3501, %v3502
      %v3504 = vrot.slane %v2969, 4
      %v3505 = vsel %vm1421, %v3502, %v3504
      %v3506 = vrot.slane %v2970, 4
      %v3507 = vrot.slane %v2971, 4
      %v3508 = vsel %vm1421, %v3506, %v3507
      %v3509 = vrot.slane %v2972, 4
      %v3510 = vsel %vm1421, %v3507, %v3509
      %v3511 = vrot.slane %v2973, 4
      %v3512 = vrot.slane %v2974, 4
      %v3513 = vsel %vm1421, %v3511, %v3512
      %v3514 = vrot.slane %v2975, 4
      %v3515 = vsel %vm1421, %v3512, %v3514
      %v3516 = vrot.slane %v2976, 4
      %v3517 = vrot.slane %v2977, 4
      %v3518 = vsel %vm1421, %v3516, %v3517
      %v3519 = vrot.slane %v2978, 4
      %v3520 = vsel %vm1421, %v3517, %v3519
      %v3521 = vrot.slane %v2979, 4
      %v3522 = vrot.slane %v2980, 4
      %v3523 = vsel %vm1421, %v3521, %v3522
      %v3524 = vrot.slane %v2981, 4
      %v3525 = vsel %vm1421, %v3522, %v3524
      %v3526 = vrot.slane %v2982, 4
      %v3527 = vrot.slane %v2983, 4
      %v3528 = vsel %vm1421, %v3526, %v3527
      %v3529 = vrot.slane %v2984, 4
      %v3530 = vsel %vm1421, %v3527, %v3529
      %v3531 = vrot.slane %v2985, 4
      %v3532 = vrot.slane %v2986, 4
      %v3533 = vsel %vm1421, %v3531, %v3532
      %v3534 = vrot.slane %v2987, 4
      %v3535 = vsel %vm1421, %v3532, %v3534
      %v3536 = vrot.slane %v2988, 4
      %v3537 = vrot.slane %v2989, 4
      %v3538 = vsel %vm1421, %v3536, %v3537
      %v3539 = vrot.slane %v2990, 4
      %v3540 = vsel %vm1421, %v3537, %v3539
      %v3541 = vrot.slane %v2991, 4
      %v3542 = vrot.slane %v2992, 4
      %v3543 = vsel %vm1421, %v3541, %v3542
      %v3544 = vrot.slane %v2993, 4
      %v3545 = vsel %vm1421, %v3542, %v3544
      %v3546 = vrot.slane %v2994, 4
      %v3547 = vrot.slane %v2995, 4
      %v3548 = vsel %vm1421, %v3546, %v3547
      %v3549 = vrot.slane %v2996, 4
      %v3550 = vsel %vm1421, %v3547, %v3549
      %v3551 = vrot.slane %v2997, 4
      %v3552 = vrot.slane %v2998, 4
      %v3553 = vsel %vm1421, %v3551, %v3552
      %v3554 = vrot.slane %v2999, 4
      %v3555 = vsel %vm1421, %v3552, %v3554
      %v3556 = vrot.slane %v3000, 4
      %v3557 = vrot.slane %v3001, 4
      %v3558 = vsel %vm1421, %v3556, %v3557
      %v3559 = vrot.slane %v3002, 4
      %v3560 = vsel %vm1421, %v3557, %v3559
      %v3561 = vrot.slane %v3003, 4
      %v3562 = vrot.slane %v3004, 4
      %v3563 = vsel %vm1421, %v3561, %v3562
      %v3564 = vrot.slane %v3005, 4
      %v3565 = vsel %vm1421, %v3562, %v3564
      %v3598 = vmax.f32 %v3454, %v3488
      %v3599 = vmax.f32 %v3455, %v3490
      %v3600 = vmax.f32 %v3456, %v3493
      %v3601 = vmax.f32 %v3457, %v3495
      %v3602 = vmax.f32 %v3458, %v3498
      %v3603 = vmax.f32 %v3459, %v3500
      %v3604 = vmax.f32 %v3460, %v3503
      %v3605 = vmax.f32 %v3461, %v3505
      %v3606 = vmax.f32 %v3462, %v3508
      %v3607 = vmax.f32 %v3463, %v3510
      %v3608 = vmax.f32 %v3464, %v3513
      %v3609 = vmax.f32 %v3465, %v3515
      %v3610 = vmax.f32 %v3466, %v3518
      %v3611 = vmax.f32 %v3467, %v3520
      %v3612 = vmax.f32 %v3468, %v3523
      %v3613 = vmax.f32 %v3469, %v3525
      %v3614 = vmax.f32 %v3470, %v3528
      %v3615 = vmax.f32 %v3471, %v3530
      %v3616 = vmax.f32 %v3472, %v3533
      %v3617 = vmax.f32 %v3473, %v3535
      %v3618 = vmax.f32 %v3474, %v3538
      %v3619 = vmax.f32 %v3475, %v3540
      %v3620 = vmax.f32 %v3476, %v3543
      %v3621 = vmax.f32 %v3477, %v3545
      %v3622 = vmax.f32 %v3478, %v3548
      %v3623 = vmax.f32 %v3479, %v3550
      %v3624 = vmax.f32 %v3480, %v3553
      %v3625 = vmax.f32 %v3481, %v3555
      %v3626 = vmax.f32 %v3482, %v3558
      %v3627 = vmax.f32 %v3483, %v3560
      %v3628 = vmax.f32 %v3484, %v3563
      %v3629 = vmax.f32 %v3485, %v3565
      %v3630 = vpack.c.bf16 %v3598, %v3598
      %v3631 = vpack.c.bf16 %v3599, %v3599
      %v3632 = vpack.c.bf16 %v3600, %v3600
      %v3633 = vpack.c.bf16 %v3601, %v3601
      %v3634 = vpack.c.bf16 %v3602, %v3602
      %v3635 = vpack.c.bf16 %v3603, %v3603
      %v3636 = vpack.c.bf16 %v3604, %v3604
      %v3637 = vpack.c.bf16 %v3605, %v3605
      %v3638 = vpack.c.bf16 %v3606, %v3606
      %v3639 = vpack.c.bf16 %v3607, %v3607
      %v3640 = vpack.c.bf16 %v3608, %v3608
      %v3641 = vpack.c.bf16 %v3609, %v3609
      %v3642 = vpack.c.bf16 %v3610, %v3610
      %v3643 = vpack.c.bf16 %v3611, %v3611
      %v3644 = vpack.c.bf16 %v3612, %v3612
      %v3645 = vpack.c.bf16 %v3613, %v3613
      %v3646 = vpack.c.bf16 %v3614, %v3614
      %v3647 = vpack.c.bf16 %v3615, %v3615
      %v3648 = vpack.c.bf16 %v3616, %v3616
      %v3649 = vpack.c.bf16 %v3617, %v3617
      %v3650 = vpack.c.bf16 %v3618, %v3618
      %v3651 = vpack.c.bf16 %v3619, %v3619
      %v3652 = vpack.c.bf16 %v3620, %v3620
      %v3653 = vpack.c.bf16 %v3621, %v3621
      %v3654 = vpack.c.bf16 %v3622, %v3622
      %v3655 = vpack.c.bf16 %v3623, %v3623
      %v3656 = vpack.c.bf16 %v3624, %v3624
      %v3657 = vpack.c.bf16 %v3625, %v3625
      %v3658 = vpack.c.bf16 %v3626, %v3626
      %v3659 = vpack.c.bf16 %v3627, %v3627
      %v3660 = vpack.c.bf16 %v3628, %v3628
      %v3661 = vpack.c.bf16 %v3629, %v3629
      %3662 = vst [vmem:[%s231 + $0xc] sm:$0xf] %v3630
      %3663 = vst [vmem:[%s231 + $0x1c] sm:$0xf] %v3631
      %3664 = vst [vmem:[%s231 + $0x2c] sm:$0xf] %v3632
      %3665 = vst [vmem:[%s231 + $0x3c] sm:$0xf] %v3633
      %3666 = vst [vmem:[%s231 + $0x4c] sm:$0xf] %v3634
      %3667 = vst [vmem:[%s231 + $0x5c] sm:$0xf] %v3635
      %3668 = vst [vmem:[%s231 + $0x6c] sm:$0xf] %v3636
      %3669 = vst [vmem:[%s231 + $0x7c] sm:$0xf] %v3637
      %3670 = vst [vmem:[%s231 + $0x8c] sm:$0xf] %v3638
      %3671 = vst [vmem:[%s231 + $0x9c] sm:$0xf] %v3639
      %3672 = vst [vmem:[%s231 + $0xac] sm:$0xf] %v3640
      %3673 = vst [vmem:[%s231 + $0xbc] sm:$0xf] %v3641
      %3674 = vst [vmem:[%s231 + $0xcc] sm:$0xf] %v3642
      %3675 = vst [vmem:[%s231 + $0xdc] sm:$0xf] %v3643
      %3676 = vst [vmem:[%s231 + $0xec] sm:$0xf] %v3644
      %3677 = vst [vmem:[%s231 + $0xfc] sm:$0xf] %v3645
      %3678 = vst [vmem:[%s231 + $0x10c] sm:$0xf] %v3646
      %3679 = vst [vmem:[%s231 + $0x11c] sm:$0xf] %v3647
      %3680 = vst [vmem:[%s231 + $0x12c] sm:$0xf] %v3648
      %3681 = vst [vmem:[%s231 + $0x13c] sm:$0xf] %v3649
      %3682 = vst [vmem:[%s231 + $0x14c] sm:$0xf] %v3650
      %3683 = vst [vmem:[%s231 + $0x15c] sm:$0xf] %v3651
      %3684 = vst [vmem:[%s231 + $0x16c] sm:$0xf] %v3652
      %3685 = vst [vmem:[%s231 + $0x17c] sm:$0xf] %v3653
      %3686 = vst [vmem:[%s231 + $0x18c] sm:$0xf] %v3654
      %3687 = vst [vmem:[%s231 + $0x19c] sm:$0xf] %v3655
      %3688 = vst [vmem:[%s231 + $0x1ac] sm:$0xf] %v3656
      %3689 = vst [vmem:[%s231 + $0x1bc] sm:$0xf] %v3657
      %3690 = vst [vmem:[%s231 + $0x1cc] sm:$0xf] %v3658
      %3691 = vst [vmem:[%s231 + $0x1dc] sm:$0xf] %v3659
      %3692 = vst [vmem:[%s231 + $0x1ec] sm:$0xf] %v3660
      %3693 = vst [vmem:[%s231 + $0x1fc] sm:$0xf] %v3661
      %s3694 = smul.u32 4, %s19
      %p3695 = scmp.lt.s32.totalorder %s18, 1
      %s3696 = scalar_select %p3695, %s18, 1
      %p3697 = scmp.lt.s32.totalorder %s3694, 3
      %s3698 = scalar_select %p3697, %s3694, 3
      %s3699 = smul.addr %s3696, 128
      %s3700 = sadd.s32 %s3698, %s3699
      %s3701 = smul.addr %s3700, 4
      %s3702 = scalar_lea.vmem %s3, %s3701
      // Predicated region
      $region33: #{spp_bottleneck.5} parent=31 // pred_check
        %p3703 = pneg %p126
      $region34: #{spp_bottleneck.5} parent=31 // pred_check_branch
        %3705 = sbr.rel (%p3703) target = $region36
      $region35: #{spp_bottleneck.5} parent=31 // pred_region
        %s3706 = smul.u32 4, %s19
      $region36: #{spp_bottleneck.5} parent=31 // pred_fallthru
        _
    $region32: #{spp_bottleneck.5} parent=5 // pred_fallthru
      _
    %p3707 = scmp.le.s32.totalorder 2, %s9
    // Predicated region
    $region37: #{spp_bottleneck.5} parent=5 // pred_check
      %p3708 = pneg %p3707
    $region38: #{spp_bottleneck.5} parent=5 // pred_check_branch
      %3710 = sbr.rel (%p3708) target = $region40
    $region39: #{spp_bottleneck.5} parent=5 // pred_region
      %s3711 = ssub.s32 %s9, 2
      // Predicated region
      $region41: #{spp_bottleneck.5} parent=39 // pred_check
        %p3712 = pneg %p132
      $region42: #{spp_bottleneck.5} parent=39 // pred_check_branch
        %3714 = sbr.rel (%p3712) target = $region44
      $region43: #{spp_bottleneck.5} parent=39 // pred_region
        %s3715 = smul.u32 4, %s21
        %p3716 = scmp.lt.s32.totalorder %s20, 1
        %s3717 = scalar_select %p3716, %s20, 1
        %p3718 = scmp.lt.s32.totalorder %s3715, 3
        %s3719 = scalar_select %p3718, %s3715, 3
        %s3720 = smul.addr %s3717, 128
        %s3721 = sadd.s32 %s3719, %s3720
        %s3722 = smul.addr %s3721, 4
        %s3723 = scalar_lea.vmem %s3, %s3722
      $region44: #{spp_bottleneck.5} parent=39 // pred_fallthru
        _
    $region40: #{spp_bottleneck.5} parent=5 // pred_fallthru
      _
  $region6: #{spp_bottleneck.5} parent=0 // loop_footer
    %s13 = sadd.s32 1, %s9
  $region7: #{spp_bottleneck.5} parent=0 // loop_footer_branch
    %8 = sbr.rel target = $region3
  $region8: #{spp_bottleneck.5} parent=0 // loop_exit
    _

</llo_original>
